<compile_context>
chip_gen: v6e
topology: v6e:2x2x1
jax: 0.10.0
libtpu: 0.0.40
codegen_flags: <defaults>
</compile_context>

<pallas_src>
import functools

import jax
import jax.numpy as jnp
import numpy as np
from jax import lax
from jax.experimental import pallas as pl
from jax.experimental.pallas import tpu as pltpu


# --------------------------------------------------------------------------
# In-kernel helpers
# --------------------------------------------------------------------------
def _conv3x3(xe_ref, rows, w_ref):
    """3x3 conv (stride 1, zero W-padding) over xe_ref[0:rows+2].

    xe_ref : VMEM ref (>= rows+2, W, C) bf16, rows are H-contiguous.
    w_ref  : (3, 3, C, C) bf16 weights (HWIO).
    Returns (rows*W, C) float32.
    """
    _, W, C = xe_ref.shape
    M = rows * W
    # column index of every flattened row (for the W boundary masks)
    col = lax.broadcasted_iota(jnp.int32, (rows, W, C), 1).reshape(M, C)

    acc = jnp.zeros((M, C), jnp.float32)
    for dw in range(3):
        # partial sum over dh with NO W shift: P_dw[h, w] = sum_dh x[h+dh, w] @ w[dh, dw]
        p = jnp.zeros((M, C), jnp.float32)
        for dh in range(3):
            a = xe_ref[dh:dh + rows, :, :].reshape(M, C)          # bf16, aligned
            p = p + jnp.dot(a, w_ref[dh, dw],
                            preferred_element_type=jnp.float32)
        # W shift is applied to the f32 partial (commutes with the channel matmul).
        if dw == 0:       # tap at w-1  -> shift right by 1, zero column 0
            p = pltpu.roll(p, shift=1, axis=0)
            p = jnp.where(col == 0, 0.0, p)
        elif dw == 2:     # tap at w+1  -> shift left by 1, zero column W-1
            p = pltpu.roll(p, shift=M - 1, axis=0)
            p = jnp.where(col == W - 1, 0.0, p)
        acc = acc + p
    return acc


# --------------------------------------------------------------------------
# Kernel A: body convs (strip-tiled) + per-image channel sums
# --------------------------------------------------------------------------
def _conv_body_kernel(x_top_ref, x_mid_ref, x_bot_ref, w1_ref, alpha_ref,
                      w2_ref, r_ref, sums_ref, xe_ref):
    s = pl.program_id(1)
    n_strips = pl.num_programs(1)
    shp4, W, C = xe_ref.shape
    SH = shp4 - 4

    # ---- assemble strip + 2-row halos into the aligned scratch -------------
    xe_ref[2:SH + 2, :, :] = x_mid_ref[0]
    xe_ref[0:2, :, :] = x_top_ref[0]
    xe_ref[SH + 2:SH + 4, :, :] = x_bot_ref[0]

    @pl.when(s == 0)                       # halo above the image -> zero pad
    def _():
        xe_ref[0:2, :, :] = jnp.zeros((2, W, C), xe_ref.dtype)

    @pl.when(s == n_strips - 1)            # halo below the image -> zero pad
    def _():
        xe_ref[SH + 2:SH + 4, :, :] = jnp.zeros((2, W, C), xe_ref.dtype)

    # ---- body conv #1 over SH+2 rows (1-row r halo for conv #2) ------------
    r1 = _conv3x3(xe_ref, SH + 2, w1_ref)              # ((SH+2)*W, C) f32

    # PReLU (single shared parameter, PyTorch default), alpha from SMEM.
    a = alpha_ref[0, 0]
    r1 = jnp.where(r1 > 0, r1, a * r1)

    # conv #2 zero-pads r at the image border -> zero halo rows that fall
    # outside the image, then stage r1 (bf16) back into the scratch buffer.
    r1 = r1.reshape(SH + 2, W, C)
    row = lax.broadcasted_iota(jnp.int32, (SH + 2, W, C), 0)
    r1 = jnp.where(jnp.logical_and(s == 0, row == 0), 0.0, r1)
    r1 = jnp.where(jnp.logical_and(s == n_strips - 1, row == SH + 1), 0.0, r1)
    xe_ref[0:SH + 2, :, :] = r1.astype(xe_ref.dtype)

    # ---- body conv #2 over the SH strip rows --------------------------------
    r2 = _conv3x3(xe_ref, SH, w2_ref)                  # (SH*W, C) f32

    # per-image channel sums (accumulated across the strip grid axis)
    @pl.when(s == 0)
    def _():
        sums_ref[...] = jnp.zeros_like(sums_ref)
    sums_ref[...] += jnp.sum(r2, axis=0).reshape(1, 1, C)

    r_ref[0] = r2.reshape(SH, W, C).astype(r_ref.dtype)


# --------------------------------------------------------------------------
# Kernel B: channel attention (from global sums) * r + 1x1 skip conv
# --------------------------------------------------------------------------
def _ca_apply_kernel(x_ref, r_ref, sums_ref, wskip_ref, wd_ref, bd_ref,
                     wu_ref, bu_ref, out_ref, *, inv_hw):
    _, SH, W, C = x_ref.shape

    # tiny CA MLP, recomputed per strip (negligible cost)
    avg = sums_ref[0] * inv_hw                                       # (1, C)
    h1 = jnp.dot(avg, wd_ref[...], preferred_element_type=jnp.float32) + bd_ref[...]
    h1 = jnp.maximum(h1, 0.0)
    ca = jnp.dot(h1, wu_ref[...], preferred_element_type=jnp.float32) + bu_ref[...]
    ca = jax.nn.sigmoid(ca)                                          # (1, C)

    # skip = 1x1 conv on x (bf16 operands, f32 accumulation)
    xs = x_ref[0].reshape(SH * W, C)
    skip = jnp.dot(xs, wskip_ref[...], preferred_element_type=jnp.float32)

    r = r_ref[0].reshape(SH * W, C).astype(jnp.float32)
    out = ca * r + skip
    out_ref[0] = out.reshape(SH, W, C).astype(out_ref.dtype)


# --------------------------------------------------------------------------
# Wrapper
# --------------------------------------------------------------------------
def _vmem_need_bytes(SH, W, C):
    """Rough VMEM residency estimate for kernel A (layout-padded)."""
    lane, sub = 128, 8
    cp = -(-C // lane) * lane
    wp = -(-W // sub) * sub
    act_bf = wp * cp * 2
    blocks = 2 * ((SH + 4) * act_bf + SH * act_bf)       # dbl-buffered in/out
    weights = 2 * 9 * (-(-C // sub) * sub) * cp * 2
    scratch = (SH + 4) * act_bf
    inter = 6 * (SH + 2) * wp * cp * 4                   # f32 partials / acc / taps
    return blocks + weights + scratch + inter


def _pick_strip_rows(H, W, C, budget=40 * 1024 * 1024):
    cands = [sh for sh in range(8, min(H, 64) + 1, 8) if H % sh == 0]
    if not cands:
        return H
    best = cands[0]
    for sh in cands:
        if _vmem_need_bytes(sh, W, C) <= budget:
            best = sh
    return best


def prepare_params(params):
    """One-time weight preprocessing (hoisted out of the forward call)."""
    return {
        "wskip": params["wskip"].astype(jnp.bfloat16),    # (C, C)
        "w1": params["w1"].astype(jnp.bfloat16),          # (3, 3, C, C)
        "w2": params["w2"].astype(jnp.bfloat16),          # (3, 3, C, C)
        "prelu": params["prelu"].astype(jnp.float32),     # (1, 1)
        "wd": params["wd"].astype(jnp.float32),           # (C, Cr)
        "bd": params["bd"].astype(jnp.float32),           # (1, Cr)
        "wu": params["wu"].astype(jnp.float32),           # (Cr, C)
        "bu": params["bu"].astype(jnp.float32),           # (1, C)
    }


def edconv_block(x, prep, strip_rows=None):
    """x: (N, H, W, C) NHWC.  Returns (N, H, W, C) bfloat16."""
    N, H, W, C = x.shape
    assert H % 2 == 0, "H must be even (2-row halo blocks)"
    Cr = prep["wd"].shape[1]

    SH = strip_rows if strip_rows is not None else _pick_strip_rows(H, W, C)
    assert H % SH == 0 and SH % 2 == 0, "strip_rows must be even and divide H"
    nS = H // SH

    x_bf = x.astype(jnp.bfloat16)            # activations stay bf16 in HBM

    vmem_limit = int(min(max(_vmem_need_bytes(SH, W, C) * 1.25, 16 * 2**20),
                         64 * 2**20))

    strip_spec = pl.BlockSpec((1, SH, W, C), lambda n, s: (n, s, 0, 0))
    halo_top = pl.BlockSpec(
        (1, 2, W, C),
        lambda n, s: (n, jnp.maximum(s * (SH // 2) - 1, 0), 0, 0))
    halo_bot = pl.BlockSpec(
        (1, 2, W, C),
        lambda n, s: (n, jnp.minimum((s + 1) * (SH // 2), H // 2 - 1), 0, 0))
    w3_spec = pl.BlockSpec((3, 3, C, C), lambda n, s: (0, 0, 0, 0))
    sums_spec = pl.BlockSpec((1, 1, C), lambda n, s: (n, 0, 0))

    flops_a = int(N * nS * 2 * 9 * C * C * W * ((SH + 2) + SH))
    bytes_a = int(N * (H + 4 * nS) * W * C * 2 + N * H * W * C * 2
                  + 2 * 9 * C * C * 2 + N * C * 4)

    # ---- phase 1: body convs + per-image channel sums ----------------------
    r_bf, sums = pl.pallas_call(
        _conv_body_kernel,
        out_shape=(jax.ShapeDtypeStruct((N, H, W, C), jnp.bfloat16),
                   jax.ShapeDtypeStruct((N, 1, C), jnp.float32)),
        grid_spec=pltpu.PrefetchScalarGridSpec(
            num_scalar_prefetch=0,
            grid=(N, nS),
            in_specs=[
                halo_top,                                         # x rows above
                strip_spec,                                       # x strip
                halo_bot,                                         # x rows below
                w3_spec,                                          # w1
                pl.BlockSpec(memory_space=pltpu.MemorySpace.SMEM),  # prelu alpha
                w3_spec,                                          # w2
            ],
            out_specs=[strip_spec, sums_spec],
            scratch_shapes=[pltpu.VMEM((SH + 4, W, C), jnp.bfloat16)],
        ),
        compiler_params=pltpu.CompilerParams(
            dimension_semantics=("parallel", "arbitrary"),
            vmem_limit_bytes=vmem_limit),
        cost_estimate=pl.CostEstimate(
            flops=flops_a, transcendentals=0, bytes_accessed=bytes_a),
    )(x_bf, x_bf, x_bf, prep["w1"], prep["prelu"], prep["w2"])

    flops_b = int(N * H * W * 2 * C * C + N * nS * 4 * C * Cr)
    bytes_b = int(3 * N * H * W * C * 2 + N * C * 4
                  + (C * C + C * Cr + Cr * C) * 4)

    # ---- phase 2: out = ca * r + skip ---------------------------------------
    # TODO(synk): on v6e/v7x the skip matmul could be fused into a 256-wide MXU
    # pass; left as a standalone N=C matmul since this phase is memory-bound.
    out = pl.pallas_call(
        functools.partial(_ca_apply_kernel, inv_hw=1.0 / float(H * W)),
        out_shape=jax.ShapeDtypeStruct((N, H, W, C), jnp.bfloat16),
        grid_spec=pltpu.PrefetchScalarGridSpec(
            num_scalar_prefetch=0,
            grid=(N, nS),
            in_specs=[
                strip_spec,                                      # x
                strip_spec,                                      # r
                sums_spec,                                       # channel sums
                pl.BlockSpec((C, C), lambda n, s: (0, 0)),       # wskip
                pl.BlockSpec((C, Cr), lambda n, s: (0, 0)),      # wd
                pl.BlockSpec((1, Cr), lambda n, s: (0, 0)),      # bd
                pl.BlockSpec((Cr, C), lambda n, s: (0, 0)),      # wu
                pl.BlockSpec((1, C), lambda n, s: (0, 0)),       # bu
            ],
            out_specs=strip_spec,
        ),
        compiler_params=pltpu.CompilerParams(
            dimension_semantics=("parallel", "parallel"),
            vmem_limit_bytes=vmem_limit),
        cost_estimate=pl.CostEstimate(
            flops=flops_b, transcendentals=int(N * nS * C),
            bytes_accessed=bytes_b),
    )(x_bf, r_bf, sums, prep["wskip"], prep["wd"], prep["bd"],
      prep["wu"], prep["bu"])

    return out


# --------------------------------------------------------------------------
# Pure-JAX reference + test harness
# --------------------------------------------------------------------------
def edconv_block_ref(x, params):
    """Pure-JAX f32 reference (same math as the PyTorch module, NHWC)."""
    N, H, W, C = x.shape
    hp = lax.Precision.HIGHEST

    def conv3(xp, w):
        out = jnp.zeros((N, H, W, w.shape[-1]), jnp.float32)
        for dh in range(3):
            for dw in range(3):
                out = out + jnp.einsum('nhwc,cd->nhwd',
                                       xp[:, dh:dh + H, dw:dw + W, :],
                                       w[dh, dw], precision=hp)
        return out

    skip = jnp.einsum('nhwc,cd->nhwd', x, params["wskip"], precision=hp)
    xpad = jnp.pad(x, ((0, 0), (1, 1), (1, 1), (0, 0)))
    r = conv3(xpad, params["w1"])
    a = params["prelu"][0, 0]
    r = jnp.where(r > 0, r, a * r)
    rpad = jnp.pad(r, ((0, 0), (1, 1), (1, 1), (0, 0)))
    r = conv3(rpad, params["w2"])
    avg = r.mean(axis=(1, 2))                                    # (N, C)
    h1 = jax.nn.relu(avg @ params["wd"] + params["bd"])
    ca = jax.nn.sigmoid(h1 @ params["wu"] + params["bu"])        # (N, C)
    return ca[:, None, None, :] * r + skip


def init_params(key, n_feat, reduction):
    Cr = max(n_feat // reduction, 1)
    ks = jax.random.split(key, 7)
    s = 0.1
    return {
        "wskip": s * jax.random.normal(ks[0], (n_feat, n_feat), jnp.float32),
        "w1":    s * jax.random.normal(ks[1], (3, 3, n_feat, n_feat), jnp.float32),
        "prelu": jnp.full((1, 1), 0.25, jnp.float32),   # PyTorch PReLU default
        "w2":    s * jax.random.normal(ks[2], (3, 3, n_feat, n_feat), jnp.float32),
        "wd":    s * jax.random.normal(ks[3], (n_feat, Cr), jnp.float32),
        "bd":    0.01 * jax.random.normal(ks[4], (1, Cr), jnp.float32),
        "wu":    s * jax.random.normal(ks[5], (Cr, n_feat), jnp.float32),
        "bu":    0.01 * jax.random.normal(ks[6], (1, n_feat), jnp.float32),
    }


if __name__ == "__main__":
    N, C, H, W = 2, 8, 16, 16
    reduction = 4                       # hidden CA channels = C // reduction = 2

    key = jax.random.PRNGKey(0)
    kx, kp = jax.random.split(key)
    x = jax.random.normal(kx, (N, H, W, C), jnp.float32)     # NHWC
    params = init_params(kp, C, reduction)
    prep = prepare_params(params)

    # strip_rows=8 -> 2 strips per image, exercising the halo / accumulator path.
    out = jax.block_until_ready(edconv_block(x, prep, strip_rows=8))
    ref = jax.block_until_ready(edconv_block_ref(x, params))

    # bf16 activations + bf16 matmul operands (f32 accumulation) -> relaxed tol.
    np.testing.assert_allclose(np.asarray(out, dtype=np.float32),
                               np.asarray(ref), rtol=3e-2, atol=3e-2)

    print("KERNEL_OK")
</pallas_src>

<mosaic_0001>
module attributes {stable_mosaic.version = 11 : i64} {
  func.func @_conv_body_kernel(%arg0: i32, %arg1: i32, %arg2: memref<1x2x16x8xbf16, #tpu.memory_space<vmem>>, %arg3: memref<1x8x16x8xbf16, #tpu.memory_space<vmem>>, %arg4: memref<1x2x16x8xbf16, #tpu.memory_space<vmem>>, %arg5: memref<3x3x8x8xbf16, #tpu.memory_space<vmem>>, %arg6: memref<1x1xf32, #tpu.memory_space<smem>>, %arg7: memref<3x3x8x8xbf16, #tpu.memory_space<vmem>>, %arg8: memref<1x8x16x8xbf16, #tpu.memory_space<vmem>>, %arg9: memref<1x1x8xf32, #tpu.memory_space<vmem>>, %arg10: memref<12x16x8xbf16, #tpu.memory_space<vmem>>) attributes {dimension_semantics = [#tpu.dimension_semantics<parallel>, #tpu.dimension_semantics<arbitrary>], iteration_bounds = array<i64: 2, 2>, scalar_prefetch = 0 : i64, scratch_operands = 1 : i64, tpu.core_type = #tpu.core_type<tc>, window_params = [{transform_indices = @transform_0, window_bounds = array<i64: 1, 2, 16, 8>}, {transform_indices = @transform_1, window_bounds = array<i64: 1, 8, 16, 8>}, {transform_indices = @transform_2, window_bounds = array<i64: 1, 2, 16, 8>}, {pipeline_mode = #tpu.pipeline_mode<synchronous>, transform_indices = @transform_3, window_bounds = array<i64: 3, 3, 8, 8>}, {transform_indices = @transform_4, window_bounds = array<i64: 1, 1>}, {pipeline_mode = #tpu.pipeline_mode<synchronous>, transform_indices = @transform_5, window_bounds = array<i64: 3, 3, 8, 8>}, {transform_indices = @transform_6, window_bounds = array<i64: 1, 8, 16, 8>}, {transform_indices = @transform_7, window_bounds = array<i64: 1, 1, 8>}]} {
    %c0 = arith.constant 0 : index
    %c0_0 = arith.constant 0 : index
    %c0_1 = arith.constant 0 : index
    %c0_2 = arith.constant 0 : index
    %0 = vector.load %arg3[%c0, %c0_0, %c0_1, %c0_2] : memref<1x8x16x8xbf16, #tpu.memory_space<vmem>>, vector<1x8x16x8xbf16>
    %1 = vector.shape_cast %0 : vector<1x8x16x8xbf16> to vector<8x16x8xbf16>
    %c2 = arith.constant 2 : index
    %c0_3 = arith.constant 0 : index
    %c0_4 = arith.constant 0 : index
    %2 = vector.load %arg10[%c2, %c0_3, %c0_4] : memref<12x16x8xbf16, #tpu.memory_space<vmem>>, vector<8x16x8xbf16>
    tpu.vector_store %arg10[%c2, %c0_3, %c0_4], %1 {strides = array<i32>} : memref<12x16x8xbf16, #tpu.memory_space<vmem>>, vector<8x16x8xbf16>,
    %c0_5 = arith.constant 0 : index
    %c0_6 = arith.constant 0 : index
    %c0_7 = arith.constant 0 : index
    %c0_8 = arith.constant 0 : index
    %3 = vector.load %arg2[%c0_5, %c0_6, %c0_7, %c0_8] : memref<1x2x16x8xbf16, #tpu.memory_space<vmem>>, vector<1x2x16x8xbf16>
    %4 = vector.shape_cast %3 : vector<1x2x16x8xbf16> to vector<2x16x8xbf16>
    %c0_9 = arith.constant 0 : index
    %c0_10 = arith.constant 0 : index
    %c0_11 = arith.constant 0 : index
    %5 = vector.load %arg10[%c0_9, %c0_10, %c0_11] : memref<12x16x8xbf16, #tpu.memory_space<vmem>>, vector<2x16x8xbf16>
    tpu.vector_store %arg10[%c0_9, %c0_10, %c0_11], %4 {strides = array<i32>} : memref<12x16x8xbf16, #tpu.memory_space<vmem>>, vector<2x16x8xbf16>,
    %c0_12 = arith.constant 0 : index
    %c0_13 = arith.constant 0 : index
    %c0_14 = arith.constant 0 : index
    %c0_15 = arith.constant 0 : index
    %6 = vector.load %arg4[%c0_12, %c0_13, %c0_14, %c0_15] : memref<1x2x16x8xbf16, #tpu.memory_space<vmem>>, vector<1x2x16x8xbf16>
    %7 = vector.shape_cast %6 : vector<1x2x16x8xbf16> to vector<2x16x8xbf16>
    %c10 = arith.constant 10 : index
    %c0_16 = arith.constant 0 : index
    %c0_17 = arith.constant 0 : index
    %8 = vector.load %arg10[%c10, %c0_16, %c0_17] : memref<12x16x8xbf16, #tpu.memory_space<vmem>>, vector<2x16x8xbf16>
    tpu.vector_store %arg10[%c10, %c0_16, %c0_17], %7 {strides = array<i32>} : memref<12x16x8xbf16, #tpu.memory_space<vmem>>, vector<2x16x8xbf16>,
    %c0_i32 = arith.constant 0 : i32
    %9 = arith.cmpi eq, %arg1, %c0_i32 : i32
    %10 = arith.extui %9 : i1 to i32
    %c0_i32_18 = arith.constant 0 : i32
    %11 = arith.cmpi ne, %10, %c0_i32_18 : i32
    scf.if %11 {
      %cst_203 = arith.constant 0.000000e+00 : bf16
      %198 = vector.broadcast %cst_203 : bf16 to vector<2x16x8xbf16>
      %c0_204 = arith.constant 0 : index
      %c0_205 = arith.constant 0 : index
      %c0_206 = arith.constant 0 : index
      %199 = vector.load %arg10[%c0_204, %c0_205, %c0_206] : memref<12x16x8xbf16, #tpu.memory_space<vmem>>, vector<2x16x8xbf16>
      tpu.vector_store %arg10[%c0_204, %c0_205, %c0_206], %198 {strides = array<i32>} : memref<12x16x8xbf16, #tpu.memory_space<vmem>>, vector<2x16x8xbf16>,
    } else {
    }
    %c1_i32 = arith.constant 1 : i32
    %12 = arith.cmpi eq, %arg1, %c1_i32 : i32
    %13 = arith.extui %12 : i1 to i32
    %c0_i32_19 = arith.constant 0 : i32
    %14 = arith.cmpi ne, %13, %c0_i32_19 : i32
    scf.if %14 {
      %cst_203 = arith.constant 0.000000e+00 : bf16
      %198 = vector.broadcast %cst_203 : bf16 to vector<2x16x8xbf16>
      %c10_204 = arith.constant 10 : index
      %c0_205 = arith.constant 0 : index
      %c0_206 = arith.constant 0 : index
      %199 = vector.load %arg10[%c10_204, %c0_205, %c0_206] : memref<12x16x8xbf16, #tpu.memory_space<vmem>>, vector<2x16x8xbf16>
      tpu.vector_store %arg10[%c10_204, %c0_205, %c0_206], %198 {strides = array<i32>} : memref<12x16x8xbf16, #tpu.memory_space<vmem>>, vector<2x16x8xbf16>,
    } else {
    }
    %15 = tpu.iota {dimensions = array<i32: 1>} : vector<10x16x8xi32>
    %16 = vector.shape_cast %15 : vector<10x16x8xi32> to vector<160x8xi32>
    %cst = arith.constant 0.000000e+00 : f32
    %17 = vector.broadcast %cst : f32 to vector<160x8xf32>
    %cst_20 = arith.constant 0.000000e+00 : f32
    %18 = vector.broadcast %cst_20 : f32 to vector<160x8xf32>
    %c0_21 = arith.constant 0 : index
    %c0_22 = arith.constant 0 : index
    %c0_23 = arith.constant 0 : index
    %19 = vector.load %arg10[%c0_21, %c0_22, %c0_23] : memref<12x16x8xbf16, #tpu.memory_space<vmem>>, vector<10x16x8xbf16>
    %20 = vector.shape_cast %19 : vector<10x16x8xbf16> to vector<160x8xbf16>
    %c0_24 = arith.constant 0 : index
    %c0_25 = arith.constant 0 : index
    %c0_26 = arith.constant 0 : index
    %c0_27 = arith.constant 0 : index
    %21 = vector.load %arg5[%c0_24, %c0_25, %c0_26, %c0_27] : memref<3x3x8x8xbf16, #tpu.memory_space<vmem>>, vector<1x1x8x8xbf16>
    %22 = vector.shape_cast %21 : vector<1x1x8x8xbf16> to vector<8x8xbf16>
    %cst_28 = arith.constant dense<0.000000e+00> : vector<160x8xf32>
    %23 = tpu.matmul %20, %22, %cst_28 {dimension_numbers = #tpu.dot_dimension_numbers<[1], [0], [0], [1], [0, 0, 1, 1], [], []>} : vector<160x8xbf16>, vector<8x8xbf16>, vector<160x8xf32> -> vector<160x8xf32>
    %24 = arith.addf %18, %23 : vector<160x8xf32>
    %c1 = arith.constant 1 : index
    %c0_29 = arith.constant 0 : index
    %c0_30 = arith.constant 0 : index
    %25 = vector.load %arg10[%c1, %c0_29, %c0_30] : memref<12x16x8xbf16, #tpu.memory_space<vmem>>, vector<10x16x8xbf16>
    %26 = vector.shape_cast %25 : vector<10x16x8xbf16> to vector<160x8xbf16>
    %c1_31 = arith.constant 1 : index
    %c0_32 = arith.constant 0 : index
    %c0_33 = arith.constant 0 : index
    %c0_34 = arith.constant 0 : index
    %27 = vector.load %arg5[%c1_31, %c0_32, %c0_33, %c0_34] : memref<3x3x8x8xbf16, #tpu.memory_space<vmem>>, vector<1x1x8x8xbf16>
    %28 = vector.shape_cast %27 : vector<1x1x8x8xbf16> to vector<8x8xbf16>
    %cst_35 = arith.constant dense<0.000000e+00> : vector<160x8xf32>
    %29 = tpu.matmul %26, %28, %cst_35 {dimension_numbers = #tpu.dot_dimension_numbers<[1], [0], [0], [1], [0, 0, 1, 1], [], []>} : vector<160x8xbf16>, vector<8x8xbf16>, vector<160x8xf32> -> vector<160x8xf32>
    %30 = arith.addf %24, %29 : vector<160x8xf32>
    %c2_36 = arith.constant 2 : index
    %c0_37 = arith.constant 0 : index
    %c0_38 = arith.constant 0 : index
    %31 = vector.load %arg10[%c2_36, %c0_37, %c0_38] : memref<12x16x8xbf16, #tpu.memory_space<vmem>>, vector<10x16x8xbf16>
    %32 = vector.shape_cast %31 : vector<10x16x8xbf16> to vector<160x8xbf16>
    %c2_39 = arith.constant 2 : index
    %c0_40 = arith.constant 0 : index
    %c0_41 = arith.constant 0 : index
    %c0_42 = arith.constant 0 : index
    %33 = vector.load %arg5[%c2_39, %c0_40, %c0_41, %c0_42] : memref<3x3x8x8xbf16, #tpu.memory_space<vmem>>, vector<1x1x8x8xbf16>
    %34 = vector.shape_cast %33 : vector<1x1x8x8xbf16> to vector<8x8xbf16>
    %cst_43 = arith.constant dense<0.000000e+00> : vector<160x8xf32>
    %35 = tpu.matmul %32, %34, %cst_43 {dimension_numbers = #tpu.dot_dimension_numbers<[1], [0], [0], [1], [0, 0, 1, 1], [], []>} : vector<160x8xbf16>, vector<8x8xbf16>, vector<160x8xf32> -> vector<160x8xf32>
    %36 = arith.addf %30, %35 : vector<160x8xf32>
    %c1_i32_44 = arith.constant 1 : i32
    %37 = tpu.dynamic_rotate %36 by %c1_i32_44 dim 0 : vector<160x8xf32>, i32 -> vector<160x8xf32>
    %c0_i32_45 = arith.constant 0 : i32
    %38 = vector.broadcast %c0_i32_45 : i32 to vector<160x8xi32>
    %39 = arith.cmpi eq, %16, %38 : vector<160x8xi32>
    %cst_46 = arith.constant 0.000000e+00 : f32
    %40 = vector.broadcast %cst_46 : f32 to vector<160x8xf32>
    %41 = arith.select %39, %40, %37 : vector<160x8xi1>, vector<160x8xf32>
    %42 = arith.addf %17, %41 : vector<160x8xf32>
    %cst_47 = arith.constant 0.000000e+00 : f32
    %43 = vector.broadcast %cst_47 : f32 to vector<160x8xf32>
    %c0_48 = arith.constant 0 : index
    %c0_49 = arith.constant 0 : index
    %c0_50 = arith.constant 0 : index
    %44 = vector.load %arg10[%c0_48, %c0_49, %c0_50] : memref<12x16x8xbf16, #tpu.memory_space<vmem>>, vector<10x16x8xbf16>
    %45 = vector.shape_cast %44 : vector<10x16x8xbf16> to vector<160x8xbf16>
    %c0_51 = arith.constant 0 : index
    %c1_52 = arith.constant 1 : index
    %c0_53 = arith.constant 0 : index
    %c0_54 = arith.constant 0 : index
    %46 = vector.load %arg5[%c0_51, %c1_52, %c0_53, %c0_54] : memref<3x3x8x8xbf16, #tpu.memory_space<vmem>>, vector<1x1x8x8xbf16>
    %47 = vector.shape_cast %46 : vector<1x1x8x8xbf16> to vector<8x8xbf16>
    %cst_55 = arith.constant dense<0.000000e+00> : vector<160x8xf32>
    %48 = tpu.matmul %45, %47, %cst_55 {dimension_numbers = #tpu.dot_dimension_numbers<[1], [0], [0], [1], [0, 0, 1, 1], [], []>} : vector<160x8xbf16>, vector<8x8xbf16>, vector<160x8xf32> -> vector<160x8xf32>
    %49 = arith.addf %43, %48 : vector<160x8xf32>
    %c1_56 = arith.constant 1 : index
    %c0_57 = arith.constant 0 : index
    %c0_58 = arith.constant 0 : index
    %50 = vector.load %arg10[%c1_56, %c0_57, %c0_58] : memref<12x16x8xbf16, #tpu.memory_space<vmem>>, vector<10x16x8xbf16>
    %51 = vector.shape_cast %50 : vector<10x16x8xbf16> to vector<160x8xbf16>
    %c1_59 = arith.constant 1 : index
    %c1_60 = arith.constant 1 : index
    %c0_61 = arith.constant 0 : index
    %c0_62 = arith.constant 0 : index
    %52 = vector.load %arg5[%c1_59, %c1_60, %c0_61, %c0_62] : memref<3x3x8x8xbf16, #tpu.memory_space<vmem>>, vector<1x1x8x8xbf16>
    %53 = vector.shape_cast %52 : vector<1x1x8x8xbf16> to vector<8x8xbf16>
    %cst_63 = arith.constant dense<0.000000e+00> : vector<160x8xf32>
    %54 = tpu.matmul %51, %53, %cst_63 {dimension_numbers = #tpu.dot_dimension_numbers<[1], [0], [0], [1], [0, 0, 1, 1], [], []>} : vector<160x8xbf16>, vector<8x8xbf16>, vector<160x8xf32> -> vector<160x8xf32>
    %55 = arith.addf %49, %54 : vector<160x8xf32>
    %c2_64 = arith.constant 2 : index
    %c0_65 = arith.constant 0 : index
    %c0_66 = arith.constant 0 : index
    %56 = vector.load %arg10[%c2_64, %c0_65, %c0_66] : memref<12x16x8xbf16, #tpu.memory_space<vmem>>, vector<10x16x8xbf16>
    %57 = vector.shape_cast %56 : vector<10x16x8xbf16> to vector<160x8xbf16>
    %c2_67 = arith.constant 2 : index
    %c1_68 = arith.constant 1 : index
    %c0_69 = arith.constant 0 : index
    %c0_70 = arith.constant 0 : index
    %58 = vector.load %arg5[%c2_67, %c1_68, %c0_69, %c0_70] : memref<3x3x8x8xbf16, #tpu.memory_space<vmem>>, vector<1x1x8x8xbf16>
    %59 = vector.shape_cast %58 : vector<1x1x8x8xbf16> to vector<8x8xbf16>
    %cst_71 = arith.constant dense<0.000000e+00> : vector<160x8xf32>
    %60 = tpu.matmul %57, %59, %cst_71 {dimension_numbers = #tpu.dot_dimension_numbers<[1], [0], [0], [1], [0, 0, 1, 1], [], []>} : vector<160x8xbf16>, vector<8x8xbf16>, vector<160x8xf32> -> vector<160x8xf32>
    %61 = arith.addf %55, %60 : vector<160x8xf32>
    %62 = arith.addf %42, %61 : vector<160x8xf32>
    %cst_72 = arith.constant 0.000000e+00 : f32
    %63 = vector.broadcast %cst_72 : f32 to vector<160x8xf32>
    %c0_73 = arith.constant 0 : index
    %c0_74 = arith.constant 0 : index
    %c0_75 = arith.constant 0 : index
    %64 = vector.load %arg10[%c0_73, %c0_74, %c0_75] : memref<12x16x8xbf16, #tpu.memory_space<vmem>>, vector<10x16x8xbf16>
    %65 = vector.shape_cast %64 : vector<10x16x8xbf16> to vector<160x8xbf16>
    %c0_76 = arith.constant 0 : index
    %c2_77 = arith.constant 2 : index
    %c0_78 = arith.constant 0 : index
    %c0_79 = arith.constant 0 : index
    %66 = vector.load %arg5[%c0_76, %c2_77, %c0_78, %c0_79] : memref<3x3x8x8xbf16, #tpu.memory_space<vmem>>, vector<1x1x8x8xbf16>
    %67 = vector.shape_cast %66 : vector<1x1x8x8xbf16> to vector<8x8xbf16>
    %cst_80 = arith.constant dense<0.000000e+00> : vector<160x8xf32>
    %68 = tpu.matmul %65, %67, %cst_80 {dimension_numbers = #tpu.dot_dimension_numbers<[1], [0], [0], [1], [0, 0, 1, 1], [], []>} : vector<160x8xbf16>, vector<8x8xbf16>, vector<160x8xf32> -> vector<160x8xf32>
    %69 = arith.addf %63, %68 : vector<160x8xf32>
    %c1_81 = arith.constant 1 : index
    %c0_82 = arith.constant 0 : index
    %c0_83 = arith.constant 0 : index
    %70 = vector.load %arg10[%c1_81, %c0_82, %c0_83] : memref<12x16x8xbf16, #tpu.memory_space<vmem>>, vector<10x16x8xbf16>
    %71 = vector.shape_cast %70 : vector<10x16x8xbf16> to vector<160x8xbf16>
    %c1_84 = arith.constant 1 : index
    %c2_85 = arith.constant 2 : index
    %c0_86 = arith.constant 0 : index
    %c0_87 = arith.constant 0 : index
    %72 = vector.load %arg5[%c1_84, %c2_85, %c0_86, %c0_87] : memref<3x3x8x8xbf16, #tpu.memory_space<vmem>>, vector<1x1x8x8xbf16>
    %73 = vector.shape_cast %72 : vector<1x1x8x8xbf16> to vector<8x8xbf16>
    %cst_88 = arith.constant dense<0.000000e+00> : vector<160x8xf32>
    %74 = tpu.matmul %71, %73, %cst_88 {dimension_numbers = #tpu.dot_dimension_numbers<[1], [0], [0], [1], [0, 0, 1, 1], [], []>} : vector<160x8xbf16>, vector<8x8xbf16>, vector<160x8xf32> -> vector<160x8xf32>
    %75 = arith.addf %69, %74 : vector<160x8xf32>
    %c2_89 = arith.constant 2 : index
    %c0_90 = arith.constant 0 : index
    %c0_91 = arith.constant 0 : index
    %76 = vector.load %arg10[%c2_89, %c0_90, %c0_91] : memref<12x16x8xbf16, #tpu.memory_space<vmem>>, vector<10x16x8xbf16>
    %77 = vector.shape_cast %76 : vector<10x16x8xbf16> to vector<160x8xbf16>
    %c2_92 = arith.constant 2 : index
    %c2_93 = arith.constant 2 : index
    %c0_94 = arith.constant 0 : index
    %c0_95 = arith.constant 0 : index
    %78 = vector.load %arg5[%c2_92, %c2_93, %c0_94, %c0_95] : memref<3x3x8x8xbf16, #tpu.memory_space<vmem>>, vector<1x1x8x8xbf16>
    %79 = vector.shape_cast %78 : vector<1x1x8x8xbf16> to vector<8x8xbf16>
    %cst_96 = arith.constant dense<0.000000e+00> : vector<160x8xf32>
    %80 = tpu.matmul %77, %79, %cst_96 {dimension_numbers = #tpu.dot_dimension_numbers<[1], [0], [0], [1], [0, 0, 1, 1], [], []>} : vector<160x8xbf16>, vector<8x8xbf16>, vector<160x8xf32> -> vector<160x8xf32>
    %81 = arith.addf %75, %80 : vector<160x8xf32>
    %c159_i32 = arith.constant 159 : i32
    %82 = tpu.dynamic_rotate %81 by %c159_i32 dim 0 : vector<160x8xf32>, i32 -> vector<160x8xf32>
    %c15_i32 = arith.constant 15 : i32
    %83 = vector.broadcast %c15_i32 : i32 to vector<160x8xi32>
    %84 = arith.cmpi eq, %16, %83 : vector<160x8xi32>
    %cst_97 = arith.constant 0.000000e+00 : f32
    %85 = vector.broadcast %cst_97 : f32 to vector<160x8xf32>
    %86 = arith.select %84, %85, %82 : vector<160x8xi1>, vector<160x8xf32>
    %87 = arith.addf %62, %86 : vector<160x8xf32>
    %c0_98 = arith.constant 0 : index
    %c0_99 = arith.constant 0 : index
    %88 = memref.load %arg6[%c0_98, %c0_99] : memref<1x1xf32, #tpu.memory_space<smem>>
    %cst_100 = arith.constant 0.000000e+00 : f32
    %89 = vector.broadcast %cst_100 : f32 to vector<160x8xf32>
    %90 = arith.cmpf ogt, %87, %89 : vector<160x8xf32>
    %91 = vector.broadcast %88 : f32 to vector<160x8xf32>
    %92 = arith.mulf %91, %87 : vector<160x8xf32>
    %93 = arith.select %90, %87, %92 : vector<160x8xi1>, vector<160x8xf32>
    %94 = vector.shape_cast %93 : vector<160x8xf32> to vector<10x16x8xf32>
    %95 = tpu.iota {dimensions = array<i32: 0>} : vector<10x16x8xi32>
    %c0_i32_101 = arith.constant 0 : i32
    %96 = arith.cmpi eq, %arg1, %c0_i32_101 : i32
    %c0_i32_102 = arith.constant 0 : i32
    %97 = vector.broadcast %c0_i32_102 : i32 to vector<10x16x8xi32>
    %98 = arith.cmpi eq, %95, %97 : vector<10x16x8xi32>
    %99 = vector.broadcast %96 : i1 to vector<10x16x8xi1>
    %100 = arith.andi %99, %98 : vector<10x16x8xi1>
    %cst_103 = arith.constant 0.000000e+00 : f32
    %101 = vector.broadcast %cst_103 : f32 to vector<10x16x8xf32>
    %102 = arith.select %100, %101, %94 : vector<10x16x8xi1>, vector<10x16x8xf32>
    %c1_i32_104 = arith.constant 1 : i32
    %103 = arith.cmpi eq, %arg1, %c1_i32_104 : i32
    %c9_i32 = arith.constant 9 : i32
    %104 = vector.broadcast %c9_i32 : i32 to vector<10x16x8xi32>
    %105 = arith.cmpi eq, %95, %104 : vector<10x16x8xi32>
    %106 = vector.broadcast %103 : i1 to vector<10x16x8xi1>
    %107 = arith.andi %106, %105 : vector<10x16x8xi1>
    %cst_105 = arith.constant 0.000000e+00 : f32
    %108 = vector.broadcast %cst_105 : f32 to vector<10x16x8xf32>
    %109 = arith.select %107, %108, %102 : vector<10x16x8xi1>, vector<10x16x8xf32>
    %110 = arith.truncf %109 : vector<10x16x8xf32> to vector<10x16x8xbf16>
    %c0_106 = arith.constant 0 : index
    %c0_107 = arith.constant 0 : index
    %c0_108 = arith.constant 0 : index
    %111 = vector.load %arg10[%c0_106, %c0_107, %c0_108] : memref<12x16x8xbf16, #tpu.memory_space<vmem>>, vector<10x16x8xbf16>
    tpu.vector_store %arg10[%c0_106, %c0_107, %c0_108], %110 {strides = array<i32>} : memref<12x16x8xbf16, #tpu.memory_space<vmem>>, vector<10x16x8xbf16>,
    %112 = tpu.iota {dimensions = array<i32: 1>} : vector<8x16x8xi32>
    %113 = vector.shape_cast %112 : vector<8x16x8xi32> to vector<128x8xi32>
    %cst_109 = arith.constant 0.000000e+00 : f32
    %114 = vector.broadcast %cst_109 : f32 to vector<128x8xf32>
    %cst_110 = arith.constant 0.000000e+00 : f32
    %115 = vector.broadcast %cst_110 : f32 to vector<128x8xf32>
    %c0_111 = arith.constant 0 : index
    %c0_112 = arith.constant 0 : index
    %c0_113 = arith.constant 0 : index
    %116 = vector.load %arg10[%c0_111, %c0_112, %c0_113] : memref<12x16x8xbf16, #tpu.memory_space<vmem>>, vector<8x16x8xbf16>
    %117 = vector.shape_cast %116 : vector<8x16x8xbf16> to vector<128x8xbf16>
    %c0_114 = arith.constant 0 : index
    %c0_115 = arith.constant 0 : index
    %c0_116 = arith.constant 0 : index
    %c0_117 = arith.constant 0 : index
    %118 = vector.load %arg7[%c0_114, %c0_115, %c0_116, %c0_117] : memref<3x3x8x8xbf16, #tpu.memory_space<vmem>>, vector<1x1x8x8xbf16>
    %119 = vector.shape_cast %118 : vector<1x1x8x8xbf16> to vector<8x8xbf16>
    %cst_118 = arith.constant dense<0.000000e+00> : vector<128x8xf32>
    %120 = tpu.matmul %117, %119, %cst_118 {dimension_numbers = #tpu.dot_dimension_numbers<[1], [0], [0], [1], [0, 0, 1, 1], [], []>} : vector<128x8xbf16>, vector<8x8xbf16>, vector<128x8xf32> -> vector<128x8xf32>
    %121 = arith.addf %115, %120 : vector<128x8xf32>
    %c1_119 = arith.constant 1 : index
    %c0_120 = arith.constant 0 : index
    %c0_121 = arith.constant 0 : index
    %122 = vector.load %arg10[%c1_119, %c0_120, %c0_121] : memref<12x16x8xbf16, #tpu.memory_space<vmem>>, vector<8x16x8xbf16>
    %123 = vector.shape_cast %122 : vector<8x16x8xbf16> to vector<128x8xbf16>
    %c1_122 = arith.constant 1 : index
    %c0_123 = arith.constant 0 : index
    %c0_124 = arith.constant 0 : index
    %c0_125 = arith.constant 0 : index
    %124 = vector.load %arg7[%c1_122, %c0_123, %c0_124, %c0_125] : memref<3x3x8x8xbf16, #tpu.memory_space<vmem>>, vector<1x1x8x8xbf16>
    %125 = vector.shape_cast %124 : vector<1x1x8x8xbf16> to vector<8x8xbf16>
    %cst_126 = arith.constant dense<0.000000e+00> : vector<128x8xf32>
    %126 = tpu.matmul %123, %125, %cst_126 {dimension_numbers = #tpu.dot_dimension_numbers<[1], [0], [0], [1], [0, 0, 1, 1], [], []>} : vector<128x8xbf16>, vector<8x8xbf16>, vector<128x8xf32> -> vector<128x8xf32>
    %127 = arith.addf %121, %126 : vector<128x8xf32>
    %c2_127 = arith.constant 2 : index
    %c0_128 = arith.constant 0 : index
    %c0_129 = arith.constant 0 : index
    %128 = vector.load %arg10[%c2_127, %c0_128, %c0_129] : memref<12x16x8xbf16, #tpu.memory_space<vmem>>, vector<8x16x8xbf16>
    %129 = vector.shape_cast %128 : vector<8x16x8xbf16> to vector<128x8xbf16>
    %c2_130 = arith.constant 2 : index
    %c0_131 = arith.constant 0 : index
    %c0_132 = arith.constant 0 : index
    %c0_133 = arith.constant 0 : index
    %130 = vector.load %arg7[%c2_130, %c0_131, %c0_132, %c0_133] : memref<3x3x8x8xbf16, #tpu.memory_space<vmem>>, vector<1x1x8x8xbf16>
    %131 = vector.shape_cast %130 : vector<1x1x8x8xbf16> to vector<8x8xbf16>
    %cst_134 = arith.constant dense<0.000000e+00> : vector<128x8xf32>
    %132 = tpu.matmul %129, %131, %cst_134 {dimension_numbers = #tpu.dot_dimension_numbers<[1], [0], [0], [1], [0, 0, 1, 1], [], []>} : vector<128x8xbf16>, vector<8x8xbf16>, vector<128x8xf32> -> vector<128x8xf32>
    %133 = arith.addf %127, %132 : vector<128x8xf32>
    %c1_i32_135 = arith.constant 1 : i32
    %134 = tpu.dynamic_rotate %133 by %c1_i32_135 dim 0 : vector<128x8xf32>, i32 -> vector<128x8xf32>
    %c0_i32_136 = arith.constant 0 : i32
    %135 = vector.broadcast %c0_i32_136 : i32 to vector<128x8xi32>
    %136 = arith.cmpi eq, %113, %135 : vector<128x8xi32>
    %cst_137 = arith.constant 0.000000e+00 : f32
    %137 = vector.broadcast %cst_137 : f32 to vector<128x8xf32>
    %138 = arith.select %136, %137, %134 : vector<128x8xi1>, vector<128x8xf32>
    %139 = arith.addf %114, %138 : vector<128x8xf32>
    %cst_138 = arith.constant 0.000000e+00 : f32
    %140 = vector.broadcast %cst_138 : f32 to vector<128x8xf32>
    %c0_139 = arith.constant 0 : index
    %c0_140 = arith.constant 0 : index
    %c0_141 = arith.constant 0 : index
    %141 = vector.load %arg10[%c0_139, %c0_140, %c0_141] : memref<12x16x8xbf16, #tpu.memory_space<vmem>>, vector<8x16x8xbf16>
    %142 = vector.shape_cast %141 : vector<8x16x8xbf16> to vector<128x8xbf16>
    %c0_142 = arith.constant 0 : index
    %c1_143 = arith.constant 1 : index
    %c0_144 = arith.constant 0 : index
    %c0_145 = arith.constant 0 : index
    %143 = vector.load %arg7[%c0_142, %c1_143, %c0_144, %c0_145] : memref<3x3x8x8xbf16, #tpu.memory_space<vmem>>, vector<1x1x8x8xbf16>
    %144 = vector.shape_cast %143 : vector<1x1x8x8xbf16> to vector<8x8xbf16>
    %cst_146 = arith.constant dense<0.000000e+00> : vector<128x8xf32>
    %145 = tpu.matmul %142, %144, %cst_146 {dimension_numbers = #tpu.dot_dimension_numbers<[1], [0], [0], [1], [0, 0, 1, 1], [], []>} : vector<128x8xbf16>, vector<8x8xbf16>, vector<128x8xf32> -> vector<128x8xf32>
    %146 = arith.addf %140, %145 : vector<128x8xf32>
    %c1_147 = arith.constant 1 : index
    %c0_148 = arith.constant 0 : index
    %c0_149 = arith.constant 0 : index
    %147 = vector.load %arg10[%c1_147, %c0_148, %c0_149] : memref<12x16x8xbf16, #tpu.memory_space<vmem>>, vector<8x16x8xbf16>
    %148 = vector.shape_cast %147 : vector<8x16x8xbf16> to vector<128x8xbf16>
    %c1_150 = arith.constant 1 : index
    %c1_151 = arith.constant 1 : index
    %c0_152 = arith.constant 0 : index
    %c0_153 = arith.constant 0 : index
    %149 = vector.load %arg7[%c1_150, %c1_151, %c0_152, %c0_153] : memref<3x3x8x8xbf16, #tpu.memory_space<vmem>>, vector<1x1x8x8xbf16>
    %150 = vector.shape_cast %149 : vector<1x1x8x8xbf16> to vector<8x8xbf16>
    %cst_154 = arith.constant dense<0.000000e+00> : vector<128x8xf32>
    %151 = tpu.matmul %148, %150, %cst_154 {dimension_numbers = #tpu.dot_dimension_numbers<[1], [0], [0], [1], [0, 0, 1, 1], [], []>} : vector<128x8xbf16>, vector<8x8xbf16>, vector<128x8xf32> -> vector<128x8xf32>
    %152 = arith.addf %146, %151 : vector<128x8xf32>
    %c2_155 = arith.constant 2 : index
    %c0_156 = arith.constant 0 : index
    %c0_157 = arith.constant 0 : index
    %153 = vector.load %arg10[%c2_155, %c0_156, %c0_157] : memref<12x16x8xbf16, #tpu.memory_space<vmem>>, vector<8x16x8xbf16>
    %154 = vector.shape_cast %153 : vector<8x16x8xbf16> to vector<128x8xbf16>
    %c2_158 = arith.constant 2 : index
    %c1_159 = arith.constant 1 : index
    %c0_160 = arith.constant 0 : index
    %c0_161 = arith.constant 0 : index
    %155 = vector.load %arg7[%c2_158, %c1_159, %c0_160, %c0_161] : memref<3x3x8x8xbf16, #tpu.memory_space<vmem>>, vector<1x1x8x8xbf16>
    %156 = vector.shape_cast %155 : vector<1x1x8x8xbf16> to vector<8x8xbf16>
    %cst_162 = arith.constant dense<0.000000e+00> : vector<128x8xf32>
    %157 = tpu.matmul %154, %156, %cst_162 {dimension_numbers = #tpu.dot_dimension_numbers<[1], [0], [0], [1], [0, 0, 1, 1], [], []>} : vector<128x8xbf16>, vector<8x8xbf16>, vector<128x8xf32> -> vector<128x8xf32>
    %158 = arith.addf %152, %157 : vector<128x8xf32>
    %159 = arith.addf %139, %158 : vector<128x8xf32>
    %cst_163 = arith.constant 0.000000e+00 : f32
    %160 = vector.broadcast %cst_163 : f32 to vector<128x8xf32>
    %c0_164 = arith.constant 0 : index
    %c0_165 = arith.constant 0 : index
    %c0_166 = arith.constant 0 : index
    %161 = vector.load %arg10[%c0_164, %c0_165, %c0_166] : memref<12x16x8xbf16, #tpu.memory_space<vmem>>, vector<8x16x8xbf16>
    %162 = vector.shape_cast %161 : vector<8x16x8xbf16> to vector<128x8xbf16>
    %c0_167 = arith.constant 0 : index
    %c2_168 = arith.constant 2 : index
    %c0_169 = arith.constant 0 : index
    %c0_170 = arith.constant 0 : index
    %163 = vector.load %arg7[%c0_167, %c2_168, %c0_169, %c0_170] : memref<3x3x8x8xbf16, #tpu.memory_space<vmem>>, vector<1x1x8x8xbf16>
    %164 = vector.shape_cast %163 : vector<1x1x8x8xbf16> to vector<8x8xbf16>
    %cst_171 = arith.constant dense<0.000000e+00> : vector<128x8xf32>
    %165 = tpu.matmul %162, %164, %cst_171 {dimension_numbers = #tpu.dot_dimension_numbers<[1], [0], [0], [1], [0, 0, 1, 1], [], []>} : vector<128x8xbf16>, vector<8x8xbf16>, vector<128x8xf32> -> vector<128x8xf32>
    %166 = arith.addf %160, %165 : vector<128x8xf32>
    %c1_172 = arith.constant 1 : index
    %c0_173 = arith.constant 0 : index
    %c0_174 = arith.constant 0 : index
    %167 = vector.load %arg10[%c1_172, %c0_173, %c0_174] : memref<12x16x8xbf16, #tpu.memory_space<vmem>>, vector<8x16x8xbf16>
    %168 = vector.shape_cast %167 : vector<8x16x8xbf16> to vector<128x8xbf16>
    %c1_175 = arith.constant 1 : index
    %c2_176 = arith.constant 2 : index
    %c0_177 = arith.constant 0 : index
    %c0_178 = arith.constant 0 : index
    %169 = vector.load %arg7[%c1_175, %c2_176, %c0_177, %c0_178] : memref<3x3x8x8xbf16, #tpu.memory_space<vmem>>, vector<1x1x8x8xbf16>
    %170 = vector.shape_cast %169 : vector<1x1x8x8xbf16> to vector<8x8xbf16>
    %cst_179 = arith.constant dense<0.000000e+00> : vector<128x8xf32>
    %171 = tpu.matmul %168, %170, %cst_179 {dimension_numbers = #tpu.dot_dimension_numbers<[1], [0], [0], [1], [0, 0, 1, 1], [], []>} : vector<128x8xbf16>, vector<8x8xbf16>, vector<128x8xf32> -> vector<128x8xf32>
    %172 = arith.addf %166, %171 : vector<128x8xf32>
    %c2_180 = arith.constant 2 : index
    %c0_181 = arith.constant 0 : index
    %c0_182 = arith.constant 0 : index
    %173 = vector.load %arg10[%c2_180, %c0_181, %c0_182] : memref<12x16x8xbf16, #tpu.memory_space<vmem>>, vector<8x16x8xbf16>
    %174 = vector.shape_cast %173 : vector<8x16x8xbf16> to vector<128x8xbf16>
    %c2_183 = arith.constant 2 : index
    %c2_184 = arith.constant 2 : index
    %c0_185 = arith.constant 0 : index
    %c0_186 = arith.constant 0 : index
    %175 = vector.load %arg7[%c2_183, %c2_184, %c0_185, %c0_186] : memref<3x3x8x8xbf16, #tpu.memory_space<vmem>>, vector<1x1x8x8xbf16>
    %176 = vector.shape_cast %175 : vector<1x1x8x8xbf16> to vector<8x8xbf16>
    %cst_187 = arith.constant dense<0.000000e+00> : vector<128x8xf32>
    %177 = tpu.matmul %174, %176, %cst_187 {dimension_numbers = #tpu.dot_dimension_numbers<[1], [0], [0], [1], [0, 0, 1, 1], [], []>} : vector<128x8xbf16>, vector<8x8xbf16>, vector<128x8xf32> -> vector<128x8xf32>
    %178 = arith.addf %172, %177 : vector<128x8xf32>
    %c127_i32 = arith.constant 127 : i32
    %179 = tpu.dynamic_rotate %178 by %c127_i32 dim 0 : vector<128x8xf32>, i32 -> vector<128x8xf32>
    %c15_i32_188 = arith.constant 15 : i32
    %180 = vector.broadcast %c15_i32_188 : i32 to vector<128x8xi32>
    %181 = arith.cmpi eq, %113, %180 : vector<128x8xi32>
    %cst_189 = arith.constant 0.000000e+00 : f32
    %182 = vector.broadcast %cst_189 : f32 to vector<128x8xf32>
    %183 = arith.select %181, %182, %179 : vector<128x8xi1>, vector<128x8xf32>
    %184 = arith.addf %159, %183 : vector<128x8xf32>
    %c0_i32_190 = arith.constant 0 : i32
    %185 = arith.cmpi eq, %arg1, %c0_i32_190 : i32
    %186 = arith.extui %185 : i1 to i32
    %c0_i32_191 = arith.constant 0 : i32
    %187 = arith.cmpi ne, %186, %c0_i32_191 : i32
    scf.if %187 {
      %cst_203 = arith.constant 0.000000e+00 : f32
      %198 = vector.broadcast %cst_203 : f32 to vector<1x1x8xf32>
      %c0_204 = arith.constant 0 : index
      %c0_205 = arith.constant 0 : index
      %c0_206 = arith.constant 0 : index
      %199 = vector.load %arg9[%c0_204, %c0_205, %c0_206] : memref<1x1x8xf32, #tpu.memory_space<vmem>>, vector<1x1x8xf32>
      tpu.vector_store %arg9[%c0_204, %c0_205, %c0_206], %198 {strides = array<i32>} : memref<1x1x8xf32, #tpu.memory_space<vmem>>, vector<1x1x8xf32>,
    } else {
    }
    %c0_192 = arith.constant 0 : index
    %c0_193 = arith.constant 0 : index
    %c0_194 = arith.constant 0 : index
    %188 = vector.load %arg9[%c0_192, %c0_193, %c0_194] : memref<1x1x8xf32, #tpu.memory_space<vmem>>, vector<1x1x8xf32>
    %cst_195 = arith.constant dense<0.000000e+00> : vector<8xf32>
    %189 = vector.multi_reduction <add>, %184, %cst_195 [0] : vector<128x8xf32> to vector<8xf32>
    %190 = vector.shape_cast %189 : vector<8xf32> to vector<1x1x8xf32>
    %191 = arith.addf %188, %190 : vector<1x1x8xf32>
    %c0_196 = arith.constant 0 : index
    %c0_197 = arith.constant 0 : index
    %c0_198 = arith.constant 0 : index
    %192 = vector.load %arg9[%c0_196, %c0_197, %c0_198] : memref<1x1x8xf32, #tpu.memory_space<vmem>>, vector<1x1x8xf32>
    tpu.vector_store %arg9[%c0_196, %c0_197, %c0_198], %191 {strides = array<i32>} : memref<1x1x8xf32, #tpu.memory_space<vmem>>, vector<1x1x8xf32>,
    %193 = vector.shape_cast %184 : vector<128x8xf32> to vector<8x16x8xf32>
    %194 = arith.truncf %193 : vector<8x16x8xf32> to vector<8x16x8xbf16>
    %c0_199 = arith.constant 0 : index
    %c0_200 = arith.constant 0 : index
    %c0_201 = arith.constant 0 : index
    %c0_202 = arith.constant 0 : index
    %195 = vector.load %arg8[%c0_199, %c0_200, %c0_201, %c0_202] : memref<1x8x16x8xbf16, #tpu.memory_space<vmem>>, vector<1x8x16x8xbf16>
    %196 = vector.shape_cast %195 : vector<1x8x16x8xbf16> to vector<8x16x8xbf16>
    %197 = vector.shape_cast %194 : vector<8x16x8xbf16> to vector<1x8x16x8xbf16>
    tpu.vector_store %arg8[%c0_199, %c0_200, %c0_201, %c0_202], %197 {strides = array<i32>} : memref<1x8x16x8xbf16, #tpu.memory_space<vmem>>, vector<1x8x16x8xbf16>,
    return
  }
  func.func @transform_0(%arg0: i32, %arg1: i32) -> (i32, i32, i32, i32) {
    %c4_i32 = arith.constant 4 : i32
    %0 = arith.muli %arg1, %c4_i32 : i32
    %c1_i32 = arith.constant 1 : i32
    %1 = arith.subi %0, %c1_i32 : i32
    %c0_i32 = arith.constant 0 : i32
    %2 = arith.maxsi %1, %c0_i32 : i32
    %c0_i32_0 = arith.constant 0 : i32
    %c0_i32_1 = arith.constant 0 : i32
    %c0_i32_2 = arith.constant 0 : i32
    return %arg0, %2, %c0_i32_0, %c0_i32_1 : i32, i32, i32, i32
  }
  func.func @transform_1(%arg0: i32, %arg1: i32) -> (i32, i32, i32, i32) {
    %c0_i32 = arith.constant 0 : i32
    %c0_i32_0 = arith.constant 0 : i32
    %c0_i32_1 = arith.constant 0 : i32
    return %arg0, %arg1, %c0_i32, %c0_i32_0 : i32, i32, i32, i32
  }
  func.func @transform_2(%arg0: i32, %arg1: i32) -> (i32, i32, i32, i32) {
    %c1_i32 = arith.constant 1 : i32
    %0 = arith.addi %arg1, %c1_i32 : i32
    %c4_i32 = arith.constant 4 : i32
    %1 = arith.muli %0, %c4_i32 : i32
    %c7_i32 = arith.constant 7 : i32
    %2 = arith.minsi %1, %c7_i32 : i32
    %c0_i32 = arith.constant 0 : i32
    %c0_i32_0 = arith.constant 0 : i32
    %c0_i32_1 = arith.constant 0 : i32
    return %arg0, %2, %c0_i32, %c0_i32_0 : i32, i32, i32, i32
  }
  func.func @transform_3(%arg0: i32, %arg1: i32) -> (i32, i32, i32, i32) {
    %c0_i32 = arith.constant 0 : i32
    %c0_i32_0 = arith.constant 0 : i32
    %c0_i32_1 = arith.constant 0 : i32
    %c0_i32_2 = arith.constant 0 : i32
    %c0_i32_3 = arith.constant 0 : i32
    return %c0_i32, %c0_i32_0, %c0_i32_1, %c0_i32_2 : i32, i32, i32, i32
  }
  func.func @transform_4(%arg0: i32, %arg1: i32) -> (i32, i32) {
    %c0_i32 = arith.constant 0 : i32
    %c0_i32_0 = arith.constant 0 : i32
    %c0_i32_1 = arith.constant 0 : i32
    return %c0_i32, %c0_i32_0 : i32, i32
  }
  func.func @transform_5(%arg0: i32, %arg1: i32) -> (i32, i32, i32, i32) {
    %c0_i32 = arith.constant 0 : i32
    %c0_i32_0 = arith.constant 0 : i32
    %c0_i32_1 = arith.constant 0 : i32
    %c0_i32_2 = arith.constant 0 : i32
    %c0_i32_3 = arith.constant 0 : i32
    return %c0_i32, %c0_i32_0, %c0_i32_1, %c0_i32_2 : i32, i32, i32, i32
  }
  func.func @transform_6(%arg0: i32, %arg1: i32) -> (i32, i32, i32, i32) {
    %c0_i32 = arith.constant 0 : i32
    %c0_i32_0 = arith.constant 0 : i32
    %c0_i32_1 = arith.constant 0 : i32
    return %arg0, %arg1, %c0_i32, %c0_i32_0 : i32, i32, i32, i32
  }
  func.func @transform_7(%arg0: i32, %arg1: i32) -> (i32, i32, i32) {
    %c0_i32 = arith.constant 0 : i32
    %c0_i32_0 = arith.constant 0 : i32
    %c0_i32_1 = arith.constant 0 : i32
    return %arg0, %c0_i32, %c0_i32_0 : i32, i32, i32
  }
}

</mosaic_0001>

<llo_original>
// kernel: tpu_custom_call.1
$region0: #{tpu_custom_call.1}
  #allocation0 [shape = 'u32[]', space=smem, size = 0x4, offset = 0x4, fixed_abs, tag = 'smem constant byte address 0x4 - core index']
  #allocation1 [shape = 'u32[144,128]{1,0:T(1,128)}', space=vmem, size = 0x12000, scoped, tag = 'internal scratch']
  #allocation2 [shape = 'bf16[12,16,8]{2,1,0:T(8,128)(2,1)}', space=vmem, size = 0xc000, scoped, tag = 'scratch operand']
  #allocation3 [shape = 'f32[1,1]{1,0:T(1,128)S(6)}', space=smem, size = 0x200, scoped, tag = 'scoped memory for tpu_custom_call.1']
  %s0 = inlined_call_operand.vmem [shape: bf16[2,16,16,8], index: 0, kind: input, shape index: {}]
  %s1 = inlined_call_operand.vmem [shape: bf16[2,16,16,8], index: 1, kind: input, shape index: {}]
  %s2 = inlined_call_operand.vmem [shape: bf16[2,16,16,8], index: 2, kind: input, shape index: {}]
  %s3 = inlined_call_operand.vmem [shape: bf16[3,3,8,8], index: 3, kind: input, shape index: {}]
  %s4 = inlined_call_operand.<no memory space> [shape: f32[1,1], index: 4, kind: input, shape index: {}]
  %s5 = inlined_call_operand.vmem [shape: bf16[3,3,8,8], index: 5, kind: input, shape index: {}]
  %s6 = inlined_call_operand.vmem [shape: bf16[2,16,16,8], index: 6, kind: output, shape index: {0}]
  %s7 = inlined_call_operand.hbm [shape: f32[2,1,8], index: 7, kind: output, shape index: {1}]
  %8 = xla_tuple %s6, %s7
  %s9 = sld [smem:[#allocation0]]
  $region77: #{tpu_custom_call.1} parent=0
    _
  %s11 = ssub.s32 1, %s9
  %s12 = scalar_select 0, %s11, %s9
  %13 = sst [smem:[#allocation3]] %s4
  $region1: #{tpu_custom_call.1} parent=0
    #allocation4 [shape = 'u8[1024]{0}', space=vmem, size = 0x400, scoped, tag = 'output window, operand 1']
    #allocation5 [shape = 's32[2]{0}', space=sflag, size = 0x8, scoped, tag = 'scoped memory for tpu_custom_call.1']
    %14 = vsyncpa [#allocation5], 0
    %s15 = scalar_lea.sflag [#allocation5], 1
    %16 = vsyncpa %s15, 0
    loop: start=0, step=1, limit=6
    $region2: #{tpu_custom_call.1} parent=1 // loop_pre_header
      _
    $region3: #{tpu_custom_call.1} parent=1 // loop_header
      %s18 = sphi 0, %s22
      %p19 = scmp.ge.s32.totalorder %s18, 6
      %s25 = sphi 0, %s37
      %s26 = sphi 0, %s33
      %s27 = sphi 0, %s25
      %s28 = sphi 0, %s26
      %s29 = sphi 0, %s27
      %s30 = sphi 0, %s28
      %s50 = sphi 0, %s52
      %s53 = sphi 0, %s50
      %s54 = sphi 0, %s53
      %s70 = sphi 0, %s54
      %s78 = sphi 0, %s80
      %s81 = sphi 0, %s78
      %s82 = sphi 0, %s81
      %s98 = sphi 0, %s82
      %s114 = sphi 0, %s116
      %s117 = sphi 0, %s114
      %s118 = sphi 0, %s117
      %s134 = sphi 0, %s118
      %s138 = sphi 0, %s138
      %s140 = sphi 0, %s138
      %s141 = sphi 0, %s140
      %s155 = sphi 0, %s141
      %s159 = sphi 0, %s159
      %s161 = sphi 0, %s159
      %s162 = sphi 0, %s161
      %s176 = sphi 0, %s162
      %s180 = sphi 0, %s180
      %s182 = sphi 0, %s180
      %s183 = sphi 0, %s182
      %s197 = sphi 0, %s183
      %s205 = sphi 0, %s207
      %s208 = sphi 0, %s205
      %s209 = sphi 0, %s208
      %s225 = sphi 0, %s209
      %s231 = sphi 0, %s233
      %s234 = sphi 0, %s231
      %s235 = sphi 0, %s234
      %s251 = sphi 0, %s235
    $region4: #{tpu_custom_call.1} parent=1 // loop_header_branch
      %21 = sbr.rel (%p19) target = $region8
    $region5: #{tpu_custom_call.1} parent=1 // loop_body
      %s23 = ssub.s32 %s18, 1
      %s24 = ssub.s32 %s18, 2
      %s31 = sadd.s32 1, %s26
      %p32 = scmp.ge.s32.totalorder %s31, 2
      %s33 = scalar_select %p32, 0, %s31
      %s34 = sadd.s32 1, %s25
      %s35 = scalar_select %p32, %s34, %s25
      %p36 = scmp.ge.s32.totalorder %s35, 2
      %s37 = scalar_select %p36, 0, %s35
      %s38 = smul.u32 %s26, 4
      %s39 = ssub.s32 %s38, 1
      %p40 = scmp.gt.s32.totalorder %s39, 0
      %s41 = scalar_select %p40, %s39, 0
      %s42 = smul.u32 %s33, 4
      %s43 = ssub.s32 %s42, 1
      %p44 = scmp.gt.s32.totalorder %s43, 0
      %s45 = scalar_select %p44, %s43, 0
      %s46 = ssub.s32 %s25, %s37
      %s47 = ssub.s32 %s41, %s45
      %s48 = sor.u32 %s46, %s47
      %p49 = scmp.eq.s32.totalorder %s48, 0
      %s51 = sadd.s32 %s50, 1
      %s52 = scalar_select %p49, %s50, %s51
      %p55 = pneg %p49
      %p56 = scmp.eq.s32.totalorder %s18, 3
      %p57 = por %p55, %p56
      %p58 = scmp.ne.s32.totalorder %s50, %s53
      %p59 = scmp.eq.s32.totalorder %s18, 0
      %p60 = por %p58, %p59
      %p61 = scmp.ne.s32.totalorder %s50, %s53
      %p62 = scmp.eq.s32.totalorder %s23, 3
      %p63 = por %p61, %p62
      %p64 = scmp.ne.s32.totalorder %s53, %s54
      %p65 = scmp.eq.s32.totalorder %s23, 0
      %p66 = por %p64, %p65
      %p67 = scmp.ne.s32.totalorder %s53, %s54
      %p68 = scmp.eq.s32.totalorder %s24, 3
      %p69 = por %p67, %p68
      %p71 = scmp.ne.s32.totalorder %s54, %s70
      %p72 = scmp.eq.s32.totalorder %s24, 0
      %p73 = por %p71, %p72
      %s74 = ssub.s32 %s25, %s37
      %s75 = ssub.s32 %s26, %s33
      %s76 = sor.u32 %s74, %s75
      %p77 = scmp.eq.s32.totalorder %s76, 0
      %s79 = sadd.s32 %s78, 1
      %s80 = scalar_select %p77, %s78, %s79
      %p83 = pneg %p77
      %p84 = scmp.eq.s32.totalorder %s18, 3
      %p85 = por %p83, %p84
      %p86 = scmp.ne.s32.totalorder %s78, %s81
      %p87 = scmp.eq.s32.totalorder %s18, 0
      %p88 = por %p86, %p87
      %p89 = scmp.ne.s32.totalorder %s78, %s81
      %p90 = scmp.eq.s32.totalorder %s23, 3
      %p91 = por %p89, %p90
      %p92 = scmp.ne.s32.totalorder %s81, %s82
      %p93 = scmp.eq.s32.totalorder %s23, 0
      %p94 = por %p92, %p93
      %p95 = scmp.ne.s32.totalorder %s81, %s82
      %p96 = scmp.eq.s32.totalorder %s24, 3
      %p97 = por %p95, %p96
      %p99 = scmp.ne.s32.totalorder %s82, %s98
      %p100 = scmp.eq.s32.totalorder %s24, 0
      %p101 = por %p99, %p100
      %s102 = sadd.s32 %s26, 1
      %s103 = smul.u32 %s102, 4
      %p104 = scmp.lt.s32.totalorder %s103, 7
      %s105 = scalar_select %p104, %s103, 7
      %s106 = sadd.s32 %s33, 1
      %s107 = smul.u32 %s106, 4
      %p108 = scmp.lt.s32.totalorder %s107, 7
      %s109 = scalar_select %p108, %s107, 7
      %s110 = ssub.s32 %s25, %s37
      %s111 = ssub.s32 %s105, %s109
      %s112 = sor.u32 %s110, %s111
      %p113 = scmp.eq.s32.totalorder %s112, 0
      %s115 = sadd.s32 %s114, 1
      %s116 = scalar_select %p113, %s114, %s115
      %p119 = pneg %p113
      %p120 = scmp.eq.s32.totalorder %s18, 3
      %p121 = por %p119, %p120
      %p122 = scmp.ne.s32.totalorder %s114, %s117
      %p123 = scmp.eq.s32.totalorder %s18, 0
      %p124 = por %p122, %p123
      %p125 = scmp.ne.s32.totalorder %s114, %s117
      %p126 = scmp.eq.s32.totalorder %s23, 3
      %p127 = por %p125, %p126
      %p128 = scmp.ne.s32.totalorder %s117, %s118
      %p129 = scmp.eq.s32.totalorder %s23, 0
      %p130 = por %p128, %p129
      %p131 = scmp.ne.s32.totalorder %s117, %s118
      %p132 = scmp.eq.s32.totalorder %s24, 3
      %p133 = por %p131, %p132
      %p135 = scmp.ne.s32.totalorder %s118, %s134
      %p136 = scmp.eq.s32.totalorder %s24, 0
      %p137 = por %p135, %p136
      %s139 = sadd.s32 %s138, 1
      %p142 = scmp.eq.s32.totalorder %s18, 3
      %p143 = scmp.ne.s32.totalorder %s138, %s140
      %p144 = scmp.eq.s32.totalorder %s18, 0
      %p145 = por %p143, %p144
      %p146 = scmp.ne.s32.totalorder %s138, %s140
      %p147 = scmp.eq.s32.totalorder %s23, 3
      %p148 = por %p146, %p147
      %p149 = scmp.ne.s32.totalorder %s140, %s141
      %p150 = scmp.eq.s32.totalorder %s23, 0
      %p151 = por %p149, %p150
      %p152 = scmp.ne.s32.totalorder %s140, %s141
      %p153 = scmp.eq.s32.totalorder %s24, 3
      %p154 = por %p152, %p153
      %p156 = scmp.ne.s32.totalorder %s141, %s155
      %p157 = scmp.eq.s32.totalorder %s24, 0
      %p158 = por %p156, %p157
      %s160 = sadd.s32 %s159, 1
      %p163 = scmp.eq.s32.totalorder %s18, 3
      %p164 = scmp.ne.s32.totalorder %s159, %s161
      %p165 = scmp.eq.s32.totalorder %s18, 0
      %p166 = por %p164, %p165
      %p167 = scmp.ne.s32.totalorder %s159, %s161
      %p168 = scmp.eq.s32.totalorder %s23, 3
      %p169 = por %p167, %p168
      %p170 = scmp.ne.s32.totalorder %s161, %s162
      %p171 = scmp.eq.s32.totalorder %s23, 0
      %p172 = por %p170, %p171
      %p173 = scmp.ne.s32.totalorder %s161, %s162
      %p174 = scmp.eq.s32.totalorder %s24, 3
      %p175 = por %p173, %p174
      %p177 = scmp.ne.s32.totalorder %s162, %s176
      %p178 = scmp.eq.s32.totalorder %s24, 0
      %p179 = por %p177, %p178
      %s181 = sadd.s32 %s180, 1
      %p184 = scmp.eq.s32.totalorder %s18, 3
      %p185 = scmp.ne.s32.totalorder %s180, %s182
      %p186 = scmp.eq.s32.totalorder %s18, 0
      %p187 = por %p185, %p186
      %p188 = scmp.ne.s32.totalorder %s180, %s182
      %p189 = scmp.eq.s32.totalorder %s23, 3
      %p190 = por %p188, %p189
      %p191 = scmp.ne.s32.totalorder %s182, %s183
      %p192 = scmp.eq.s32.totalorder %s23, 0
      %p193 = por %p191, %p192
      %p194 = scmp.ne.s32.totalorder %s182, %s183
      %p195 = scmp.eq.s32.totalorder %s24, 3
      %p196 = por %p194, %p195
      %p198 = scmp.ne.s32.totalorder %s183, %s197
      %p199 = scmp.eq.s32.totalorder %s24, 0
      %p200 = por %p198, %p199
      %s201 = ssub.s32 %s25, %s37
      %s202 = ssub.s32 %s26, %s33
      %s203 = sor.u32 %s201, %s202
      %p204 = scmp.eq.s32.totalorder %s203, 0
      %s206 = sadd.s32 %s205, 1
      %s207 = scalar_select %p204, %s205, %s206
      %p210 = pneg %p204
      %p211 = scmp.eq.s32.totalorder %s18, 3
      %p212 = por %p210, %p211
      %p213 = scmp.ne.s32.totalorder %s205, %s208
      %p214 = scmp.eq.s32.totalorder %s18, 0
      %p215 = por %p213, %p214
      %p216 = scmp.ne.s32.totalorder %s205, %s208
      %p217 = scmp.eq.s32.totalorder %s23, 3
      %p218 = por %p216, %p217
      %p219 = scmp.ne.s32.totalorder %s208, %s209
      %p220 = scmp.eq.s32.totalorder %s23, 0
      %p221 = por %p219, %p220
      %p222 = scmp.ne.s32.totalorder %s208, %s209
      %p223 = scmp.eq.s32.totalorder %s24, 3
      %p224 = por %p222, %p223
      %p226 = scmp.ne.s32.totalorder %s209, %s225
      %p227 = scmp.eq.s32.totalorder %s24, 0
      %p228 = por %p226, %p227
      %s229 = ssub.s32 %s25, %s37
      %p230 = scmp.eq.s32.totalorder %s229, 0
      %s232 = sadd.s32 %s231, 1
      %s233 = scalar_select %p230, %s231, %s232
      %p236 = pneg %p230
      %p237 = scmp.eq.s32.totalorder %s18, 3
      %p238 = por %p236, %p237
      %p239 = scmp.ne.s32.totalorder %s231, %s234
      %p240 = scmp.eq.s32.totalorder %s18, 0
      %p241 = por %p239, %p240
      %p242 = scmp.ne.s32.totalorder %s231, %s234
      %p243 = scmp.eq.s32.totalorder %s23, 3
      %p244 = por %p242, %p243
      %p245 = scmp.ne.s32.totalorder %s234, %s235
      %p246 = scmp.eq.s32.totalorder %s23, 0
      %p247 = por %p245, %p246
      %p248 = scmp.ne.s32.totalorder %s234, %s235
      %p249 = scmp.eq.s32.totalorder %s24, 3
      %p250 = por %p248, %p249
      %p252 = scmp.ne.s32.totalorder %s235, %s251
      %p253 = scmp.eq.s32.totalorder %s24, 0
      %p254 = por %p252, %p253
      %p255 = scmp.le.s32.totalorder 1, %s18
      %p256 = scmp.lt.s32.totalorder %s18, 5
      %p257 = pnand %p255, %p256
      %p258 = pneg %p257
      // Predicated region
      $region9: #{tpu_custom_call.1} parent=5 // pred_check
        _
      $region10: #{tpu_custom_call.1} parent=5 // pred_check_branch
        %260 = sbr.rel (%p257) target = $region12
      $region11: #{tpu_custom_call.1} parent=5 // pred_region
        %s261 = ssub.s32 %s18, 1
        // Predicated region
        $region13: #{tpu_custom_call.1} parent=11 // pred_check
          %p262 = pneg %p151
        $region14: #{tpu_custom_call.1} parent=11 // pred_check_branch
          %264 = sbr.rel (%p262) target = $region16
        $region15: #{tpu_custom_call.1} parent=11 // pred_region
          _
        $region16: #{tpu_custom_call.1} parent=11 // pred_fallthru
          _
        // Predicated region
        $region17: #{tpu_custom_call.1} parent=11 // pred_check
          %p265 = pneg %p172
        $region18: #{tpu_custom_call.1} parent=11 // pred_check_branch
          %267 = sbr.rel (%p265) target = $region20
        $region19: #{tpu_custom_call.1} parent=11 // pred_region
          _
        $region20: #{tpu_custom_call.1} parent=11 // pred_fallthru
          _
        // Predicated region
        $region21: #{tpu_custom_call.1} parent=11 // pred_check
          %p268 = pneg %p193
        $region22: #{tpu_custom_call.1} parent=11 // pred_check_branch
          %270 = sbr.rel (%p268) target = $region24
        $region23: #{tpu_custom_call.1} parent=11 // pred_region
          _
        $region24: #{tpu_custom_call.1} parent=11 // pred_fallthru
          _
      $region12: #{tpu_custom_call.1} parent=5 // pred_fallthru
        _
      %p271 = scmp.lt.s32.totalorder %s18, 4
      // Predicated region
      $region25: #{tpu_custom_call.1} parent=5 // pred_check
        %p272 = pneg %p271
      $region26: #{tpu_custom_call.1} parent=5 // pred_check_branch
        %274 = sbr.rel (%p272) target = $region28
      $region27: #{tpu_custom_call.1} parent=5 // pred_region
        // Predicated region
        $region29: #{tpu_custom_call.1} parent=27 // pred_check
          %p275 = pneg %p60
        $region30: #{tpu_custom_call.1} parent=27 // pred_check_branch
          %277 = sbr.rel (%p275) target = $region32
        $region31: #{tpu_custom_call.1} parent=27 // pred_region
          %s278 = smul.u32 %s26, 4
          %s279 = ssub.s32 %s278, 1
          %p280 = scmp.gt.s32.totalorder %s279, 0
          %s281 = scalar_select %p280, %s279, 0
          %s282 = smul.u32 2, %s281
          %p283 = scmp.lt.s32.totalorder %s25, 1
          %s284 = scalar_select %p283, %s25, 1
          %p285 = scmp.lt.s32.totalorder %s282, 15
          %s286 = scalar_select %p285, %s282, 15
          %s287 = smul.addr %s286, 2
          %s288 = smul.addr %s284, 32
          %s289 = sadd.s32 %s287, %s288
          %s290 = smul.addr %s289, 4
          %s291 = scalar_lea.vmem %s0, %s290
          %s292 = smul.u32 %s26, 4
          %s293 = ssub.s32 %s292, 1
          %p294 = scmp.gt.s32.totalorder %s293, 0
          %s295 = scalar_select %p294, %s293, 0
          %s296 = smul.u32 2, %s295
        $region32: #{tpu_custom_call.1} parent=27 // pred_fallthru
          _
        // Predicated region
        $region33: #{tpu_custom_call.1} parent=27 // pred_check
          %p297 = pneg %p88
        $region34: #{tpu_custom_call.1} parent=27 // pred_check_branch
          %299 = sbr.rel (%p297) target = $region36
        $region35: #{tpu_custom_call.1} parent=27 // pred_region
          %s300 = smul.u32 8, %s26
          %p301 = scmp.lt.s32.totalorder %s25, 1
          %s302 = scalar_select %p301, %s25, 1
          %p303 = scmp.lt.s32.totalorder %s300, 15
          %s304 = scalar_select %p303, %s300, 15
          %s305 = smul.addr %s304, 2
          %s306 = smul.addr %s302, 32
          %s307 = sadd.s32 %s305, %s306
          %s308 = smul.addr %s307, 4
          %s309 = scalar_lea.vmem %s1, %s308
          %s310 = smul.u32 8, %s26
        $region36: #{tpu_custom_call.1} parent=27 // pred_fallthru
          _
        // Predicated region
        $region37: #{tpu_custom_call.1} parent=27 // pred_check
          %p311 = pneg %p124
        $region38: #{tpu_custom_call.1} parent=27 // pred_check_branch
          %313 = sbr.rel (%p311) target = $region40
        $region39: #{tpu_custom_call.1} parent=27 // pred_region
          %s314 = sadd.s32 %s26, 1
          %s315 = smul.u32 %s314, 4
          %p316 = scmp.lt.s32.totalorder %s315, 7
          %s317 = scalar_select %p316, %s315, 7
          %s318 = smul.u32 2, %s317
          %p319 = scmp.lt.s32.totalorder %s25, 1
          %s320 = scalar_select %p319, %s25, 1
          %p321 = scmp.lt.s32.totalorder %s318, 15
          %s322 = scalar_select %p321, %s318, 15
          %s323 = smul.addr %s322, 2
          %s324 = smul.addr %s320, 32
          %s325 = sadd.s32 %s323, %s324
          %s326 = smul.addr %s325, 4
          %s327 = scalar_lea.vmem %s2, %s326
          %s328 = sadd.s32 %s26, 1
          %s329 = smul.u32 %s328, 4
          %p330 = scmp.lt.s32.totalorder %s329, 7
          %s331 = scalar_select %p330, %s329, 7
          %s332 = smul.u32 2, %s331
        $region40: #{tpu_custom_call.1} parent=27 // pred_fallthru
          _
      $region28: #{tpu_custom_call.1} parent=5 // pred_fallthru
        _
      %p333 = scmp.le.s32.totalorder 1, %s18
      %p334 = scmp.lt.s32.totalorder %s18, 5
      %p335 = pnand %p333, %p334
      %p336 = pneg %p335
      // Predicated region
      $region41: #{tpu_custom_call.1} parent=5 // pred_check
        _
      $region42: #{tpu_custom_call.1} parent=5 // pred_check_branch
        %338 = sbr.rel (%p335) target = $region44
      $region43: #{tpu_custom_call.1} parent=5 // pred_region
        %s339 = ssub.s32 %s18, 1
        %s340 = smul.u32 %s28, 4
        %s341 = ssub.s32 %s340, 1
        %p342 = scmp.gt.s32.totalorder %s341, 0
        %s343 = scalar_select %p342, %s341, 0
        %s344 = smul.u32 2, %s343
        %p345 = scmp.lt.s32.totalorder %s27, 1
        %s346 = scalar_select %p345, %s27, 1
        %p347 = scmp.lt.s32.totalorder %s344, 15
        %s348 = scalar_select %p347, %s344, 15
        %s349 = smul.addr %s348, 2
        %s350 = smul.addr %s346, 32
        %s351 = sadd.s32 %s349, %s350
        %s352 = smul.addr %s351, 4
        %s353 = scalar_lea.vmem %s0, %s352
        %p354 = pneg %p66
        %p355 = pneg %p63
        %s356 = smul.u32 8, %s28
        %p357 = scmp.lt.s32.totalorder %s27, 1
        %s358 = scalar_select %p357, %s27, 1
        %p359 = scmp.lt.s32.totalorder %s356, 15
        %s360 = scalar_select %p359, %s356, 15
        %s361 = smul.addr %s360, 2
        %s362 = smul.addr %s358, 32
        %s363 = sadd.s32 %s361, %s362
        %s364 = smul.addr %s363, 4
        %s365 = scalar_lea.vmem %s1, %s364
        %p366 = pneg %p94
        %p367 = pneg %p91
        %s368 = sadd.s32 %s28, 1
        %s369 = smul.u32 %s368, 4
        %p370 = scmp.lt.s32.totalorder %s369, 7
        %s371 = scalar_select %p370, %s369, 7
        %s372 = smul.u32 2, %s371
        %p373 = scmp.lt.s32.totalorder %s27, 1
        %s374 = scalar_select %p373, %s27, 1
        %p375 = scmp.lt.s32.totalorder %s372, 15
        %s376 = scalar_select %p375, %s372, 15
        %s377 = smul.addr %s376, 2
        %s378 = smul.addr %s374, 32
        %s379 = sadd.s32 %s377, %s378
        %s380 = smul.addr %s379, 4
        %s381 = scalar_lea.vmem %s2, %s380
        %p382 = pneg %p130
        %p383 = pneg %p127
        %p384 = pneg %p151
        %p385 = pneg %p148
        %p386 = pneg %p172
        %p387 = pneg %p169
        %p388 = pneg %p193
        %p389 = pneg %p190
        %p390 = pneg %p221
        %p391 = pneg %p218
        %s392 = smul.u32 8, %s28
        %p393 = scmp.lt.s32.totalorder %s27, 1
        %s394 = scalar_select %p393, %s27, 1
        %p395 = scmp.lt.s32.totalorder %s392, 15
        %s396 = scalar_select %p395, %s392, 15
        %s397 = smul.addr %s396, 2
        %s398 = smul.addr %s394, 32
        %s399 = sadd.s32 %s397, %s398
        %s400 = smul.addr %s399, 4
        %s401 = scalar_lea.vmem %s6, %s400
        %p402 = pneg %p247
        %p403 = pneg %p244
        %s404 = sand.u32 %s234, 1
        %s405 = scalar_lea.sflag [#allocation5], %s404
        %s406 = sand.u32 %s234, 1
        %s407 = scalar_lea.vmem [#allocation4], %s406
        %s408 = smul.u32 %s28, 4
        %s409 = ssub.s32 %s408, 1
        %p410 = scmp.gt.s32.totalorder %s409, 0
        %s411 = scalar_select %p410, %s409, 0
        %s412 = smul.u32 2, %s411
        %p413 = scmp.lt.s32.totalorder %s27, 1
        %s414 = scalar_select %p413, %s27, 1
        %p415 = scmp.lt.s32.totalorder %s412, 15
        %s416 = scalar_select %p415, %s412, 15
        %s417 = smul.addr %s416, 2
        %s418 = smul.addr %s414, 32
        %s419 = sadd.s32 %s417, %s418
        %s420 = smul.addr %s419, 4
        %s421 = scalar_lea.vmem %s0, %s420
        %s422 = smul.u32 %s28, 4
        %s423 = ssub.s32 %s422, 1
        %p424 = scmp.gt.s32.totalorder %s423, 0
        %s425 = scalar_select %p424, %s423, 0
        %s426 = smul.u32 2, %s425
        %s427 = smul.u32 8, %s28
        %p428 = scmp.lt.s32.totalorder %s27, 1
        %s429 = scalar_select %p428, %s27, 1
        %p430 = scmp.lt.s32.totalorder %s427, 15
        %s431 = scalar_select %p430, %s427, 15
        %s432 = smul.addr %s431, 2
        %s433 = smul.addr %s429, 32
        %s434 = sadd.s32 %s432, %s433
        %s435 = smul.addr %s434, 4
        %s436 = scalar_lea.vmem %s1, %s435
        %s437 = smul.u32 8, %s28
        %s438 = sadd.s32 %s28, 1
        %s439 = smul.u32 %s438, 4
        %p440 = scmp.lt.s32.totalorder %s439, 7
        %s441 = scalar_select %p440, %s439, 7
        %s442 = smul.u32 2, %s441
        %p443 = scmp.lt.s32.totalorder %s27, 1
        %s444 = scalar_select %p443, %s27, 1
        %p445 = scmp.lt.s32.totalorder %s442, 15
        %s446 = scalar_select %p445, %s442, 15
        %s447 = smul.addr %s446, 2
        %s448 = smul.addr %s444, 32
        %s449 = sadd.s32 %s447, %s448
        %s450 = smul.addr %s449, 4
        %s451 = scalar_lea.vmem %s2, %s450
        %s452 = sadd.s32 %s28, 1
        %s453 = smul.u32 %s452, 4
        %p454 = scmp.lt.s32.totalorder %s453, 7
        %s455 = scalar_select %p454, %s453, 7
        %s456 = smul.u32 2, %s455
        %s457 = smul.u32 8, %s28
        %p458 = scmp.lt.s32.totalorder %s27, 1
        %s459 = scalar_select %p458, %s27, 1
        %p460 = scmp.lt.s32.totalorder %s457, 15
        %s461 = scalar_select %p460, %s457, 15
        %s462 = smul.addr %s461, 2
        %s463 = smul.addr %s459, 32
        %s464 = sadd.s32 %s462, %s463
        %s465 = smul.addr %s464, 4
        %s466 = scalar_lea.vmem %s6, %s465
        %s467 = smul.u32 8, %s28
        %v469 = vld [vmem:[%s436] sm:$0xf]
        %v470 = vld [vmem:[%s436 + $0x4] sm:$0xf]
        %v471 = vld [vmem:[%s436 + $0x8] sm:$0xf]
        %v472 = vld [vmem:[%s436 + $0xc] sm:$0xf]
        %v473 = vld [vmem:[%s436 + $0x10] sm:$0xf]
        %v474 = vld [vmem:[%s436 + $0x14] sm:$0xf]
        %v475 = vld [vmem:[%s436 + $0x18] sm:$0xf]
        %v476 = vld [vmem:[%s436 + $0x1c] sm:$0xf]
        %v477 = vld [vmem:[%s436 + $0x20] sm:$0xf]
        %v478 = vld [vmem:[%s436 + $0x24] sm:$0xf]
        %v479 = vld [vmem:[%s436 + $0x28] sm:$0xf]
        %v480 = vld [vmem:[%s436 + $0x2c] sm:$0xf]
        %v481 = vld [vmem:[%s436 + $0x30] sm:$0xf]
        %v482 = vld [vmem:[%s436 + $0x34] sm:$0xf]
        %v483 = vld [vmem:[%s436 + $0x38] sm:$0xf]
        %v484 = vld [vmem:[%s436 + $0x3c] sm:$0xf]
        %s485 = scalar_lea.vmem [#allocation2], 16
        %vm486 = vcmask 60416
        %487 = vst.msk [vmem:[%s485] sm:$0xf] %vm486, %v469
        %488 = vst.msk [vmem:[%s485 + $0x4] sm:$0xf] %vm486, %v470
        %489 = vst.msk [vmem:[%s485 + $0x8] sm:$0xf] %vm486, %v471
        %490 = vst.msk [vmem:[%s485 + $0xc] sm:$0xf] %vm486, %v472
        %491 = vst.msk [vmem:[%s485 + $0x10] sm:$0xf] %vm486, %v473
        %492 = vst.msk [vmem:[%s485 + $0x14] sm:$0xf] %vm486, %v474
        %493 = vst.msk [vmem:[%s485 + $0x18] sm:$0xf] %vm486, %v475
        %494 = vst.msk [vmem:[%s485 + $0x1c] sm:$0xf] %vm486, %v476
        %495 = vst.msk [vmem:[%s485 + $0x20] sm:$0xf] %vm486, %v477
        %496 = vst.msk [vmem:[%s485 + $0x24] sm:$0xf] %vm486, %v478
        %497 = vst.msk [vmem:[%s485 + $0x28] sm:$0xf] %vm486, %v479
        %498 = vst.msk [vmem:[%s485 + $0x2c] sm:$0xf] %vm486, %v480
        %499 = vst.msk [vmem:[%s485 + $0x30] sm:$0xf] %vm486, %v481
        %500 = vst.msk [vmem:[%s485 + $0x34] sm:$0xf] %vm486, %v482
        %501 = vst.msk [vmem:[%s485 + $0x38] sm:$0xf] %vm486, %v483
        %502 = vst.msk [vmem:[%s485 + $0x3c] sm:$0xf] %vm486, %v484
        %v503 = vld [vmem:[%s421] sm:$0xf]
        %v504 = vld [vmem:[%s421 + $0x4] sm:$0xf]
        %v505 = vld [vmem:[%s421 + $0x8] sm:$0xf]
        %v506 = vld [vmem:[%s421 + $0xc] sm:$0xf]
        %507 = vst.msk [vmem:[#allocation2] sm:$0xf] %vm486, %v503
        %508 = vst.msk [vmem:[#allocation2 + $0x4] sm:$0xf] %vm486, %v504
        %509 = vst.msk [vmem:[#allocation2 + $0x8] sm:$0xf] %vm486, %v505
        %510 = vst.msk [vmem:[#allocation2 + $0xc] sm:$0xf] %vm486, %v506
        %v511 = vld [vmem:[%s451] sm:$0xf]
        %v512 = vld [vmem:[%s451 + $0x4] sm:$0xf]
        %v513 = vld [vmem:[%s451 + $0x8] sm:$0xf]
        %v514 = vld [vmem:[%s451 + $0xc] sm:$0xf]
        %s515 = scalar_lea.vmem [#allocation2], 80
        %516 = vst.msk [vmem:[%s515] sm:$0xf] %vm486, %v511
        %517 = vst.msk [vmem:[%s515 + $0x4] sm:$0xf] %vm486, %v512
        %518 = vst.msk [vmem:[%s515 + $0x8] sm:$0xf] %vm486, %v513
        %519 = vst.msk [vmem:[%s515 + $0xc] sm:$0xf] %vm486, %v514
        %p520 = scmp.eq.s32.totalorder %s28, 0
        // Predicated region
        $region45: #{tpu_custom_call.1} parent=43 // pred_check
          %p521 = pneg %p520
        $region46: #{tpu_custom_call.1} parent=43 // pred_check_branch
          %523 = sbr.rel (%p521) target = $region48
        $region47: #{tpu_custom_call.1} parent=43 // pred_region
          %524 = vst.msk [vmem:[#allocation2] sm:$0xf] %vm486, 0
          %525 = vst.msk [vmem:[#allocation2 + $0x4] sm:$0xf] %vm486, 0
          %526 = vst.msk [vmem:[#allocation2 + $0x8] sm:$0xf] %vm486, 0
          %527 = vst.msk [vmem:[#allocation2 + $0xc] sm:$0xf] %vm486, 0
        $region48: #{tpu_custom_call.1} parent=43 // pred_fallthru
          _
        %p528 = scmp.eq.s32.totalorder %s28, 1
        // Predicated region
        $region49: #{tpu_custom_call.1} parent=43 // pred_check
          %p529 = pneg %p528
        $region50: #{tpu_custom_call.1} parent=43 // pred_check_branch
          %531 = sbr.rel (%p529) target = $region52
        $region51: #{tpu_custom_call.1} parent=43 // pred_region
          %532 = vst.msk [vmem:[%s515] sm:$0xf] %vm486, 0
          %533 = vst.msk [vmem:[%s515 + $0x4] sm:$0xf] %vm486, 0
          %534 = vst.msk [vmem:[%s515 + $0x8] sm:$0xf] %vm486, 0
          %535 = vst.msk [vmem:[%s515 + $0xc] sm:$0xf] %vm486, 0
        $region52: #{tpu_custom_call.1} parent=43 // pred_fallthru
          _
        %v536 = vlaneseq
        %v537 = vshrl.u32 %v536, 7
        %v538 = vadd.s32 %v537, 8
        %v539 = vld [vmem:[#allocation2] sm:$0xf]
        %v540 = vld [vmem:[#allocation2 + $0x4] sm:$0xf]
        %v541 = vld [vmem:[#allocation2 + $0x8] sm:$0xf]
        %v542 = vld [vmem:[#allocation2 + $0xc] sm:$0xf]
        %v543 = vld [vmem:[#allocation2 + $0x10] sm:$0xf]
        %v544 = vld [vmem:[#allocation2 + $0x14] sm:$0xf]
        %v545 = vld [vmem:[#allocation2 + $0x18] sm:$0xf]
        %v546 = vld [vmem:[#allocation2 + $0x1c] sm:$0xf]
        %v547 = vld [vmem:[#allocation2 + $0x20] sm:$0xf]
        %v548 = vld [vmem:[#allocation2 + $0x24] sm:$0xf]
        %v549 = vld [vmem:[#allocation2 + $0x28] sm:$0xf]
        %v550 = vld [vmem:[#allocation2 + $0x2c] sm:$0xf]
        %v551 = vld [vmem:[#allocation2 + $0x30] sm:$0xf]
        %v552 = vld [vmem:[#allocation2 + $0x34] sm:$0xf]
        %v553 = vld [vmem:[#allocation2 + $0x38] sm:$0xf]
        %v554 = vld [vmem:[#allocation2 + $0x3c] sm:$0xf]
        %v555 = vld [vmem:[#allocation2 + $0x40] sm:$0xf]
        %v556 = vld [vmem:[#allocation2 + $0x44] sm:$0xf]
        %v557 = vld [vmem:[#allocation2 + $0x48] sm:$0xf]
        %v558 = vld [vmem:[#allocation2 + $0x4c] sm:$0xf]
        %v559 = vld [vmem:[%s3] sm:$0xf]
        %s560 = scalar_lea.vmem [#allocation2], 8
        %v561 = vld [vmem:[%s560] sm:$0xf]
        %v562 = vld [vmem:[%s560 + $0x4] sm:$0xf]
        %v563 = vld [vmem:[%s560 + $0x8] sm:$0xf]
        %v564 = vld [vmem:[%s560 + $0xc] sm:$0xf]
        %v565 = vld [vmem:[%s560 + $0x10] sm:$0xf]
        %v566 = vld [vmem:[%s560 + $0x14] sm:$0xf]
        %v567 = vld [vmem:[%s560 + $0x18] sm:$0xf]
        %v568 = vld [vmem:[%s560 + $0x1c] sm:$0xf]
        %v569 = vld [vmem:[%s560 + $0x20] sm:$0xf]
        %v570 = vld [vmem:[%s560 + $0x24] sm:$0xf]
        %v571 = vld [vmem:[%s560 + $0x28] sm:$0xf]
        %v572 = vld [vmem:[%s560 + $0x2c] sm:$0xf]
        %v573 = vld [vmem:[%s560 + $0x30] sm:$0xf]
        %v574 = vld [vmem:[%s560 + $0x34] sm:$0xf]
        %v575 = vld [vmem:[%s560 + $0x38] sm:$0xf]
        %v576 = vld [vmem:[%s560 + $0x3c] sm:$0xf]
        %v577 = vld [vmem:[%s560 + $0x40] sm:$0xf]
        %v578 = vld [vmem:[%s560 + $0x44] sm:$0xf]
        %v579 = vld [vmem:[%s560 + $0x48] sm:$0xf]
        %v580 = vld [vmem:[%s560 + $0x4c] sm:$0xf]
        %s581 = scalar_lea.vmem %s3, 12
        %v582 = vld [vmem:[%s581] sm:$0xf]
        %v603 = vunpack.c.l.b16 %v561
        %v604 = vunpack.c.l.b16 %v562
        %v605 = vunpack.c.l.b16 %v563
        %v606 = vunpack.c.l.b16 %v564
        %v607 = vunpack.c.l.b16 %v565
        %v608 = vunpack.c.l.b16 %v566
        %v609 = vunpack.c.l.b16 %v567
        %v610 = vunpack.c.l.b16 %v568
        %v611 = vunpack.c.l.b16 %v569
        %v612 = vunpack.c.l.b16 %v570
        %v613 = vunpack.c.l.b16 %v571
        %v614 = vunpack.c.l.b16 %v572
        %v615 = vunpack.c.l.b16 %v573
        %v616 = vunpack.c.l.b16 %v574
        %v617 = vunpack.c.l.b16 %v575
        %v618 = vunpack.c.l.b16 %v576
        %v619 = vunpack.c.l.b16 %v577
        %v620 = vunpack.c.l.b16 %v578
        %v621 = vunpack.c.l.b16 %v579
        %v622 = vunpack.c.l.b16 %v580
        %v623 = vpack.c.b16 %v604, %v603
        %v624 = vpack.c.b16 %v606, %v605
        %v625 = vpack.c.b16 %v608, %v607
        %v626 = vpack.c.b16 %v610, %v609
        %v627 = vpack.c.b16 %v612, %v611
        %v628 = vpack.c.b16 %v614, %v613
        %v629 = vpack.c.b16 %v616, %v615
        %v630 = vpack.c.b16 %v618, %v617
        %v631 = vpack.c.b16 %v620, %v619
        %v632 = vpack.c.b16 %v622, %v621
        %vm633 = vcmask 64512
        %v635 = vsel %vm633, %v623, 0
        %v638 = vsel %vm633, %v624, 0
        %v641 = vsel %vm633, %v625, 0
        %v644 = vsel %vm633, %v626, 0
        %v647 = vsel %vm633, %v627, 0
        %v650 = vsel %vm633, %v628, 0
        %v653 = vsel %vm633, %v629, 0
        %v656 = vsel %vm633, %v630, 0
        %v659 = vsel %vm633, %v631, 0
        %v662 = vsel %vm633, %v632, 0
        %vm664 = vcmask 1043456
        %v666 = vsel %vm664, %v582, 0
        %668 = vmatprep.subr.bf16.mxu0 0
        %669 = vmatpush1.bf16.msra.mxu0 0
        %670 = vmatprep.subr.bf16.mxu0 0
        %671 = vmatpush1.bf16.msra.mxu0 0
        %672 = vmatprep.subr.bf16.mxu0 0
        %673 = vmatpush1.bf16.msra.mxu0 0
        %674 = vmatprep.subr.bf16.mxu0 0
        %675 = vmatpush1.bf16.msra.mxu0 0
        %676 = vmatprep.subr.bf16.mxu0 0
        %677 = vmatpush1.bf16.msra.mxu0 0
        %678 = vmatprep.subr.bf16.mxu0 0
        %679 = vmatpush1.bf16.msra.mxu0 0
        %680 = vmatprep.subr.bf16.mxu0 0
        %681 = vmatpush1.bf16.msra.mxu0 0
        %682 = vmatprep.subr.bf16.mxu0 0
        %683 = vmatpush1.bf16.msra.mxu0 %v666
        %684 = vmatprep.subr.bf16.mxu0 0
        %685 = vmatpush2.bf16.msra.mxu0 0
        %686 = vmatprep.subr.bf16.mxu0 0
        %687 = vmatpush2.bf16.msra.mxu0 0
        %688 = vmatprep.subr.bf16.mxu0 0
        %689 = vmatpush2.bf16.msra.mxu0 0
        %690 = vmatprep.subr.bf16.mxu0 0
        %691 = vmatpush2.bf16.msra.mxu0 0
        %692 = vmatprep.subr.bf16.mxu0 0
        %693 = vmatpush2.bf16.msra.mxu0 0
        %694 = vmatprep.subr.bf16.mxu0 0
        %695 = vmatpush2.bf16.msra.mxu0 0
        %696 = vmatprep.subr.bf16.mxu0 0
        %697 = vmatpush2.bf16.msra.mxu0 0
        %698 = vmatprep.subr.bf16.mxu0 0
        %699 = vmatpush2.bf16.msra.mxu0 0
        %700 = vmatprep.mubr.bf16.mxu0 0
        %701 = vmatmul.mubr.bf16.gmra.mxu0 %v635
        %v702 = vpop.f32.mrf.mxu0
        %v703 = vadd.f32 0.0, %v702
        %v704 = vpop.f32.mrf.mxu0
        %v705 = vpop.f32.mrf.mxu0
        %v706 = vadd.f32 0.0, %v705
        %v707 = vpop.f32.mrf.mxu0
        %708 = vmatprep.mubr.bf16.mxu0 0
        %709 = vmatmul.mubr.bf16.gmra.mxu0 %v638
        %v710 = vpop.f32.mrf.mxu0
        %v711 = vadd.f32 0.0, %v710
        %v712 = vpop.f32.mrf.mxu0
        %v713 = vpop.f32.mrf.mxu0
        %v714 = vadd.f32 0.0, %v713
        %v715 = vpop.f32.mrf.mxu0
        %716 = vmatprep.mubr.bf16.mxu0 0
        %717 = vmatmul.mubr.bf16.gmra.mxu0 %v641
        %v718 = vpop.f32.mrf.mxu0
        %v719 = vadd.f32 0.0, %v718
        %v720 = vpop.f32.mrf.mxu0
        %v721 = vpop.f32.mrf.mxu0
        %v722 = vadd.f32 0.0, %v721
        %v723 = vpop.f32.mrf.mxu0
        %724 = vmatprep.mubr.bf16.mxu0 0
        %725 = vmatmul.mubr.bf16.gmra.mxu0 %v644
        %v726 = vpop.f32.mrf.mxu0
        %v727 = vadd.f32 0.0, %v726
        %v728 = vpop.f32.mrf.mxu0
        %v729 = vpop.f32.mrf.mxu0
        %v730 = vadd.f32 0.0, %v729
        %v731 = vpop.f32.mrf.mxu0
        %732 = vmatprep.mubr.bf16.mxu0 0
        %733 = vmatmul.mubr.bf16.gmra.mxu0 %v647
        %v734 = vpop.f32.mrf.mxu0
        %v735 = vadd.f32 0.0, %v734
        %v736 = vpop.f32.mrf.mxu0
        %v737 = vpop.f32.mrf.mxu0
        %v738 = vadd.f32 0.0, %v737
        %v739 = vpop.f32.mrf.mxu0
        %740 = vmatprep.mubr.bf16.mxu0 0
        %741 = vmatmul.mubr.bf16.gmra.mxu0 %v650
        %v742 = vpop.f32.mrf.mxu0
        %v743 = vadd.f32 0.0, %v742
        %v744 = vpop.f32.mrf.mxu0
        %v745 = vpop.f32.mrf.mxu0
        %v746 = vadd.f32 0.0, %v745
        %v747 = vpop.f32.mrf.mxu0
        %748 = vmatprep.mubr.bf16.mxu0 0
        %749 = vmatmul.mubr.bf16.gmra.mxu0 %v653
        %v750 = vpop.f32.mrf.mxu0
        %v751 = vadd.f32 0.0, %v750
        %v752 = vpop.f32.mrf.mxu0
        %v753 = vpop.f32.mrf.mxu0
        %v754 = vadd.f32 0.0, %v753
        %v755 = vpop.f32.mrf.mxu0
        %756 = vmatprep.mubr.bf16.mxu0 0
        %757 = vmatmul.mubr.bf16.gmra.mxu0 %v656
        %v758 = vpop.f32.mrf.mxu0
        %v759 = vadd.f32 0.0, %v758
        %v760 = vpop.f32.mrf.mxu0
        %v761 = vpop.f32.mrf.mxu0
        %v762 = vadd.f32 0.0, %v761
        %v763 = vpop.f32.mrf.mxu0
        %764 = vmatprep.mubr.bf16.mxu0 0
        %765 = vmatmul.mubr.bf16.gmra.mxu0 %v659
        %v766 = vpop.f32.mrf.mxu0
        %v767 = vadd.f32 0.0, %v766
        %v768 = vpop.f32.mrf.mxu0
        %v769 = vpop.f32.mrf.mxu0
        %v770 = vadd.f32 0.0, %v769
        %v771 = vpop.f32.mrf.mxu0
        %772 = vmatprep.mubr.bf16.mxu0 0
        %773 = vmatmul.mubr.bf16.gmra.mxu0 %v662
        %v774 = vpop.f32.mrf.mxu0
        %v775 = vadd.f32 0.0, %v774
        %v776 = vpop.f32.mrf.mxu0
        %v777 = vpop.f32.mrf.mxu0
        %v778 = vadd.f32 0.0, %v777
        %v779 = vpop.f32.mrf.mxu0
        %780 = vdwg.mxu0
        %v801 = vunpack.c.l.b16 %v539
        %v802 = vunpack.c.l.b16 %v540
        %v803 = vunpack.c.l.b16 %v541
        %v804 = vunpack.c.l.b16 %v542
        %v805 = vunpack.c.l.b16 %v543
        %v806 = vunpack.c.l.b16 %v544
        %v807 = vunpack.c.l.b16 %v545
        %v808 = vunpack.c.l.b16 %v546
        %v809 = vunpack.c.l.b16 %v547
        %v810 = vunpack.c.l.b16 %v548
        %v811 = vunpack.c.l.b16 %v549
        %v812 = vunpack.c.l.b16 %v550
        %v813 = vunpack.c.l.b16 %v551
        %v814 = vunpack.c.l.b16 %v552
        %v815 = vunpack.c.l.b16 %v553
        %v816 = vunpack.c.l.b16 %v554
        %v817 = vunpack.c.l.b16 %v555
        %v818 = vunpack.c.l.b16 %v556
        %v819 = vunpack.c.l.b16 %v557
        %v820 = vunpack.c.l.b16 %v558
        %v821 = vpack.c.b16 %v802, %v801
        %v822 = vpack.c.b16 %v804, %v803
        %v823 = vpack.c.b16 %v806, %v805
        %v824 = vpack.c.b16 %v808, %v807
        %v825 = vpack.c.b16 %v810, %v809
        %v826 = vpack.c.b16 %v812, %v811
        %v827 = vpack.c.b16 %v814, %v813
        %v828 = vpack.c.b16 %v816, %v815
        %v829 = vpack.c.b16 %v818, %v817
        %v830 = vpack.c.b16 %v820, %v819
        %v832 = vsel %vm633, %v821, 0
        %v835 = vsel %vm633, %v822, 0
        %v838 = vsel %vm633, %v823, 0
        %v841 = vsel %vm633, %v824, 0
        %v844 = vsel %vm633, %v825, 0
        %v847 = vsel %vm633, %v826, 0
        %v850 = vsel %vm633, %v827, 0
        %v853 = vsel %vm633, %v828, 0
        %v856 = vsel %vm633, %v829, 0
        %v859 = vsel %vm633, %v830, 0
        %v862 = vsel %vm664, %v559, 0
        %864 = vmatprep.subr.bf16.mxu0 0
        %865 = vmatpush1.bf16.msra.mxu0 0
        %866 = vmatprep.subr.bf16.mxu0 0
        %867 = vmatpush1.bf16.msra.mxu0 0
        %868 = vmatprep.subr.bf16.mxu0 0
        %869 = vmatpush1.bf16.msra.mxu0 0
        %870 = vmatprep.subr.bf16.mxu0 0
        %871 = vmatpush1.bf16.msra.mxu0 0
        %872 = vmatprep.subr.bf16.mxu0 0
        %873 = vmatpush1.bf16.msra.mxu0 0
        %874 = vmatprep.subr.bf16.mxu0 0
        %875 = vmatpush1.bf16.msra.mxu0 0
        %876 = vmatprep.subr.bf16.mxu0 0
        %877 = vmatpush1.bf16.msra.mxu0 0
        %878 = vmatprep.subr.bf16.mxu0 0
        %879 = vmatpush1.bf16.msra.mxu0 %v862
        %880 = vmatprep.subr.bf16.mxu0 0
        %881 = vmatpush2.bf16.msra.mxu0 0
        %882 = vmatprep.subr.bf16.mxu0 0
        %883 = vmatpush2.bf16.msra.mxu0 0
        %884 = vmatprep.subr.bf16.mxu0 0
        %885 = vmatpush2.bf16.msra.mxu0 0
        %886 = vmatprep.subr.bf16.mxu0 0
        %887 = vmatpush2.bf16.msra.mxu0 0
        %888 = vmatprep.subr.bf16.mxu0 0
        %889 = vmatpush2.bf16.msra.mxu0 0
        %890 = vmatprep.subr.bf16.mxu0 0
        %891 = vmatpush2.bf16.msra.mxu0 0
        %892 = vmatprep.subr.bf16.mxu0 0
        %893 = vmatpush2.bf16.msra.mxu0 0
        %894 = vmatprep.subr.bf16.mxu0 0
        %895 = vmatpush2.bf16.msra.mxu0 0
        %896 = vmatprep.mubr.bf16.mxu0 0
        %897 = vmatmul.mubr.bf16.gmra.mxu0 %v832
        %v898 = vpop.f32.mrf.mxu0
        %v899 = vadd.f32 %v703, %v898
        %v900 = vpop.f32.mrf.mxu0
        %v901 = vpop.f32.mrf.mxu0
        %v902 = vadd.f32 %v706, %v901
        %v903 = vpop.f32.mrf.mxu0
        %904 = vmatprep.mubr.bf16.mxu0 0
        %905 = vmatmul.mubr.bf16.gmra.mxu0 %v835
        %v906 = vpop.f32.mrf.mxu0
        %v907 = vadd.f32 %v711, %v906
        %v908 = vpop.f32.mrf.mxu0
        %v909 = vpop.f32.mrf.mxu0
        %v910 = vadd.f32 %v714, %v909
        %v911 = vpop.f32.mrf.mxu0
        %912 = vmatprep.mubr.bf16.mxu0 0
        %913 = vmatmul.mubr.bf16.gmra.mxu0 %v838
        %v914 = vpop.f32.mrf.mxu0
        %v915 = vadd.f32 %v719, %v914
        %v916 = vpop.f32.mrf.mxu0
        %v917 = vpop.f32.mrf.mxu0
        %v918 = vadd.f32 %v722, %v917
        %v919 = vpop.f32.mrf.mxu0
        %920 = vmatprep.mubr.bf16.mxu0 0
        %921 = vmatmul.mubr.bf16.gmra.mxu0 %v841
        %v922 = vpop.f32.mrf.mxu0
        %v923 = vadd.f32 %v727, %v922
        %v924 = vpop.f32.mrf.mxu0
        %v925 = vpop.f32.mrf.mxu0
        %v926 = vadd.f32 %v730, %v925
        %v927 = vpop.f32.mrf.mxu0
        %928 = vmatprep.mubr.bf16.mxu0 0
        %929 = vmatmul.mubr.bf16.gmra.mxu0 %v844
        %v930 = vpop.f32.mrf.mxu0
        %v931 = vadd.f32 %v735, %v930
        %v932 = vpop.f32.mrf.mxu0
        %v933 = vpop.f32.mrf.mxu0
        %v934 = vadd.f32 %v738, %v933
        %v935 = vpop.f32.mrf.mxu0
        %936 = vmatprep.mubr.bf16.mxu0 0
        %937 = vmatmul.mubr.bf16.gmra.mxu0 %v847
        %v938 = vpop.f32.mrf.mxu0
        %v939 = vadd.f32 %v743, %v938
        %v940 = vpop.f32.mrf.mxu0
        %v941 = vpop.f32.mrf.mxu0
        %v942 = vadd.f32 %v746, %v941
        %v943 = vpop.f32.mrf.mxu0
        %944 = vmatprep.mubr.bf16.mxu0 0
        %945 = vmatmul.mubr.bf16.gmra.mxu0 %v850
        %v946 = vpop.f32.mrf.mxu0
        %v947 = vadd.f32 %v751, %v946
        %v948 = vpop.f32.mrf.mxu0
        %v949 = vpop.f32.mrf.mxu0
        %v950 = vadd.f32 %v754, %v949
        %v951 = vpop.f32.mrf.mxu0
        %952 = vmatprep.mubr.bf16.mxu0 0
        %953 = vmatmul.mubr.bf16.gmra.mxu0 %v853
        %v954 = vpop.f32.mrf.mxu0
        %v955 = vadd.f32 %v759, %v954
        %v956 = vpop.f32.mrf.mxu0
        %v957 = vpop.f32.mrf.mxu0
        %v958 = vadd.f32 %v762, %v957
        %v959 = vpop.f32.mrf.mxu0
        %960 = vmatprep.mubr.bf16.mxu0 0
        %961 = vmatmul.mubr.bf16.gmra.mxu0 %v856
        %v962 = vpop.f32.mrf.mxu0
        %v963 = vadd.f32 %v767, %v962
        %v964 = vpop.f32.mrf.mxu0
        %v965 = vpop.f32.mrf.mxu0
        %v966 = vadd.f32 %v770, %v965
        %v967 = vpop.f32.mrf.mxu0
        %968 = vmatprep.mubr.bf16.mxu0 0
        %969 = vmatmul.mubr.bf16.gmra.mxu0 %v859
        %v970 = vpop.f32.mrf.mxu0
        %v971 = vadd.f32 %v775, %v970
        %v972 = vpop.f32.mrf.mxu0
        %v973 = vpop.f32.mrf.mxu0
        %v974 = vadd.f32 %v778, %v973
        %v975 = vpop.f32.mrf.mxu0
        %976 = vdwg.mxu0
        %v977 = vld [vmem:[%s485] sm:$0xf]
        %v978 = vld [vmem:[%s485 + $0x4] sm:$0xf]
        %v979 = vld [vmem:[%s485 + $0x8] sm:$0xf]
        %v980 = vld [vmem:[%s485 + $0xc] sm:$0xf]
        %v981 = vld [vmem:[%s485 + $0x10] sm:$0xf]
        %v982 = vld [vmem:[%s485 + $0x14] sm:$0xf]
        %v983 = vld [vmem:[%s485 + $0x18] sm:$0xf]
        %v984 = vld [vmem:[%s485 + $0x1c] sm:$0xf]
        %v985 = vld [vmem:[%s485 + $0x20] sm:$0xf]
        %v986 = vld [vmem:[%s485 + $0x24] sm:$0xf]
        %v987 = vld [vmem:[%s485 + $0x28] sm:$0xf]
        %v988 = vld [vmem:[%s485 + $0x2c] sm:$0xf]
        %v989 = vld [vmem:[%s485 + $0x30] sm:$0xf]
        %v990 = vld [vmem:[%s485 + $0x34] sm:$0xf]
        %v991 = vld [vmem:[%s485 + $0x38] sm:$0xf]
        %v992 = vld [vmem:[%s485 + $0x3c] sm:$0xf]
        %v993 = vld [vmem:[%s485 + $0x40] sm:$0xf]
        %v994 = vld [vmem:[%s485 + $0x44] sm:$0xf]
        %v995 = vld [vmem:[%s485 + $0x48] sm:$0xf]
        %v996 = vld [vmem:[%s485 + $0x4c] sm:$0xf]
        %s997 = scalar_lea.vmem %s3, 24
        %v998 = vld [vmem:[%s997] sm:$0xf]
        %v1019 = vunpack.c.l.b16 %v977
        %v1020 = vunpack.c.l.b16 %v978
        %v1021 = vunpack.c.l.b16 %v979
        %v1022 = vunpack.c.l.b16 %v980
        %v1023 = vunpack.c.l.b16 %v981
        %v1024 = vunpack.c.l.b16 %v982
        %v1025 = vunpack.c.l.b16 %v983
        %v1026 = vunpack.c.l.b16 %v984
        %v1027 = vunpack.c.l.b16 %v985
        %v1028 = vunpack.c.l.b16 %v986
        %v1029 = vunpack.c.l.b16 %v987
        %v1030 = vunpack.c.l.b16 %v988
        %v1031 = vunpack.c.l.b16 %v989
        %v1032 = vunpack.c.l.b16 %v990
        %v1033 = vunpack.c.l.b16 %v991
        %v1034 = vunpack.c.l.b16 %v992
        %v1035 = vunpack.c.l.b16 %v993
        %v1036 = vunpack.c.l.b16 %v994
        %v1037 = vunpack.c.l.b16 %v995
        %v1038 = vunpack.c.l.b16 %v996
        %v1039 = vpack.c.b16 %v1020, %v1019
        %v1040 = vpack.c.b16 %v1022, %v1021
        %v1041 = vpack.c.b16 %v1024, %v1023
        %v1042 = vpack.c.b16 %v1026, %v1025
        %v1043 = vpack.c.b16 %v1028, %v1027
        %v1044 = vpack.c.b16 %v1030, %v1029
        %v1045 = vpack.c.b16 %v1032, %v1031
        %v1046 = vpack.c.b16 %v1034, %v1033
        %v1047 = vpack.c.b16 %v1036, %v1035
        %v1048 = vpack.c.b16 %v1038, %v1037
        %v1050 = vsel %vm633, %v1039, 0
        %v1053 = vsel %vm633, %v1040, 0
        %v1056 = vsel %vm633, %v1041, 0
        %v1059 = vsel %vm633, %v1042, 0
        %v1062 = vsel %vm633, %v1043, 0
        %v1065 = vsel %vm633, %v1044, 0
        %v1068 = vsel %vm633, %v1045, 0
        %v1071 = vsel %vm633, %v1046, 0
        %v1074 = vsel %vm633, %v1047, 0
        %v1077 = vsel %vm633, %v1048, 0
        %v1080 = vsel %vm664, %v998, 0
        %1082 = vmatprep.subr.bf16.mxu0 0
        %1083 = vmatpush1.bf16.msra.mxu0 0
        %1084 = vmatprep.subr.bf16.mxu0 0
        %1085 = vmatpush1.bf16.msra.mxu0 0
        %1086 = vmatprep.subr.bf16.mxu0 0
        %1087 = vmatpush1.bf16.msra.mxu0 0
        %1088 = vmatprep.subr.bf16.mxu0 0
        %1089 = vmatpush1.bf16.msra.mxu0 0
        %1090 = vmatprep.subr.bf16.mxu0 0
        %1091 = vmatpush1.bf16.msra.mxu0 0
        %1092 = vmatprep.subr.bf16.mxu0 0
        %1093 = vmatpush1.bf16.msra.mxu0 0
        %1094 = vmatprep.subr.bf16.mxu0 0
        %1095 = vmatpush1.bf16.msra.mxu0 0
        %1096 = vmatprep.subr.bf16.mxu0 0
        %1097 = vmatpush1.bf16.msra.mxu0 %v1080
        %1098 = vmatprep.subr.bf16.mxu0 0
        %1099 = vmatpush2.bf16.msra.mxu0 0
        %1100 = vmatprep.subr.bf16.mxu0 0
        %1101 = vmatpush2.bf16.msra.mxu0 0
        %1102 = vmatprep.subr.bf16.mxu0 0
        %1103 = vmatpush2.bf16.msra.mxu0 0
        %1104 = vmatprep.subr.bf16.mxu0 0
        %1105 = vmatpush2.bf16.msra.mxu0 0
        %1106 = vmatprep.subr.bf16.mxu0 0
        %1107 = vmatpush2.bf16.msra.mxu0 0
        %1108 = vmatprep.subr.bf16.mxu0 0
        %1109 = vmatpush2.bf16.msra.mxu0 0
        %1110 = vmatprep.subr.bf16.mxu0 0
        %1111 = vmatpush2.bf16.msra.mxu0 0
        %1112 = vmatprep.subr.bf16.mxu0 0
        %1113 = vmatpush2.bf16.msra.mxu0 0
        %1114 = vmatprep.mubr.bf16.mxu0 0
        %1115 = vmatmul.mubr.bf16.gmra.mxu0 %v1050
        %v1116 = vpop.f32.mrf.mxu0
        %v1117 = vadd.f32 0.0, %v1116
        %v1118 = vpop.f32.mrf.mxu0
        %v1119 = vpop.f32.mrf.mxu0
        %v1120 = vadd.f32 0.0, %v1119
        %v1121 = vpop.f32.mrf.mxu0
        %1122 = vmatprep.mubr.bf16.mxu0 0
        %1123 = vmatmul.mubr.bf16.gmra.mxu0 %v1053
        %v1124 = vpop.f32.mrf.mxu0
        %v1125 = vadd.f32 0.0, %v1124
        %v1126 = vpop.f32.mrf.mxu0
        %v1127 = vpop.f32.mrf.mxu0
        %v1128 = vadd.f32 0.0, %v1127
        %v1129 = vpop.f32.mrf.mxu0
        %1130 = vmatprep.mubr.bf16.mxu0 0
        %1131 = vmatmul.mubr.bf16.gmra.mxu0 %v1056
        %v1132 = vpop.f32.mrf.mxu0
        %v1133 = vadd.f32 0.0, %v1132
        %v1134 = vpop.f32.mrf.mxu0
        %v1135 = vpop.f32.mrf.mxu0
        %v1136 = vadd.f32 0.0, %v1135
        %v1137 = vpop.f32.mrf.mxu0
        %1138 = vmatprep.mubr.bf16.mxu0 0
        %1139 = vmatmul.mubr.bf16.gmra.mxu0 %v1059
        %v1140 = vpop.f32.mrf.mxu0
        %v1141 = vadd.f32 0.0, %v1140
        %v1142 = vpop.f32.mrf.mxu0
        %v1143 = vpop.f32.mrf.mxu0
        %v1144 = vadd.f32 0.0, %v1143
        %v1145 = vpop.f32.mrf.mxu0
        %1146 = vmatprep.mubr.bf16.mxu0 0
        %1147 = vmatmul.mubr.bf16.gmra.mxu0 %v1062
        %v1148 = vpop.f32.mrf.mxu0
        %v1149 = vadd.f32 0.0, %v1148
        %v1150 = vpop.f32.mrf.mxu0
        %v1151 = vpop.f32.mrf.mxu0
        %v1152 = vadd.f32 0.0, %v1151
        %v1153 = vpop.f32.mrf.mxu0
        %1154 = vmatprep.mubr.bf16.mxu0 0
        %1155 = vmatmul.mubr.bf16.gmra.mxu0 %v1065
        %v1156 = vpop.f32.mrf.mxu0
        %v1157 = vadd.f32 0.0, %v1156
        %v1158 = vpop.f32.mrf.mxu0
        %v1159 = vpop.f32.mrf.mxu0
        %v1160 = vadd.f32 0.0, %v1159
        %v1161 = vpop.f32.mrf.mxu0
        %1162 = vmatprep.mubr.bf16.mxu0 0
        %1163 = vmatmul.mubr.bf16.gmra.mxu0 %v1068
        %v1164 = vpop.f32.mrf.mxu0
        %v1165 = vadd.f32 0.0, %v1164
        %v1166 = vpop.f32.mrf.mxu0
        %v1167 = vpop.f32.mrf.mxu0
        %v1168 = vadd.f32 0.0, %v1167
        %v1169 = vpop.f32.mrf.mxu0
        %1170 = vmatprep.mubr.bf16.mxu0 0
        %1171 = vmatmul.mubr.bf16.gmra.mxu0 %v1071
        %v1172 = vpop.f32.mrf.mxu0
        %v1173 = vadd.f32 0.0, %v1172
        %v1174 = vpop.f32.mrf.mxu0
        %v1175 = vpop.f32.mrf.mxu0
        %v1176 = vadd.f32 0.0, %v1175
        %v1177 = vpop.f32.mrf.mxu0
        %1178 = vmatprep.mubr.bf16.mxu0 0
        %1179 = vmatmul.mubr.bf16.gmra.mxu0 %v1074
        %v1180 = vpop.f32.mrf.mxu0
        %v1181 = vadd.f32 0.0, %v1180
        %v1182 = vpop.f32.mrf.mxu0
        %v1183 = vpop.f32.mrf.mxu0
        %v1184 = vadd.f32 0.0, %v1183
        %v1185 = vpop.f32.mrf.mxu0
        %1186 = vmatprep.mubr.bf16.mxu0 0
        %1187 = vmatmul.mubr.bf16.gmra.mxu0 %v1077
        %v1188 = vpop.f32.mrf.mxu0
        %v1189 = vadd.f32 0.0, %v1188
        %v1190 = vpop.f32.mrf.mxu0
        %v1191 = vpop.f32.mrf.mxu0
        %v1192 = vadd.f32 0.0, %v1191
        %v1193 = vpop.f32.mrf.mxu0
        %1194 = vdwg.mxu0
        %v1195 = vadd.f32 %v899, %v1117
        %v1196 = vadd.f32 %v902, %v1120
        %v1197 = vadd.f32 %v907, %v1125
        %v1198 = vadd.f32 %v910, %v1128
        %v1199 = vadd.f32 %v915, %v1133
        %v1200 = vadd.f32 %v918, %v1136
        %v1201 = vadd.f32 %v923, %v1141
        %v1202 = vadd.f32 %v926, %v1144
        %v1203 = vadd.f32 %v931, %v1149
        %v1204 = vadd.f32 %v934, %v1152
        %v1205 = vadd.f32 %v939, %v1157
        %v1206 = vadd.f32 %v942, %v1160
        %v1207 = vadd.f32 %v947, %v1165
        %v1208 = vadd.f32 %v950, %v1168
        %v1209 = vadd.f32 %v955, %v1173
        %v1210 = vadd.f32 %v958, %v1176
        %v1211 = vadd.f32 %v963, %v1181
        %v1212 = vadd.f32 %v966, %v1184
        %v1213 = vadd.f32 %v971, %v1189
        %v1214 = vadd.f32 %v974, %v1192
        %v1215 = vrot.slane %v1195, 7
        %v1216 = vrot.slane %v1196, 7
        %v1217 = vrot.slane %v1197, 7
        %v1218 = vrot.slane %v1198, 7
        %v1219 = vrot.slane %v1199, 7
        %v1220 = vrot.slane %v1200, 7
        %v1221 = vrot.slane %v1201, 7
        %v1222 = vrot.slane %v1202, 7
        %v1223 = vrot.slane %v1203, 7
        %v1224 = vrot.slane %v1204, 7
        %v1225 = vrot.slane %v1205, 7
        %v1226 = vrot.slane %v1206, 7
        %v1227 = vrot.slane %v1207, 7
        %v1228 = vrot.slane %v1208, 7
        %v1229 = vrot.slane %v1209, 7
        %v1230 = vrot.slane %v1210, 7
        %v1231 = vrot.slane %v1211, 7
        %v1232 = vrot.slane %v1212, 7
        %v1233 = vrot.slane %v1213, 7
        %v1234 = vrot.slane %v1214, 7
        %vm1235 = vcmp.lt.s32.totalorder %v537, 1
        %v1236 = vsel %vm1235, %v1233, %v1234
        %v1237 = vsel %vm1235, %v1232, %v1233
        %v1238 = vsel %vm1235, %v1231, %v1232
        %v1239 = vsel %vm1235, %v1230, %v1231
        %v1240 = vsel %vm1235, %v1229, %v1230
        %v1241 = vsel %vm1235, %v1228, %v1229
        %v1242 = vsel %vm1235, %v1227, %v1228
        %v1243 = vsel %vm1235, %v1226, %v1227
        %v1244 = vsel %vm1235, %v1225, %v1226
        %v1245 = vsel %vm1235, %v1224, %v1225
        %v1246 = vsel %vm1235, %v1223, %v1224
        %v1247 = vsel %vm1235, %v1222, %v1223
        %v1248 = vsel %vm1235, %v1221, %v1222
        %v1249 = vsel %vm1235, %v1220, %v1221
        %v1250 = vsel %vm1235, %v1219, %v1220
        %v1251 = vsel %vm1235, %v1218, %v1219
        %v1252 = vsel %vm1235, %v1217, %v1218
        %v1253 = vsel %vm1235, %v1216, %v1217
        %v1254 = vsel %vm1235, %v1215, %v1216
        %v1255 = vsel %vm1235, %v1234, %v1215
        %vm1256 = vcmp.eq.s32.totalorder %v537, 0
        %vm1257 = vcmp.eq.s32.totalorder %v538, 0
        %v1258 = vsel %vm1256, 0.0, %v1255
        %v1259 = vsel %vm1257, 0.0, %v1254
        %v1260 = vsel %vm1256, 0.0, %v1253
        %v1261 = vsel %vm1257, 0.0, %v1252
        %v1262 = vsel %vm1256, 0.0, %v1251
        %v1263 = vsel %vm1257, 0.0, %v1250
        %v1264 = vsel %vm1256, 0.0, %v1249
        %v1265 = vsel %vm1257, 0.0, %v1248
        %v1266 = vsel %vm1256, 0.0, %v1247
        %v1267 = vsel %vm1257, 0.0, %v1246
        %v1268 = vsel %vm1256, 0.0, %v1245
        %v1269 = vsel %vm1257, 0.0, %v1244
        %v1270 = vsel %vm1256, 0.0, %v1243
        %v1271 = vsel %vm1257, 0.0, %v1242
        %v1272 = vsel %vm1256, 0.0, %v1241
        %v1273 = vsel %vm1257, 0.0, %v1240
        %v1274 = vsel %vm1256, 0.0, %v1239
        %v1275 = vsel %vm1257, 0.0, %v1238
        %v1276 = vsel %vm1256, 0.0, %v1237
        %v1277 = vsel %vm1257, 0.0, %v1236
        %v1278 = vadd.f32 %v1258, 0.0
        %v1279 = vadd.f32 %v1259, 0.0
        %v1280 = vadd.f32 %v1260, 0.0
        %v1281 = vadd.f32 %v1261, 0.0
        %v1282 = vadd.f32 %v1262, 0.0
        %v1283 = vadd.f32 %v1263, 0.0
        %v1284 = vadd.f32 %v1264, 0.0
        %v1285 = vadd.f32 %v1265, 0.0
        %v1286 = vadd.f32 %v1266, 0.0
        %v1287 = vadd.f32 %v1267, 0.0
        %v1288 = vadd.f32 %v1268, 0.0
        %v1289 = vadd.f32 %v1269, 0.0
        %v1290 = vadd.f32 %v1270, 0.0
        %v1291 = vadd.f32 %v1271, 0.0
        %v1292 = vadd.f32 %v1272, 0.0
        %v1293 = vadd.f32 %v1273, 0.0
        %v1294 = vadd.f32 %v1274, 0.0
        %v1295 = vadd.f32 %v1275, 0.0
        %v1296 = vadd.f32 %v1276, 0.0
        %v1297 = vadd.f32 %v1277, 0.0
        %s1298 = scalar_lea.vmem %s3, 4
        %v1299 = vld [vmem:[%s1298] sm:$0xf]
        %s1300 = scalar_lea.vmem %s3, 16
        %v1301 = vld [vmem:[%s1300] sm:$0xf]
        %v1303 = vsel %vm664, %v1301, 0
        %1305 = vmatprep.subr.bf16.mxu0 0
        %1306 = vmatpush1.bf16.msra.mxu0 0
        %1307 = vmatprep.subr.bf16.mxu0 0
        %1308 = vmatpush1.bf16.msra.mxu0 0
        %1309 = vmatprep.subr.bf16.mxu0 0
        %1310 = vmatpush1.bf16.msra.mxu0 0
        %1311 = vmatprep.subr.bf16.mxu0 0
        %1312 = vmatpush1.bf16.msra.mxu0 0
        %1313 = vmatprep.subr.bf16.mxu0 0
        %1314 = vmatpush1.bf16.msra.mxu0 0
        %1315 = vmatprep.subr.bf16.mxu0 0
        %1316 = vmatpush1.bf16.msra.mxu0 0
        %1317 = vmatprep.subr.bf16.mxu0 0
        %1318 = vmatpush1.bf16.msra.mxu0 0
        %1319 = vmatprep.subr.bf16.mxu0 0
        %1320 = vmatpush1.bf16.msra.mxu0 %v1303
        %1321 = vmatprep.subr.bf16.mxu0 0
        %1322 = vmatpush2.bf16.msra.mxu0 0
        %1323 = vmatprep.subr.bf16.mxu0 0
        %1324 = vmatpush2.bf16.msra.mxu0 0
        %1325 = vmatprep.subr.bf16.mxu0 0
        %1326 = vmatpush2.bf16.msra.mxu0 0
        %1327 = vmatprep.subr.bf16.mxu0 0
        %1328 = vmatpush2.bf16.msra.mxu0 0
        %1329 = vmatprep.subr.bf16.mxu0 0
        %1330 = vmatpush2.bf16.msra.mxu0 0
        %1331 = vmatprep.subr.bf16.mxu0 0
        %1332 = vmatpush2.bf16.msra.mxu0 0
        %1333 = vmatprep.subr.bf16.mxu0 0
        %1334 = vmatpush2.bf16.msra.mxu0 0
        %1335 = vmatprep.subr.bf16.mxu0 0
        %1336 = vmatpush2.bf16.msra.mxu0 0
        %1337 = vmatprep.mubr.bf16.mxu0 0
        %1338 = vmatmul.mubr.bf16.gmra.mxu0 %v635
        %v1339 = vpop.f32.mrf.mxu0
        %v1340 = vadd.f32 0.0, %v1339
        %v1341 = vpop.f32.mrf.mxu0
        %v1342 = vpop.f32.mrf.mxu0
        %v1343 = vadd.f32 0.0, %v1342
        %v1344 = vpop.f32.mrf.mxu0
        %1345 = vmatprep.mubr.bf16.mxu0 0
        %1346 = vmatmul.mubr.bf16.gmra.mxu0 %v638
        %v1347 = vpop.f32.mrf.mxu0
        %v1348 = vadd.f32 0.0, %v1347
        %v1349 = vpop.f32.mrf.mxu0
        %v1350 = vpop.f32.mrf.mxu0
        %v1351 = vadd.f32 0.0, %v1350
        %v1352 = vpop.f32.mrf.mxu0
        %1353 = vmatprep.mubr.bf16.mxu0 0
        %1354 = vmatmul.mubr.bf16.gmra.mxu0 %v641
        %v1355 = vpop.f32.mrf.mxu0
        %v1356 = vadd.f32 0.0, %v1355
        %v1357 = vpop.f32.mrf.mxu0
        %v1358 = vpop.f32.mrf.mxu0
        %v1359 = vadd.f32 0.0, %v1358
        %v1360 = vpop.f32.mrf.mxu0
        %1361 = vmatprep.mubr.bf16.mxu0 0
        %1362 = vmatmul.mubr.bf16.gmra.mxu0 %v644
        %v1363 = vpop.f32.mrf.mxu0
        %v1364 = vadd.f32 0.0, %v1363
        %v1365 = vpop.f32.mrf.mxu0
        %v1366 = vpop.f32.mrf.mxu0
        %v1367 = vadd.f32 0.0, %v1366
        %v1368 = vpop.f32.mrf.mxu0
        %1369 = vmatprep.mubr.bf16.mxu0 0
        %1370 = vmatmul.mubr.bf16.gmra.mxu0 %v647
        %v1371 = vpop.f32.mrf.mxu0
        %v1372 = vadd.f32 0.0, %v1371
        %v1373 = vpop.f32.mrf.mxu0
        %v1374 = vpop.f32.mrf.mxu0
        %v1375 = vadd.f32 0.0, %v1374
        %v1376 = vpop.f32.mrf.mxu0
        %1377 = vmatprep.mubr.bf16.mxu0 0
        %1378 = vmatmul.mubr.bf16.gmra.mxu0 %v650
        %v1379 = vpop.f32.mrf.mxu0
        %v1380 = vadd.f32 0.0, %v1379
        %v1381 = vpop.f32.mrf.mxu0
        %v1382 = vpop.f32.mrf.mxu0
        %v1383 = vadd.f32 0.0, %v1382
        %v1384 = vpop.f32.mrf.mxu0
        %1385 = vmatprep.mubr.bf16.mxu0 0
        %1386 = vmatmul.mubr.bf16.gmra.mxu0 %v653
        %v1387 = vpop.f32.mrf.mxu0
        %v1388 = vadd.f32 0.0, %v1387
        %v1389 = vpop.f32.mrf.mxu0
        %v1390 = vpop.f32.mrf.mxu0
        %v1391 = vadd.f32 0.0, %v1390
        %v1392 = vpop.f32.mrf.mxu0
        %1393 = vmatprep.mubr.bf16.mxu0 0
        %1394 = vmatmul.mubr.bf16.gmra.mxu0 %v656
        %v1395 = vpop.f32.mrf.mxu0
        %v1396 = vadd.f32 0.0, %v1395
        %v1397 = vpop.f32.mrf.mxu0
        %v1398 = vpop.f32.mrf.mxu0
        %v1399 = vadd.f32 0.0, %v1398
        %v1400 = vpop.f32.mrf.mxu0
        %1401 = vmatprep.mubr.bf16.mxu0 0
        %1402 = vmatmul.mubr.bf16.gmra.mxu0 %v659
        %v1403 = vpop.f32.mrf.mxu0
        %v1404 = vadd.f32 0.0, %v1403
        %v1405 = vpop.f32.mrf.mxu0
        %v1406 = vpop.f32.mrf.mxu0
        %v1407 = vadd.f32 0.0, %v1406
        %v1408 = vpop.f32.mrf.mxu0
        %1409 = vmatprep.mubr.bf16.mxu0 0
        %1410 = vmatmul.mubr.bf16.gmra.mxu0 %v662
        %v1411 = vpop.f32.mrf.mxu0
        %v1412 = vadd.f32 0.0, %v1411
        %v1413 = vpop.f32.mrf.mxu0
        %v1414 = vpop.f32.mrf.mxu0
        %v1415 = vadd.f32 0.0, %v1414
        %v1416 = vpop.f32.mrf.mxu0
        %1417 = vdwg.mxu0
        %v1419 = vsel %vm664, %v1299, 0
        %1421 = vmatprep.subr.bf16.mxu0 0
        %1422 = vmatpush1.bf16.msra.mxu0 0
        %1423 = vmatprep.subr.bf16.mxu0 0
        %1424 = vmatpush1.bf16.msra.mxu0 0
        %1425 = vmatprep.subr.bf16.mxu0 0
        %1426 = vmatpush1.bf16.msra.mxu0 0
        %1427 = vmatprep.subr.bf16.mxu0 0
        %1428 = vmatpush1.bf16.msra.mxu0 0
        %1429 = vmatprep.subr.bf16.mxu0 0
        %1430 = vmatpush1.bf16.msra.mxu0 0
        %1431 = vmatprep.subr.bf16.mxu0 0
        %1432 = vmatpush1.bf16.msra.mxu0 0
        %1433 = vmatprep.subr.bf16.mxu0 0
        %1434 = vmatpush1.bf16.msra.mxu0 0
        %1435 = vmatprep.subr.bf16.mxu0 0
        %1436 = vmatpush1.bf16.msra.mxu0 %v1419
        %1437 = vmatprep.subr.bf16.mxu0 0
        %1438 = vmatpush2.bf16.msra.mxu0 0
        %1439 = vmatprep.subr.bf16.mxu0 0
        %1440 = vmatpush2.bf16.msra.mxu0 0
        %1441 = vmatprep.subr.bf16.mxu0 0
        %1442 = vmatpush2.bf16.msra.mxu0 0
        %1443 = vmatprep.subr.bf16.mxu0 0
        %1444 = vmatpush2.bf16.msra.mxu0 0
        %1445 = vmatprep.subr.bf16.mxu0 0
        %1446 = vmatpush2.bf16.msra.mxu0 0
        %1447 = vmatprep.subr.bf16.mxu0 0
        %1448 = vmatpush2.bf16.msra.mxu0 0
        %1449 = vmatprep.subr.bf16.mxu0 0
        %1450 = vmatpush2.bf16.msra.mxu0 0
        %1451 = vmatprep.subr.bf16.mxu0 0
        %1452 = vmatpush2.bf16.msra.mxu0 0
        %1453 = vmatprep.mubr.bf16.mxu0 0
        %1454 = vmatmul.mubr.bf16.gmra.mxu0 %v832
        %v1455 = vpop.f32.mrf.mxu0
        %v1456 = vadd.f32 %v1340, %v1455
        %v1457 = vpop.f32.mrf.mxu0
        %v1458 = vpop.f32.mrf.mxu0
        %v1459 = vadd.f32 %v1343, %v1458
        %v1460 = vpop.f32.mrf.mxu0
        %1461 = vmatprep.mubr.bf16.mxu0 0
        %1462 = vmatmul.mubr.bf16.gmra.mxu0 %v835
        %v1463 = vpop.f32.mrf.mxu0
        %v1464 = vadd.f32 %v1348, %v1463
        %v1465 = vpop.f32.mrf.mxu0
        %v1466 = vpop.f32.mrf.mxu0
        %v1467 = vadd.f32 %v1351, %v1466
        %v1468 = vpop.f32.mrf.mxu0
        %1469 = vmatprep.mubr.bf16.mxu0 0
        %1470 = vmatmul.mubr.bf16.gmra.mxu0 %v838
        %v1471 = vpop.f32.mrf.mxu0
        %v1472 = vadd.f32 %v1356, %v1471
        %v1473 = vpop.f32.mrf.mxu0
        %v1474 = vpop.f32.mrf.mxu0
        %v1475 = vadd.f32 %v1359, %v1474
        %v1476 = vpop.f32.mrf.mxu0
        %1477 = vmatprep.mubr.bf16.mxu0 0
        %1478 = vmatmul.mubr.bf16.gmra.mxu0 %v841
        %v1479 = vpop.f32.mrf.mxu0
        %v1480 = vadd.f32 %v1364, %v1479
        %v1481 = vpop.f32.mrf.mxu0
        %v1482 = vpop.f32.mrf.mxu0
        %v1483 = vadd.f32 %v1367, %v1482
        %v1484 = vpop.f32.mrf.mxu0
        %1485 = vmatprep.mubr.bf16.mxu0 0
        %1486 = vmatmul.mubr.bf16.gmra.mxu0 %v844
        %v1487 = vpop.f32.mrf.mxu0
        %v1488 = vadd.f32 %v1372, %v1487
        %v1489 = vpop.f32.mrf.mxu0
        %v1490 = vpop.f32.mrf.mxu0
        %v1491 = vadd.f32 %v1375, %v1490
        %v1492 = vpop.f32.mrf.mxu0
        %1493 = vmatprep.mubr.bf16.mxu0 0
        %1494 = vmatmul.mubr.bf16.gmra.mxu0 %v847
        %v1495 = vpop.f32.mrf.mxu0
        %v1496 = vadd.f32 %v1380, %v1495
        %v1497 = vpop.f32.mrf.mxu0
        %v1498 = vpop.f32.mrf.mxu0
        %v1499 = vadd.f32 %v1383, %v1498
        %v1500 = vpop.f32.mrf.mxu0
        %1501 = vmatprep.mubr.bf16.mxu0 0
        %1502 = vmatmul.mubr.bf16.gmra.mxu0 %v850
        %v1503 = vpop.f32.mrf.mxu0
        %v1504 = vadd.f32 %v1388, %v1503
        %v1505 = vpop.f32.mrf.mxu0
        %v1506 = vpop.f32.mrf.mxu0
        %v1507 = vadd.f32 %v1391, %v1506
        %v1508 = vpop.f32.mrf.mxu0
        %1509 = vmatprep.mubr.bf16.mxu0 0
        %1510 = vmatmul.mubr.bf16.gmra.mxu0 %v853
        %v1511 = vpop.f32.mrf.mxu0
        %v1512 = vadd.f32 %v1396, %v1511
        %v1513 = vpop.f32.mrf.mxu0
        %v1514 = vpop.f32.mrf.mxu0
        %v1515 = vadd.f32 %v1399, %v1514
        %v1516 = vpop.f32.mrf.mxu0
        %1517 = vmatprep.mubr.bf16.mxu0 0
        %1518 = vmatmul.mubr.bf16.gmra.mxu0 %v856
        %v1519 = vpop.f32.mrf.mxu0
        %v1520 = vadd.f32 %v1404, %v1519
        %v1521 = vpop.f32.mrf.mxu0
        %v1522 = vpop.f32.mrf.mxu0
        %v1523 = vadd.f32 %v1407, %v1522
        %v1524 = vpop.f32.mrf.mxu0
        %1525 = vmatprep.mubr.bf16.mxu0 0
        %1526 = vmatmul.mubr.bf16.gmra.mxu0 %v859
        %v1527 = vpop.f32.mrf.mxu0
        %v1528 = vadd.f32 %v1412, %v1527
        %v1529 = vpop.f32.mrf.mxu0
        %v1530 = vpop.f32.mrf.mxu0
        %v1531 = vadd.f32 %v1415, %v1530
        %v1532 = vpop.f32.mrf.mxu0
        %1533 = vdwg.mxu0
        %s1534 = scalar_lea.vmem %s3, 28
        %v1535 = vld [vmem:[%s1534] sm:$0xf]
        %v1537 = vsel %vm664, %v1535, 0
        %1539 = vmatprep.subr.bf16.mxu0 0
        %1540 = vmatpush1.bf16.msra.mxu0 0
        %1541 = vmatprep.subr.bf16.mxu0 0
        %1542 = vmatpush1.bf16.msra.mxu0 0
        %1543 = vmatprep.subr.bf16.mxu0 0
        %1544 = vmatpush1.bf16.msra.mxu0 0
        %1545 = vmatprep.subr.bf16.mxu0 0
        %1546 = vmatpush1.bf16.msra.mxu0 0
        %1547 = vmatprep.subr.bf16.mxu0 0
        %1548 = vmatpush1.bf16.msra.mxu0 0
        %1549 = vmatprep.subr.bf16.mxu0 0
        %1550 = vmatpush1.bf16.msra.mxu0 0
        %1551 = vmatprep.subr.bf16.mxu0 0
        %1552 = vmatpush1.bf16.msra.mxu0 0
        %1553 = vmatprep.subr.bf16.mxu0 0
        %1554 = vmatpush1.bf16.msra.mxu0 %v1537
        %1555 = vmatprep.subr.bf16.mxu0 0
        %1556 = vmatpush2.bf16.msra.mxu0 0
        %1557 = vmatprep.subr.bf16.mxu0 0
        %1558 = vmatpush2.bf16.msra.mxu0 0
        %1559 = vmatprep.subr.bf16.mxu0 0
        %1560 = vmatpush2.bf16.msra.mxu0 0
        %1561 = vmatprep.subr.bf16.mxu0 0
        %1562 = vmatpush2.bf16.msra.mxu0 0
        %1563 = vmatprep.subr.bf16.mxu0 0
        %1564 = vmatpush2.bf16.msra.mxu0 0
        %1565 = vmatprep.subr.bf16.mxu0 0
        %1566 = vmatpush2.bf16.msra.mxu0 0
        %1567 = vmatprep.subr.bf16.mxu0 0
        %1568 = vmatpush2.bf16.msra.mxu0 0
        %1569 = vmatprep.subr.bf16.mxu0 0
        %1570 = vmatpush2.bf16.msra.mxu0 0
        %1571 = vmatprep.mubr.bf16.mxu0 0
        %1572 = vmatmul.mubr.bf16.gmra.mxu0 %v1050
        %v1573 = vpop.f32.mrf.mxu0
        %v1574 = vadd.f32 0.0, %v1573
        %v1575 = vpop.f32.mrf.mxu0
        %v1576 = vpop.f32.mrf.mxu0
        %v1577 = vadd.f32 0.0, %v1576
        %v1578 = vpop.f32.mrf.mxu0
        %1579 = vmatprep.mubr.bf16.mxu0 0
        %1580 = vmatmul.mubr.bf16.gmra.mxu0 %v1053
        %v1581 = vpop.f32.mrf.mxu0
        %v1582 = vadd.f32 0.0, %v1581
        %v1583 = vpop.f32.mrf.mxu0
        %v1584 = vpop.f32.mrf.mxu0
        %v1585 = vadd.f32 0.0, %v1584
        %v1586 = vpop.f32.mrf.mxu0
        %1587 = vmatprep.mubr.bf16.mxu0 0
        %1588 = vmatmul.mubr.bf16.gmra.mxu0 %v1056
        %v1589 = vpop.f32.mrf.mxu0
        %v1590 = vadd.f32 0.0, %v1589
        %v1591 = vpop.f32.mrf.mxu0
        %v1592 = vpop.f32.mrf.mxu0
        %v1593 = vadd.f32 0.0, %v1592
        %v1594 = vpop.f32.mrf.mxu0
        %1595 = vmatprep.mubr.bf16.mxu0 0
        %1596 = vmatmul.mubr.bf16.gmra.mxu0 %v1059
        %v1597 = vpop.f32.mrf.mxu0
        %v1598 = vadd.f32 0.0, %v1597
        %v1599 = vpop.f32.mrf.mxu0
        %v1600 = vpop.f32.mrf.mxu0
        %v1601 = vadd.f32 0.0, %v1600
        %v1602 = vpop.f32.mrf.mxu0
        %1603 = vmatprep.mubr.bf16.mxu0 0
        %1604 = vmatmul.mubr.bf16.gmra.mxu0 %v1062
        %v1605 = vpop.f32.mrf.mxu0
        %v1606 = vadd.f32 0.0, %v1605
        %v1607 = vpop.f32.mrf.mxu0
        %v1608 = vpop.f32.mrf.mxu0
        %v1609 = vadd.f32 0.0, %v1608
        %v1610 = vpop.f32.mrf.mxu0
        %1611 = vmatprep.mubr.bf16.mxu0 0
        %1612 = vmatmul.mubr.bf16.gmra.mxu0 %v1065
        %v1613 = vpop.f32.mrf.mxu0
        %v1614 = vadd.f32 0.0, %v1613
        %v1615 = vpop.f32.mrf.mxu0
        %v1616 = vpop.f32.mrf.mxu0
        %v1617 = vadd.f32 0.0, %v1616
        %v1618 = vpop.f32.mrf.mxu0
        %1619 = vmatprep.mubr.bf16.mxu0 0
        %1620 = vmatmul.mubr.bf16.gmra.mxu0 %v1068
        %v1621 = vpop.f32.mrf.mxu0
        %v1622 = vadd.f32 0.0, %v1621
        %v1623 = vpop.f32.mrf.mxu0
        %v1624 = vpop.f32.mrf.mxu0
        %v1625 = vadd.f32 0.0, %v1624
        %v1626 = vpop.f32.mrf.mxu0
        %1627 = vmatprep.mubr.bf16.mxu0 0
        %1628 = vmatmul.mubr.bf16.gmra.mxu0 %v1071
        %v1629 = vpop.f32.mrf.mxu0
        %v1630 = vadd.f32 0.0, %v1629
        %v1631 = vpop.f32.mrf.mxu0
        %v1632 = vpop.f32.mrf.mxu0
        %v1633 = vadd.f32 0.0, %v1632
        %v1634 = vpop.f32.mrf.mxu0
        %1635 = vmatprep.mubr.bf16.mxu0 0
        %1636 = vmatmul.mubr.bf16.gmra.mxu0 %v1074
        %v1637 = vpop.f32.mrf.mxu0
        %v1638 = vadd.f32 0.0, %v1637
        %v1639 = vpop.f32.mrf.mxu0
        %v1640 = vpop.f32.mrf.mxu0
        %v1641 = vadd.f32 0.0, %v1640
        %v1642 = vpop.f32.mrf.mxu0
        %1643 = vmatprep.mubr.bf16.mxu0 0
        %1644 = vmatmul.mubr.bf16.gmra.mxu0 %v1077
        %v1645 = vpop.f32.mrf.mxu0
        %v1646 = vadd.f32 0.0, %v1645
        %v1647 = vpop.f32.mrf.mxu0
        %v1648 = vpop.f32.mrf.mxu0
        %v1649 = vadd.f32 0.0, %v1648
        %v1650 = vpop.f32.mrf.mxu0
        %1651 = vdwg.mxu0
        %v1652 = vadd.f32 %v1456, %v1574
        %v1653 = vadd.f32 %v1459, %v1577
        %v1654 = vadd.f32 %v1464, %v1582
        %v1655 = vadd.f32 %v1467, %v1585
        %v1656 = vadd.f32 %v1472, %v1590
        %v1657 = vadd.f32 %v1475, %v1593
        %v1658 = vadd.f32 %v1480, %v1598
        %v1659 = vadd.f32 %v1483, %v1601
        %v1660 = vadd.f32 %v1488, %v1606
        %v1661 = vadd.f32 %v1491, %v1609
        %v1662 = vadd.f32 %v1496, %v1614
        %v1663 = vadd.f32 %v1499, %v1617
        %v1664 = vadd.f32 %v1504, %v1622
        %v1665 = vadd.f32 %v1507, %v1625
        %v1666 = vadd.f32 %v1512, %v1630
        %v1667 = vadd.f32 %v1515, %v1633
        %v1668 = vadd.f32 %v1520, %v1638
        %v1669 = vadd.f32 %v1523, %v1641
        %v1670 = vadd.f32 %v1528, %v1646
        %v1671 = vadd.f32 %v1531, %v1649
        %v1672 = vadd.f32 %v1278, %v1652
        %v1673 = vadd.f32 %v1279, %v1653
        %v1674 = vadd.f32 %v1280, %v1654
        %v1675 = vadd.f32 %v1281, %v1655
        %v1676 = vadd.f32 %v1282, %v1656
        %v1677 = vadd.f32 %v1283, %v1657
        %v1678 = vadd.f32 %v1284, %v1658
        %v1679 = vadd.f32 %v1285, %v1659
        %v1680 = vadd.f32 %v1286, %v1660
        %v1681 = vadd.f32 %v1287, %v1661
        %v1682 = vadd.f32 %v1288, %v1662
        %v1683 = vadd.f32 %v1289, %v1663
        %v1684 = vadd.f32 %v1290, %v1664
        %v1685 = vadd.f32 %v1291, %v1665
        %v1686 = vadd.f32 %v1292, %v1666
        %v1687 = vadd.f32 %v1293, %v1667
        %v1688 = vadd.f32 %v1294, %v1668
        %v1689 = vadd.f32 %v1295, %v1669
        %v1690 = vadd.f32 %v1296, %v1670
        %v1691 = vadd.f32 %v1297, %v1671
        %s1692 = scalar_lea.vmem %s3, 8
        %v1693 = vld [vmem:[%s1692] sm:$0xf]
        %s1694 = scalar_lea.vmem %s3, 20
        %v1695 = vld [vmem:[%s1694] sm:$0xf]
        %v1697 = vsel %vm664, %v1695, 0
        %1699 = vmatprep.subr.bf16.mxu0 0
        %1700 = vmatpush1.bf16.msra.mxu0 0
        %1701 = vmatprep.subr.bf16.mxu0 0
        %1702 = vmatpush1.bf16.msra.mxu0 0
        %1703 = vmatprep.subr.bf16.mxu0 0
        %1704 = vmatpush1.bf16.msra.mxu0 0
        %1705 = vmatprep.subr.bf16.mxu0 0
        %1706 = vmatpush1.bf16.msra.mxu0 0
        %1707 = vmatprep.subr.bf16.mxu0 0
        %1708 = vmatpush1.bf16.msra.mxu0 0
        %1709 = vmatprep.subr.bf16.mxu0 0
        %1710 = vmatpush1.bf16.msra.mxu0 0
        %1711 = vmatprep.subr.bf16.mxu0 0
        %1712 = vmatpush1.bf16.msra.mxu0 0
        %1713 = vmatprep.subr.bf16.mxu0 0
        %1714 = vmatpush1.bf16.msra.mxu0 %v1697
        %1715 = vmatprep.subr.bf16.mxu0 0
        %1716 = vmatpush2.bf16.msra.mxu0 0
        %1717 = vmatprep.subr.bf16.mxu0 0
        %1718 = vmatpush2.bf16.msra.mxu0 0
        %1719 = vmatprep.subr.bf16.mxu0 0
        %1720 = vmatpush2.bf16.msra.mxu0 0
        %1721 = vmatprep.subr.bf16.mxu0 0
        %1722 = vmatpush2.bf16.msra.mxu0 0
        %1723 = vmatprep.subr.bf16.mxu0 0
        %1724 = vmatpush2.bf16.msra.mxu0 0
        %1725 = vmatprep.subr.bf16.mxu0 0
        %1726 = vmatpush2.bf16.msra.mxu0 0
        %1727 = vmatprep.subr.bf16.mxu0 0
        %1728 = vmatpush2.bf16.msra.mxu0 0
        %1729 = vmatprep.subr.bf16.mxu0 0
        %1730 = vmatpush2.bf16.msra.mxu0 0
        %1731 = vmatprep.mubr.bf16.mxu0 0
        %1732 = vmatmul.mubr.bf16.gmra.mxu0 %v635
        %v1733 = vpop.f32.mrf.mxu0
        %v1734 = vadd.f32 0.0, %v1733
        %v1735 = vpop.f32.mrf.mxu0
        %v1736 = vpop.f32.mrf.mxu0
        %v1737 = vadd.f32 0.0, %v1736
        %v1738 = vpop.f32.mrf.mxu0
        %1739 = vmatprep.mubr.bf16.mxu0 0
        %1740 = vmatmul.mubr.bf16.gmra.mxu0 %v638
        %v1741 = vpop.f32.mrf.mxu0
        %v1742 = vadd.f32 0.0, %v1741
        %v1743 = vpop.f32.mrf.mxu0
        %v1744 = vpop.f32.mrf.mxu0
        %v1745 = vadd.f32 0.0, %v1744
        %v1746 = vpop.f32.mrf.mxu0
        %1747 = vmatprep.mubr.bf16.mxu0 0
        %1748 = vmatmul.mubr.bf16.gmra.mxu0 %v641
        %v1749 = vpop.f32.mrf.mxu0
        %v1750 = vadd.f32 0.0, %v1749
        %v1751 = vpop.f32.mrf.mxu0
        %v1752 = vpop.f32.mrf.mxu0
        %v1753 = vadd.f32 0.0, %v1752
        %v1754 = vpop.f32.mrf.mxu0
        %1755 = vmatprep.mubr.bf16.mxu0 0
        %1756 = vmatmul.mubr.bf16.gmra.mxu0 %v644
        %v1757 = vpop.f32.mrf.mxu0
        %v1758 = vadd.f32 0.0, %v1757
        %v1759 = vpop.f32.mrf.mxu0
        %v1760 = vpop.f32.mrf.mxu0
        %v1761 = vadd.f32 0.0, %v1760
        %v1762 = vpop.f32.mrf.mxu0
        %1763 = vmatprep.mubr.bf16.mxu0 0
        %1764 = vmatmul.mubr.bf16.gmra.mxu0 %v647
        %v1765 = vpop.f32.mrf.mxu0
        %v1766 = vadd.f32 0.0, %v1765
        %v1767 = vpop.f32.mrf.mxu0
        %v1768 = vpop.f32.mrf.mxu0
        %v1769 = vadd.f32 0.0, %v1768
        %v1770 = vpop.f32.mrf.mxu0
        %1771 = vmatprep.mubr.bf16.mxu0 0
        %1772 = vmatmul.mubr.bf16.gmra.mxu0 %v650
        %v1773 = vpop.f32.mrf.mxu0
        %v1774 = vadd.f32 0.0, %v1773
        %v1775 = vpop.f32.mrf.mxu0
        %v1776 = vpop.f32.mrf.mxu0
        %v1777 = vadd.f32 0.0, %v1776
        %v1778 = vpop.f32.mrf.mxu0
        %1779 = vmatprep.mubr.bf16.mxu0 0
        %1780 = vmatmul.mubr.bf16.gmra.mxu0 %v653
        %v1781 = vpop.f32.mrf.mxu0
        %v1782 = vadd.f32 0.0, %v1781
        %v1783 = vpop.f32.mrf.mxu0
        %v1784 = vpop.f32.mrf.mxu0
        %v1785 = vadd.f32 0.0, %v1784
        %v1786 = vpop.f32.mrf.mxu0
        %1787 = vmatprep.mubr.bf16.mxu0 0
        %1788 = vmatmul.mubr.bf16.gmra.mxu0 %v656
        %v1789 = vpop.f32.mrf.mxu0
        %v1790 = vadd.f32 0.0, %v1789
        %v1791 = vpop.f32.mrf.mxu0
        %v1792 = vpop.f32.mrf.mxu0
        %v1793 = vadd.f32 0.0, %v1792
        %v1794 = vpop.f32.mrf.mxu0
        %1795 = vmatprep.mubr.bf16.mxu0 0
        %1796 = vmatmul.mubr.bf16.gmra.mxu0 %v659
        %v1797 = vpop.f32.mrf.mxu0
        %v1798 = vadd.f32 0.0, %v1797
        %v1799 = vpop.f32.mrf.mxu0
        %v1800 = vpop.f32.mrf.mxu0
        %v1801 = vadd.f32 0.0, %v1800
        %v1802 = vpop.f32.mrf.mxu0
        %1803 = vmatprep.mubr.bf16.mxu0 0
        %1804 = vmatmul.mubr.bf16.gmra.mxu0 %v662
        %v1805 = vpop.f32.mrf.mxu0
        %v1806 = vadd.f32 0.0, %v1805
        %v1807 = vpop.f32.mrf.mxu0
        %v1808 = vpop.f32.mrf.mxu0
        %v1809 = vadd.f32 0.0, %v1808
        %v1810 = vpop.f32.mrf.mxu0
        %1811 = vdwg.mxu0
        %v1813 = vsel %vm664, %v1693, 0
        %1815 = vmatprep.subr.bf16.mxu0 0
        %1816 = vmatpush1.bf16.msra.mxu0 0
        %1817 = vmatprep.subr.bf16.mxu0 0
        %1818 = vmatpush1.bf16.msra.mxu0 0
        %1819 = vmatprep.subr.bf16.mxu0 0
        %1820 = vmatpush1.bf16.msra.mxu0 0
        %1821 = vmatprep.subr.bf16.mxu0 0
        %1822 = vmatpush1.bf16.msra.mxu0 0
        %1823 = vmatprep.subr.bf16.mxu0 0
        %1824 = vmatpush1.bf16.msra.mxu0 0
        %1825 = vmatprep.subr.bf16.mxu0 0
        %1826 = vmatpush1.bf16.msra.mxu0 0
        %1827 = vmatprep.subr.bf16.mxu0 0
        %1828 = vmatpush1.bf16.msra.mxu0 0
        %1829 = vmatprep.subr.bf16.mxu0 0
        %1830 = vmatpush1.bf16.msra.mxu0 %v1813
        %1831 = vmatprep.subr.bf16.mxu0 0
        %1832 = vmatpush2.bf16.msra.mxu0 0
        %1833 = vmatprep.subr.bf16.mxu0 0
        %1834 = vmatpush2.bf16.msra.mxu0 0
        %1835 = vmatprep.subr.bf16.mxu0 0
        %1836 = vmatpush2.bf16.msra.mxu0 0
        %1837 = vmatprep.subr.bf16.mxu0 0
        %1838 = vmatpush2.bf16.msra.mxu0 0
        %1839 = vmatprep.subr.bf16.mxu0 0
        %1840 = vmatpush2.bf16.msra.mxu0 0
        %1841 = vmatprep.subr.bf16.mxu0 0
        %1842 = vmatpush2.bf16.msra.mxu0 0
        %1843 = vmatprep.subr.bf16.mxu0 0
        %1844 = vmatpush2.bf16.msra.mxu0 0
        %1845 = vmatprep.subr.bf16.mxu0 0
        %1846 = vmatpush2.bf16.msra.mxu0 0
        %1847 = vmatprep.mubr.bf16.mxu0 0
        %1848 = vmatmul.mubr.bf16.gmra.mxu0 %v832
        %v1849 = vpop.f32.mrf.mxu0
        %v1850 = vadd.f32 %v1734, %v1849
        %v1851 = vpop.f32.mrf.mxu0
        %v1852 = vpop.f32.mrf.mxu0
        %v1853 = vadd.f32 %v1737, %v1852
        %v1854 = vpop.f32.mrf.mxu0
        %1855 = vmatprep.mubr.bf16.mxu0 0
        %1856 = vmatmul.mubr.bf16.gmra.mxu0 %v835
        %v1857 = vpop.f32.mrf.mxu0
        %v1858 = vadd.f32 %v1742, %v1857
        %v1859 = vpop.f32.mrf.mxu0
        %v1860 = vpop.f32.mrf.mxu0
        %v1861 = vadd.f32 %v1745, %v1860
        %v1862 = vpop.f32.mrf.mxu0
        %1863 = vmatprep.mubr.bf16.mxu0 0
        %1864 = vmatmul.mubr.bf16.gmra.mxu0 %v838
        %v1865 = vpop.f32.mrf.mxu0
        %v1866 = vadd.f32 %v1750, %v1865
        %v1867 = vpop.f32.mrf.mxu0
        %v1868 = vpop.f32.mrf.mxu0
        %v1869 = vadd.f32 %v1753, %v1868
        %v1870 = vpop.f32.mrf.mxu0
        %1871 = vmatprep.mubr.bf16.mxu0 0
        %1872 = vmatmul.mubr.bf16.gmra.mxu0 %v841
        %v1873 = vpop.f32.mrf.mxu0
        %v1874 = vadd.f32 %v1758, %v1873
        %v1875 = vpop.f32.mrf.mxu0
        %v1876 = vpop.f32.mrf.mxu0
        %v1877 = vadd.f32 %v1761, %v1876
        %v1878 = vpop.f32.mrf.mxu0
        %1879 = vmatprep.mubr.bf16.mxu0 0
        %1880 = vmatmul.mubr.bf16.gmra.mxu0 %v844
        %v1881 = vpop.f32.mrf.mxu0
        %v1882 = vadd.f32 %v1766, %v1881
        %v1883 = vpop.f32.mrf.mxu0
        %v1884 = vpop.f32.mrf.mxu0
        %v1885 = vadd.f32 %v1769, %v1884
        %v1886 = vpop.f32.mrf.mxu0
        %1887 = vmatprep.mubr.bf16.mxu0 0
        %1888 = vmatmul.mubr.bf16.gmra.mxu0 %v847
        %v1889 = vpop.f32.mrf.mxu0
        %v1890 = vadd.f32 %v1774, %v1889
        %v1891 = vpop.f32.mrf.mxu0
        %v1892 = vpop.f32.mrf.mxu0
        %v1893 = vadd.f32 %v1777, %v1892
        %v1894 = vpop.f32.mrf.mxu0
        %1895 = vmatprep.mubr.bf16.mxu0 0
        %1896 = vmatmul.mubr.bf16.gmra.mxu0 %v850
        %v1897 = vpop.f32.mrf.mxu0
        %v1898 = vadd.f32 %v1782, %v1897
        %v1899 = vpop.f32.mrf.mxu0
        %v1900 = vpop.f32.mrf.mxu0
        %v1901 = vadd.f32 %v1785, %v1900
        %v1902 = vpop.f32.mrf.mxu0
        %1903 = vmatprep.mubr.bf16.mxu0 0
        %1904 = vmatmul.mubr.bf16.gmra.mxu0 %v853
        %v1905 = vpop.f32.mrf.mxu0
        %v1906 = vadd.f32 %v1790, %v1905
        %v1907 = vpop.f32.mrf.mxu0
        %v1908 = vpop.f32.mrf.mxu0
        %v1909 = vadd.f32 %v1793, %v1908
        %v1910 = vpop.f32.mrf.mxu0
        %1911 = vmatprep.mubr.bf16.mxu0 0
        %1912 = vmatmul.mubr.bf16.gmra.mxu0 %v856
        %v1913 = vpop.f32.mrf.mxu0
        %v1914 = vadd.f32 %v1798, %v1913
        %v1915 = vpop.f32.mrf.mxu0
        %v1916 = vpop.f32.mrf.mxu0
        %v1917 = vadd.f32 %v1801, %v1916
        %v1918 = vpop.f32.mrf.mxu0
        %1919 = vmatprep.mubr.bf16.mxu0 0
        %1920 = vmatmul.mubr.bf16.gmra.mxu0 %v859
        %v1921 = vpop.f32.mrf.mxu0
        %v1922 = vadd.f32 %v1806, %v1921
        %v1923 = vpop.f32.mrf.mxu0
        %v1924 = vpop.f32.mrf.mxu0
        %v1925 = vadd.f32 %v1809, %v1924
        %v1926 = vpop.f32.mrf.mxu0
        %1927 = vdwg.mxu0
        %s1928 = scalar_lea.vmem %s3, 32
        %v1929 = vld [vmem:[%s1928] sm:$0xf]
        %v1931 = vsel %vm664, %v1929, 0
        %1933 = vmatprep.subr.bf16.mxu0 0
        %1934 = vmatpush1.bf16.msra.mxu0 0
        %1935 = vmatprep.subr.bf16.mxu0 0
        %1936 = vmatpush1.bf16.msra.mxu0 0
        %1937 = vmatprep.subr.bf16.mxu0 0
        %1938 = vmatpush1.bf16.msra.mxu0 0
        %1939 = vmatprep.subr.bf16.mxu0 0
        %1940 = vmatpush1.bf16.msra.mxu0 0
        %1941 = vmatprep.subr.bf16.mxu0 0
        %1942 = vmatpush1.bf16.msra.mxu0 0
        %1943 = vmatprep.subr.bf16.mxu0 0
        %1944 = vmatpush1.bf16.msra.mxu0 0
        %1945 = vmatprep.subr.bf16.mxu0 0
        %1946 = vmatpush1.bf16.msra.mxu0 0
        %1947 = vmatprep.subr.bf16.mxu0 0
        %1948 = vmatpush1.bf16.msra.mxu0 %v1931
        %1949 = vmatprep.subr.bf16.mxu0 0
        %1950 = vmatpush2.bf16.msra.mxu0 0
        %1951 = vmatprep.subr.bf16.mxu0 0
        %1952 = vmatpush2.bf16.msra.mxu0 0
        %1953 = vmatprep.subr.bf16.mxu0 0
        %1954 = vmatpush2.bf16.msra.mxu0 0
        %1955 = vmatprep.subr.bf16.mxu0 0
        %1956 = vmatpush2.bf16.msra.mxu0 0
        %1957 = vmatprep.subr.bf16.mxu0 0
        %1958 = vmatpush2.bf16.msra.mxu0 0
        %1959 = vmatprep.subr.bf16.mxu0 0
        %1960 = vmatpush2.bf16.msra.mxu0 0
        %1961 = vmatprep.subr.bf16.mxu0 0
        %1962 = vmatpush2.bf16.msra.mxu0 0
        %1963 = vmatprep.subr.bf16.mxu0 0
        %1964 = vmatpush2.bf16.msra.mxu0 0
        %1965 = vmatprep.mubr.bf16.mxu0 0
        %1966 = vmatmul.mubr.bf16.gmra.mxu0 %v1050
        %v1967 = vpop.f32.mrf.mxu0
        %v1968 = vadd.f32 0.0, %v1967
        %v1969 = vpop.f32.mrf.mxu0
        %v1970 = vpop.f32.mrf.mxu0
        %v1971 = vadd.f32 0.0, %v1970
        %v1972 = vpop.f32.mrf.mxu0
        %1973 = vmatprep.mubr.bf16.mxu0 0
        %1974 = vmatmul.mubr.bf16.gmra.mxu0 %v1053
        %v1975 = vpop.f32.mrf.mxu0
        %v1976 = vadd.f32 0.0, %v1975
        %v1977 = vpop.f32.mrf.mxu0
        %v1978 = vpop.f32.mrf.mxu0
        %v1979 = vadd.f32 0.0, %v1978
        %v1980 = vpop.f32.mrf.mxu0
        %1981 = vmatprep.mubr.bf16.mxu0 0
        %1982 = vmatmul.mubr.bf16.gmra.mxu0 %v1056
        %v1983 = vpop.f32.mrf.mxu0
        %v1984 = vadd.f32 0.0, %v1983
        %v1985 = vpop.f32.mrf.mxu0
        %v1986 = vpop.f32.mrf.mxu0
        %v1987 = vadd.f32 0.0, %v1986
        %v1988 = vpop.f32.mrf.mxu0
        %1989 = vmatprep.mubr.bf16.mxu0 0
        %1990 = vmatmul.mubr.bf16.gmra.mxu0 %v1059
        %v1991 = vpop.f32.mrf.mxu0
        %v1992 = vadd.f32 0.0, %v1991
        %v1993 = vpop.f32.mrf.mxu0
        %v1994 = vpop.f32.mrf.mxu0
        %v1995 = vadd.f32 0.0, %v1994
        %v1996 = vpop.f32.mrf.mxu0
        %1997 = vmatprep.mubr.bf16.mxu0 0
        %1998 = vmatmul.mubr.bf16.gmra.mxu0 %v1062
        %v1999 = vpop.f32.mrf.mxu0
        %v2000 = vadd.f32 0.0, %v1999
        %v2001 = vpop.f32.mrf.mxu0
        %v2002 = vpop.f32.mrf.mxu0
        %v2003 = vadd.f32 0.0, %v2002
        %v2004 = vpop.f32.mrf.mxu0
        %2005 = vmatprep.mubr.bf16.mxu0 0
        %2006 = vmatmul.mubr.bf16.gmra.mxu0 %v1065
        %v2007 = vpop.f32.mrf.mxu0
        %v2008 = vadd.f32 0.0, %v2007
        %v2009 = vpop.f32.mrf.mxu0
        %v2010 = vpop.f32.mrf.mxu0
        %v2011 = vadd.f32 0.0, %v2010
        %v2012 = vpop.f32.mrf.mxu0
        %2013 = vmatprep.mubr.bf16.mxu0 0
        %2014 = vmatmul.mubr.bf16.gmra.mxu0 %v1068
        %v2015 = vpop.f32.mrf.mxu0
        %v2016 = vadd.f32 0.0, %v2015
        %v2017 = vpop.f32.mrf.mxu0
        %v2018 = vpop.f32.mrf.mxu0
        %v2019 = vadd.f32 0.0, %v2018
        %v2020 = vpop.f32.mrf.mxu0
        %2021 = vmatprep.mubr.bf16.mxu0 0
        %2022 = vmatmul.mubr.bf16.gmra.mxu0 %v1071
        %v2023 = vpop.f32.mrf.mxu0
        %v2024 = vadd.f32 0.0, %v2023
        %v2025 = vpop.f32.mrf.mxu0
        %v2026 = vpop.f32.mrf.mxu0
        %v2027 = vadd.f32 0.0, %v2026
        %v2028 = vpop.f32.mrf.mxu0
        %2029 = vmatprep.mubr.bf16.mxu0 0
        %2030 = vmatmul.mubr.bf16.gmra.mxu0 %v1074
        %v2031 = vpop.f32.mrf.mxu0
        %v2032 = vadd.f32 0.0, %v2031
        %v2033 = vpop.f32.mrf.mxu0
        %v2034 = vpop.f32.mrf.mxu0
        %v2035 = vadd.f32 0.0, %v2034
        %v2036 = vpop.f32.mrf.mxu0
        %2037 = vmatprep.mubr.bf16.mxu0 0
        %2038 = vmatmul.mubr.bf16.gmra.mxu0 %v1077
        %v2039 = vpop.f32.mrf.mxu0
        %v2040 = vadd.f32 0.0, %v2039
        %v2041 = vpop.f32.mrf.mxu0
        %v2042 = vpop.f32.mrf.mxu0
        %v2043 = vadd.f32 0.0, %v2042
        %v2044 = vpop.f32.mrf.mxu0
        %2045 = vdwg.mxu0
        %v2046 = vadd.f32 %v1850, %v1968
        %v2047 = vadd.f32 %v1853, %v1971
        %v2048 = vadd.f32 %v1858, %v1976
        %v2049 = vadd.f32 %v1861, %v1979
        %v2050 = vadd.f32 %v1866, %v1984
        %v2051 = vadd.f32 %v1869, %v1987
        %v2052 = vadd.f32 %v1874, %v1992
        %v2053 = vadd.f32 %v1877, %v1995
        %v2054 = vadd.f32 %v1882, %v2000
        %v2055 = vadd.f32 %v1885, %v2003
        %v2056 = vadd.f32 %v1890, %v2008
        %v2057 = vadd.f32 %v1893, %v2011
        %v2058 = vadd.f32 %v1898, %v2016
        %v2059 = vadd.f32 %v1901, %v2019
        %v2060 = vadd.f32 %v1906, %v2024
        %v2061 = vadd.f32 %v1909, %v2027
        %v2062 = vadd.f32 %v1914, %v2032
        %v2063 = vadd.f32 %v1917, %v2035
        %v2064 = vadd.f32 %v1922, %v2040
        %v2065 = vadd.f32 %v1925, %v2043
        %v2066 = vrot.slane %v2046, 1
        %v2067 = vrot.slane %v2047, 1
        %v2068 = vrot.slane %v2048, 1
        %v2069 = vrot.slane %v2049, 1
        %v2070 = vrot.slane %v2050, 1
        %v2071 = vrot.slane %v2051, 1
        %v2072 = vrot.slane %v2052, 1
        %v2073 = vrot.slane %v2053, 1
        %v2074 = vrot.slane %v2054, 1
        %v2075 = vrot.slane %v2055, 1
        %v2076 = vrot.slane %v2056, 1
        %v2077 = vrot.slane %v2057, 1
        %v2078 = vrot.slane %v2058, 1
        %v2079 = vrot.slane %v2059, 1
        %v2080 = vrot.slane %v2060, 1
        %v2081 = vrot.slane %v2061, 1
        %v2082 = vrot.slane %v2062, 1
        %v2083 = vrot.slane %v2063, 1
        %v2084 = vrot.slane %v2064, 1
        %v2085 = vrot.slane %v2065, 1
        %vm2086 = vcmp.lt.s32.totalorder %v537, 7
        %v2087 = vsel %vm2086, %v2084, %v2085
        %v2088 = vsel %vm2086, %v2083, %v2084
        %v2089 = vsel %vm2086, %v2082, %v2083
        %v2090 = vsel %vm2086, %v2081, %v2082
        %v2091 = vsel %vm2086, %v2080, %v2081
        %v2092 = vsel %vm2086, %v2079, %v2080
        %v2093 = vsel %vm2086, %v2078, %v2079
        %v2094 = vsel %vm2086, %v2077, %v2078
        %v2095 = vsel %vm2086, %v2076, %v2077
        %v2096 = vsel %vm2086, %v2075, %v2076
        %v2097 = vsel %vm2086, %v2074, %v2075
        %v2098 = vsel %vm2086, %v2073, %v2074
        %v2099 = vsel %vm2086, %v2072, %v2073
        %v2100 = vsel %vm2086, %v2071, %v2072
        %v2101 = vsel %vm2086, %v2070, %v2071
        %v2102 = vsel %vm2086, %v2069, %v2070
        %v2103 = vsel %vm2086, %v2068, %v2069
        %v2104 = vsel %vm2086, %v2067, %v2068
        %v2105 = vsel %vm2086, %v2066, %v2067
        %v2106 = vsel %vm2086, %v2085, %v2066
        %vm2107 = vcmp.eq.s32.totalorder %v537, 15
        %vm2108 = vcmp.eq.s32.totalorder %v538, 15
        %v2109 = vsel %vm2107, 0.0, %v2105
        %v2110 = vsel %vm2108, 0.0, %v2104
        %v2111 = vsel %vm2107, 0.0, %v2103
        %v2112 = vsel %vm2108, 0.0, %v2102
        %v2113 = vsel %vm2107, 0.0, %v2101
        %v2114 = vsel %vm2108, 0.0, %v2100
        %v2115 = vsel %vm2107, 0.0, %v2099
        %v2116 = vsel %vm2108, 0.0, %v2098
        %v2117 = vsel %vm2107, 0.0, %v2097
        %v2118 = vsel %vm2108, 0.0, %v2096
        %v2119 = vsel %vm2107, 0.0, %v2095
        %v2120 = vsel %vm2108, 0.0, %v2094
        %v2121 = vsel %vm2107, 0.0, %v2093
        %v2122 = vsel %vm2108, 0.0, %v2092
        %v2123 = vsel %vm2107, 0.0, %v2091
        %v2124 = vsel %vm2108, 0.0, %v2090
        %v2125 = vsel %vm2107, 0.0, %v2089
        %v2126 = vsel %vm2108, 0.0, %v2088
        %v2127 = vsel %vm2107, 0.0, %v2087
        %v2128 = vsel %vm2108, 0.0, %v2106
        %v2129 = vadd.f32 %v1672, %v2109
        %v2130 = vadd.f32 %v1673, %v2110
        %v2131 = vadd.f32 %v1674, %v2111
        %v2132 = vadd.f32 %v1675, %v2112
        %v2133 = vadd.f32 %v1676, %v2113
        %v2134 = vadd.f32 %v1677, %v2114
        %v2135 = vadd.f32 %v1678, %v2115
        %v2136 = vadd.f32 %v1679, %v2116
        %v2137 = vadd.f32 %v1680, %v2117
        %v2138 = vadd.f32 %v1681, %v2118
        %v2139 = vadd.f32 %v1682, %v2119
        %v2140 = vadd.f32 %v1683, %v2120
        %v2141 = vadd.f32 %v1684, %v2121
        %v2142 = vadd.f32 %v1685, %v2122
        %v2143 = vadd.f32 %v1686, %v2123
        %v2144 = vadd.f32 %v1687, %v2124
        %v2145 = vadd.f32 %v1688, %v2125
        %v2146 = vadd.f32 %v1689, %v2126
        %v2147 = vadd.f32 %v1690, %v2127
        %v2148 = vadd.f32 %v1691, %v2128
        %s2149 = sld [smem:[#allocation3]]
        %vm2150 = vcmp.gt.f32.partialorder %v2129, 0.0
        %vm2151 = vcmp.gt.f32.partialorder %v2130, 0.0
        %vm2152 = vcmp.gt.f32.partialorder %v2131, 0.0
        %vm2153 = vcmp.gt.f32.partialorder %v2132, 0.0
        %vm2154 = vcmp.gt.f32.partialorder %v2133, 0.0
        %vm2155 = vcmp.gt.f32.partialorder %v2134, 0.0
        %vm2156 = vcmp.gt.f32.partialorder %v2135, 0.0
        %vm2157 = vcmp.gt.f32.partialorder %v2136, 0.0
        %vm2158 = vcmp.gt.f32.partialorder %v2137, 0.0
        %vm2159 = vcmp.gt.f32.partialorder %v2138, 0.0
        %vm2160 = vcmp.gt.f32.partialorder %v2139, 0.0
        %vm2161 = vcmp.gt.f32.partialorder %v2140, 0.0
        %vm2162 = vcmp.gt.f32.partialorder %v2141, 0.0
        %vm2163 = vcmp.gt.f32.partialorder %v2142, 0.0
        %vm2164 = vcmp.gt.f32.partialorder %v2143, 0.0
        %vm2165 = vcmp.gt.f32.partialorder %v2144, 0.0
        %vm2166 = vcmp.gt.f32.partialorder %v2145, 0.0
        %vm2167 = vcmp.gt.f32.partialorder %v2146, 0.0
        %vm2168 = vcmp.gt.f32.partialorder %v2147, 0.0
        %vm2169 = vcmp.gt.f32.partialorder %v2148, 0.0
        %v2170 = vstv %s2149
        %v2171 = vmul.f32 %v2170, %v2129
        %v2172 = vmul.f32 %v2170, %v2130
        %v2173 = vmul.f32 %v2170, %v2131
        %v2174 = vmul.f32 %v2170, %v2132
        %v2175 = vmul.f32 %v2170, %v2133
        %v2176 = vmul.f32 %v2170, %v2134
        %v2177 = vmul.f32 %v2170, %v2135
        %v2178 = vmul.f32 %v2170, %v2136
        %v2179 = vmul.f32 %v2170, %v2137
        %v2180 = vmul.f32 %v2170, %v2138
        %v2181 = vmul.f32 %v2170, %v2139
        %v2182 = vmul.f32 %v2170, %v2140
        %v2183 = vmul.f32 %v2170, %v2141
        %v2184 = vmul.f32 %v2170, %v2142
        %v2185 = vmul.f32 %v2170, %v2143
        %v2186 = vmul.f32 %v2170, %v2144
        %v2187 = vmul.f32 %v2170, %v2145
        %v2188 = vmul.f32 %v2170, %v2146
        %v2189 = vmul.f32 %v2170, %v2147
        %v2190 = vmul.f32 %v2170, %v2148
        %v2191 = vsel %vm2150, %v2129, %v2171
        %v2192 = vsel %vm2151, %v2130, %v2172
        %v2193 = vsel %vm2152, %v2131, %v2173
        %v2194 = vsel %vm2153, %v2132, %v2174
        %v2195 = vsel %vm2154, %v2133, %v2175
        %v2196 = vsel %vm2155, %v2134, %v2176
        %v2197 = vsel %vm2156, %v2135, %v2177
        %v2198 = vsel %vm2157, %v2136, %v2178
        %v2199 = vsel %vm2158, %v2137, %v2179
        %v2200 = vsel %vm2159, %v2138, %v2180
        %v2201 = vsel %vm2160, %v2139, %v2181
        %v2202 = vsel %vm2161, %v2140, %v2182
        %v2203 = vsel %vm2162, %v2141, %v2183
        %v2204 = vsel %vm2163, %v2142, %v2184
        %v2205 = vsel %vm2164, %v2143, %v2185
        %v2206 = vsel %vm2165, %v2144, %v2186
        %v2207 = vsel %vm2166, %v2145, %v2187
        %v2208 = vsel %vm2167, %v2146, %v2188
        %v2209 = vsel %vm2168, %v2147, %v2189
        %v2210 = vsel %vm2169, %v2148, %v2190
        %s2211 = scalar_select %p520, 1, 0
        %v2212 = vstv %s2211
        %vm2213 = vcmp.eq.s32.totalorder %v2212, 1
        %v2214 = vsel %vm2213, 0.0, %v2191
        %v2215 = vsel %vm2213, 0.0, %v2192
        %v2216 = vsel 0, 0.0, %v2193
        %v2217 = vsel 0, 0.0, %v2194
        %v2218 = vsel 0, 0.0, %v2195
        %v2219 = vsel 0, 0.0, %v2196
        %v2220 = vsel 0, 0.0, %v2197
        %v2221 = vsel 0, 0.0, %v2198
        %v2222 = vsel 0, 0.0, %v2199
        %v2223 = vsel 0, 0.0, %v2200
        %v2224 = vsel 0, 0.0, %v2201
        %v2225 = vsel 0, 0.0, %v2202
        %v2226 = vsel 0, 0.0, %v2203
        %v2227 = vsel 0, 0.0, %v2204
        %v2228 = vsel 0, 0.0, %v2205
        %v2229 = vsel 0, 0.0, %v2206
        %v2230 = vsel 0, 0.0, %v2207
        %v2231 = vsel 0, 0.0, %v2208
        %v2232 = vsel 0, 0.0, %v2209
        %v2233 = vsel 0, 0.0, %v2210
        %s2234 = scalar_select %p528, 1, 0
        %v2235 = vstv %s2234
        %vm2236 = vcmp.eq.s32.totalorder %v2235, 1
        %v2237 = vsel 0, 0.0, %v2214
        %v2238 = vsel 0, 0.0, %v2215
        %v2239 = vsel 0, 0.0, %v2216
        %v2240 = vsel 0, 0.0, %v2217
        %v2241 = vsel 0, 0.0, %v2218
        %v2242 = vsel 0, 0.0, %v2219
        %v2243 = vsel 0, 0.0, %v2220
        %v2244 = vsel 0, 0.0, %v2221
        %v2245 = vsel 0, 0.0, %v2222
        %v2246 = vsel 0, 0.0, %v2223
        %v2247 = vsel 0, 0.0, %v2224
        %v2248 = vsel 0, 0.0, %v2225
        %v2249 = vsel 0, 0.0, %v2226
        %v2250 = vsel 0, 0.0, %v2227
        %v2251 = vsel 0, 0.0, %v2228
        %v2252 = vsel 0, 0.0, %v2229
        %v2253 = vsel 0, 0.0, %v2230
        %v2254 = vsel 0, 0.0, %v2231
        %v2255 = vsel %vm2236, 0.0, %v2232
        %v2256 = vsel %vm2236, 0.0, %v2233
        %v2257 = vpack.c.bf16 %v2238, %v2237
        %v2258 = vpack.c.bf16 %v2240, %v2239
        %v2259 = vpack.c.bf16 %v2242, %v2241
        %v2260 = vpack.c.bf16 %v2244, %v2243
        %v2261 = vpack.c.bf16 %v2246, %v2245
        %v2262 = vpack.c.bf16 %v2248, %v2247
        %v2263 = vpack.c.bf16 %v2250, %v2249
        %v2264 = vpack.c.bf16 %v2252, %v2251
        %v2265 = vpack.c.bf16 %v2254, %v2253
        %v2266 = vpack.c.bf16 %v2256, %v2255
        %v2277 = vunpack.c.l.b16 %v2257
        %v2278 = vunpack.c.h.b16 %v2257
        %v2279 = vunpack.c.l.b16 %v2258
        %v2280 = vunpack.c.h.b16 %v2258
        %v2281 = vunpack.c.l.b16 %v2259
        %v2282 = vunpack.c.h.b16 %v2259
        %v2283 = vunpack.c.l.b16 %v2260
        %v2284 = vunpack.c.h.b16 %v2260
        %v2285 = vunpack.c.l.b16 %v2261
        %v2286 = vunpack.c.h.b16 %v2261
        %v2287 = vunpack.c.l.b16 %v2262
        %v2288 = vunpack.c.h.b16 %v2262
        %v2289 = vunpack.c.l.b16 %v2263
        %v2290 = vunpack.c.h.b16 %v2263
        %v2291 = vunpack.c.l.b16 %v2264
        %v2292 = vunpack.c.h.b16 %v2264
        %v2293 = vunpack.c.l.b16 %v2265
        %v2294 = vunpack.c.h.b16 %v2265
        %v2295 = vunpack.c.l.b16 %v2266
        %v2296 = vunpack.c.h.b16 %v2266
        %v2297 = vpack.c.b16 %v2277, %v2277
        %v2298 = vpack.c.b16 %v2278, %v2278
        %v2299 = vpack.c.b16 %v2279, %v2279
        %v2300 = vpack.c.b16 %v2280, %v2280
        %v2301 = vpack.c.b16 %v2281, %v2281
        %v2302 = vpack.c.b16 %v2282, %v2282
        %v2303 = vpack.c.b16 %v2283, %v2283
        %v2304 = vpack.c.b16 %v2284, %v2284
        %v2305 = vpack.c.b16 %v2285, %v2285
        %v2306 = vpack.c.b16 %v2286, %v2286
        %v2307 = vpack.c.b16 %v2287, %v2287
        %v2308 = vpack.c.b16 %v2288, %v2288
        %v2309 = vpack.c.b16 %v2289, %v2289
        %v2310 = vpack.c.b16 %v2290, %v2290
        %v2311 = vpack.c.b16 %v2291, %v2291
        %v2312 = vpack.c.b16 %v2292, %v2292
        %v2313 = vpack.c.b16 %v2293, %v2293
        %v2314 = vpack.c.b16 %v2294, %v2294
        %v2315 = vpack.c.b16 %v2295, %v2295
        %v2316 = vpack.c.b16 %v2296, %v2296
        %2337 = vst.msk [vmem:[#allocation2] sm:$0xf] %vm486, %v2297
        %2338 = vst.msk [vmem:[#allocation2 + $0x4] sm:$0xf] %vm486, %v2298
        %2339 = vst.msk [vmem:[#allocation2 + $0x8] sm:$0xf] %vm486, %v2299
        %2340 = vst.msk [vmem:[#allocation2 + $0xc] sm:$0xf] %vm486, %v2300
        %2341 = vst.msk [vmem:[#allocation2 + $0x10] sm:$0xf] %vm486, %v2301
        %2342 = vst.msk [vmem:[#allocation2 + $0x14] sm:$0xf] %vm486, %v2302
        %2343 = vst.msk [vmem:[#allocation2 + $0x18] sm:$0xf] %vm486, %v2303
        %2344 = vst.msk [vmem:[#allocation2 + $0x1c] sm:$0xf] %vm486, %v2304
        %2345 = vst.msk [vmem:[#allocation2 + $0x20] sm:$0xf] %vm486, %v2305
        %2346 = vst.msk [vmem:[#allocation2 + $0x24] sm:$0xf] %vm486, %v2306
        %2347 = vst.msk [vmem:[#allocation2 + $0x28] sm:$0xf] %vm486, %v2307
        %2348 = vst.msk [vmem:[#allocation2 + $0x2c] sm:$0xf] %vm486, %v2308
        %2349 = vst.msk [vmem:[#allocation2 + $0x30] sm:$0xf] %vm486, %v2309
        %2350 = vst.msk [vmem:[#allocation2 + $0x34] sm:$0xf] %vm486, %v2310
        %2351 = vst.msk [vmem:[#allocation2 + $0x38] sm:$0xf] %vm486, %v2311
        %2352 = vst.msk [vmem:[#allocation2 + $0x3c] sm:$0xf] %vm486, %v2312
        %2353 = vst.msk [vmem:[#allocation2 + $0x40] sm:$0xf] %vm486, %v2313
        %2354 = vst.msk [vmem:[#allocation2 + $0x44] sm:$0xf] %vm486, %v2314
        %2355 = vst.msk [vmem:[#allocation2 + $0x48] sm:$0xf] %vm486, %v2315
        %2356 = vst.msk [vmem:[#allocation2 + $0x4c] sm:$0xf] %vm486, %v2316
        %v2357 = vld [vmem:[#allocation2] sm:$0xf]
        %v2358 = vld [vmem:[#allocation2 + $0x4] sm:$0xf]
        %v2359 = vld [vmem:[#allocation2 + $0x8] sm:$0xf]
        %v2360 = vld [vmem:[#allocation2 + $0xc] sm:$0xf]
        %v2361 = vld [vmem:[#allocation2 + $0x10] sm:$0xf]
        %v2362 = vld [vmem:[#allocation2 + $0x14] sm:$0xf]
        %v2363 = vld [vmem:[#allocation2 + $0x18] sm:$0xf]
        %v2364 = vld [vmem:[#allocation2 + $0x1c] sm:$0xf]
        %v2365 = vld [vmem:[#allocation2 + $0x20] sm:$0xf]
        %v2366 = vld [vmem:[#allocation2 + $0x24] sm:$0xf]
        %v2367 = vld [vmem:[#allocation2 + $0x28] sm:$0xf]
        %v2368 = vld [vmem:[#allocation2 + $0x2c] sm:$0xf]
        %v2369 = vld [vmem:[#allocation2 + $0x30] sm:$0xf]
        %v2370 = vld [vmem:[#allocation2 + $0x34] sm:$0xf]
        %v2371 = vld [vmem:[#allocation2 + $0x38] sm:$0xf]
        %v2372 = vld [vmem:[#allocation2 + $0x3c] sm:$0xf]
        %v2373 = vld [vmem:[%s5] sm:$0xf]
        %v2374 = vld [vmem:[%s560] sm:$0xf]
        %v2375 = vld [vmem:[%s560 + $0x4] sm:$0xf]
        %v2376 = vld [vmem:[%s560 + $0x8] sm:$0xf]
        %v2377 = vld [vmem:[%s560 + $0xc] sm:$0xf]
        %v2378 = vld [vmem:[%s560 + $0x10] sm:$0xf]
        %v2379 = vld [vmem:[%s560 + $0x14] sm:$0xf]
        %v2380 = vld [vmem:[%s560 + $0x18] sm:$0xf]
        %v2381 = vld [vmem:[%s560 + $0x1c] sm:$0xf]
        %v2382 = vld [vmem:[%s560 + $0x20] sm:$0xf]
        %v2383 = vld [vmem:[%s560 + $0x24] sm:$0xf]
        %v2384 = vld [vmem:[%s560 + $0x28] sm:$0xf]
        %v2385 = vld [vmem:[%s560 + $0x2c] sm:$0xf]
        %v2386 = vld [vmem:[%s560 + $0x30] sm:$0xf]
        %v2387 = vld [vmem:[%s560 + $0x34] sm:$0xf]
        %v2388 = vld [vmem:[%s560 + $0x38] sm:$0xf]
        %v2389 = vld [vmem:[%s560 + $0x3c] sm:$0xf]
        %s2390 = scalar_lea.vmem %s5, 12
        %v2391 = vld [vmem:[%s2390] sm:$0xf]
        %v2408 = vunpack.c.l.b16 %v2374
        %v2409 = vunpack.c.l.b16 %v2375
        %v2410 = vunpack.c.l.b16 %v2376
        %v2411 = vunpack.c.l.b16 %v2377
        %v2412 = vunpack.c.l.b16 %v2378
        %v2413 = vunpack.c.l.b16 %v2379
        %v2414 = vunpack.c.l.b16 %v2380
        %v2415 = vunpack.c.l.b16 %v2381
        %v2416 = vunpack.c.l.b16 %v2382
        %v2417 = vunpack.c.l.b16 %v2383
        %v2418 = vunpack.c.l.b16 %v2384
        %v2419 = vunpack.c.l.b16 %v2385
        %v2420 = vunpack.c.l.b16 %v2386
        %v2421 = vunpack.c.l.b16 %v2387
        %v2422 = vunpack.c.l.b16 %v2388
        %v2423 = vunpack.c.l.b16 %v2389
        %v2424 = vpack.c.b16 %v2409, %v2408
        %v2425 = vpack.c.b16 %v2411, %v2410
        %v2426 = vpack.c.b16 %v2413, %v2412
        %v2427 = vpack.c.b16 %v2415, %v2414
        %v2428 = vpack.c.b16 %v2417, %v2416
        %v2429 = vpack.c.b16 %v2419, %v2418
        %v2430 = vpack.c.b16 %v2421, %v2420
        %v2431 = vpack.c.b16 %v2423, %v2422
        %v2433 = vsel %vm633, %v2424, 0
        %v2436 = vsel %vm633, %v2425, 0
        %v2439 = vsel %vm633, %v2426, 0
        %v2442 = vsel %vm633, %v2427, 0
        %v2445 = vsel %vm633, %v2428, 0
        %v2448 = vsel %vm633, %v2429, 0
        %v2451 = vsel %vm633, %v2430, 0
        %v2454 = vsel %vm633, %v2431, 0
        %v2457 = vsel %vm664, %v2391, 0
        %2459 = vmatprep.subr.bf16.mxu0 0
        %2460 = vmatpush1.bf16.msra.mxu0 0
        %2461 = vmatprep.subr.bf16.mxu0 0
        %2462 = vmatpush1.bf16.msra.mxu0 0
        %2463 = vmatprep.subr.bf16.mxu0 0
        %2464 = vmatpush1.bf16.msra.mxu0 0
        %2465 = vmatprep.subr.bf16.mxu0 0
        %2466 = vmatpush1.bf16.msra.mxu0 0
        %2467 = vmatprep.subr.bf16.mxu0 0
        %2468 = vmatpush1.bf16.msra.mxu0 0
        %2469 = vmatprep.subr.bf16.mxu0 0
        %2470 = vmatpush1.bf16.msra.mxu0 0
        %2471 = vmatprep.subr.bf16.mxu0 0
        %2472 = vmatpush1.bf16.msra.mxu0 0
        %2473 = vmatprep.subr.bf16.mxu0 0
        %2474 = vmatpush1.bf16.msra.mxu0 %v2457
        %2475 = vmatprep.subr.bf16.mxu0 0
        %2476 = vmatpush2.bf16.msra.mxu0 0
        %2477 = vmatprep.subr.bf16.mxu0 0
        %2478 = vmatpush2.bf16.msra.mxu0 0
        %2479 = vmatprep.subr.bf16.mxu0 0
        %2480 = vmatpush2.bf16.msra.mxu0 0
        %2481 = vmatprep.subr.bf16.mxu0 0
        %2482 = vmatpush2.bf16.msra.mxu0 0
        %2483 = vmatprep.subr.bf16.mxu0 0
        %2484 = vmatpush2.bf16.msra.mxu0 0
        %2485 = vmatprep.subr.bf16.mxu0 0
        %2486 = vmatpush2.bf16.msra.mxu0 0
        %2487 = vmatprep.subr.bf16.mxu0 0
        %2488 = vmatpush2.bf16.msra.mxu0 0
        %2489 = vmatprep.subr.bf16.mxu0 0
        %2490 = vmatpush2.bf16.msra.mxu0 0
        %2491 = vmatprep.mubr.bf16.mxu0 0
        %2492 = vmatmul.mubr.bf16.gmra.mxu0 %v2433
        %v2493 = vpop.f32.mrf.mxu0
        %v2494 = vadd.f32 0.0, %v2493
        %v2495 = vpop.f32.mrf.mxu0
        %v2496 = vpop.f32.mrf.mxu0
        %v2497 = vadd.f32 0.0, %v2496
        %v2498 = vpop.f32.mrf.mxu0
        %2499 = vmatprep.mubr.bf16.mxu0 0
        %2500 = vmatmul.mubr.bf16.gmra.mxu0 %v2436
        %v2501 = vpop.f32.mrf.mxu0
        %v2502 = vadd.f32 0.0, %v2501
        %v2503 = vpop.f32.mrf.mxu0
        %v2504 = vpop.f32.mrf.mxu0
        %v2505 = vadd.f32 0.0, %v2504
        %v2506 = vpop.f32.mrf.mxu0
        %2507 = vmatprep.mubr.bf16.mxu0 0
        %2508 = vmatmul.mubr.bf16.gmra.mxu0 %v2439
        %v2509 = vpop.f32.mrf.mxu0
        %v2510 = vadd.f32 0.0, %v2509
        %v2511 = vpop.f32.mrf.mxu0
        %v2512 = vpop.f32.mrf.mxu0
        %v2513 = vadd.f32 0.0, %v2512
        %v2514 = vpop.f32.mrf.mxu0
        %2515 = vmatprep.mubr.bf16.mxu0 0
        %2516 = vmatmul.mubr.bf16.gmra.mxu0 %v2442
        %v2517 = vpop.f32.mrf.mxu0
        %v2518 = vadd.f32 0.0, %v2517
        %v2519 = vpop.f32.mrf.mxu0
        %v2520 = vpop.f32.mrf.mxu0
        %v2521 = vadd.f32 0.0, %v2520
        %v2522 = vpop.f32.mrf.mxu0
        %2523 = vmatprep.mubr.bf16.mxu0 0
        %2524 = vmatmul.mubr.bf16.gmra.mxu0 %v2445
        %v2525 = vpop.f32.mrf.mxu0
        %v2526 = vadd.f32 0.0, %v2525
        %v2527 = vpop.f32.mrf.mxu0
        %v2528 = vpop.f32.mrf.mxu0
        %v2529 = vadd.f32 0.0, %v2528
        %v2530 = vpop.f32.mrf.mxu0
        %2531 = vmatprep.mubr.bf16.mxu0 0
        %2532 = vmatmul.mubr.bf16.gmra.mxu0 %v2448
        %v2533 = vpop.f32.mrf.mxu0
        %v2534 = vadd.f32 0.0, %v2533
        %v2535 = vpop.f32.mrf.mxu0
        %v2536 = vpop.f32.mrf.mxu0
        %v2537 = vadd.f32 0.0, %v2536
        %v2538 = vpop.f32.mrf.mxu0
        %2539 = vmatprep.mubr.bf16.mxu0 0
        %2540 = vmatmul.mubr.bf16.gmra.mxu0 %v2451
        %v2541 = vpop.f32.mrf.mxu0
        %v2542 = vadd.f32 0.0, %v2541
        %v2543 = vpop.f32.mrf.mxu0
        %v2544 = vpop.f32.mrf.mxu0
        %v2545 = vadd.f32 0.0, %v2544
        %v2546 = vpop.f32.mrf.mxu0
        %2547 = vmatprep.mubr.bf16.mxu0 0
        %2548 = vmatmul.mubr.bf16.gmra.mxu0 %v2454
        %v2549 = vpop.f32.mrf.mxu0
        %v2550 = vadd.f32 0.0, %v2549
        %v2551 = vpop.f32.mrf.mxu0
        %v2552 = vpop.f32.mrf.mxu0
        %v2553 = vadd.f32 0.0, %v2552
        %v2554 = vpop.f32.mrf.mxu0
        %2555 = vdwg.mxu0
        %v2572 = vunpack.c.l.b16 %v2357
        %v2573 = vunpack.c.l.b16 %v2358
        %v2574 = vunpack.c.l.b16 %v2359
        %v2575 = vunpack.c.l.b16 %v2360
        %v2576 = vunpack.c.l.b16 %v2361
        %v2577 = vunpack.c.l.b16 %v2362
        %v2578 = vunpack.c.l.b16 %v2363
        %v2579 = vunpack.c.l.b16 %v2364
        %v2580 = vunpack.c.l.b16 %v2365
        %v2581 = vunpack.c.l.b16 %v2366
        %v2582 = vunpack.c.l.b16 %v2367
        %v2583 = vunpack.c.l.b16 %v2368
        %v2584 = vunpack.c.l.b16 %v2369
        %v2585 = vunpack.c.l.b16 %v2370
        %v2586 = vunpack.c.l.b16 %v2371
        %v2587 = vunpack.c.l.b16 %v2372
        %v2588 = vpack.c.b16 %v2573, %v2572
        %v2589 = vpack.c.b16 %v2575, %v2574
        %v2590 = vpack.c.b16 %v2577, %v2576
        %v2591 = vpack.c.b16 %v2579, %v2578
        %v2592 = vpack.c.b16 %v2581, %v2580
        %v2593 = vpack.c.b16 %v2583, %v2582
        %v2594 = vpack.c.b16 %v2585, %v2584
        %v2595 = vpack.c.b16 %v2587, %v2586
        %v2597 = vsel %vm633, %v2588, 0
        %v2600 = vsel %vm633, %v2589, 0
        %v2603 = vsel %vm633, %v2590, 0
        %v2606 = vsel %vm633, %v2591, 0
        %v2609 = vsel %vm633, %v2592, 0
        %v2612 = vsel %vm633, %v2593, 0
        %v2615 = vsel %vm633, %v2594, 0
        %v2618 = vsel %vm633, %v2595, 0
        %v2621 = vsel %vm664, %v2373, 0
        %2623 = vmatprep.subr.bf16.mxu0 0
        %2624 = vmatpush1.bf16.msra.mxu0 0
        %2625 = vmatprep.subr.bf16.mxu0 0
        %2626 = vmatpush1.bf16.msra.mxu0 0
        %2627 = vmatprep.subr.bf16.mxu0 0
        %2628 = vmatpush1.bf16.msra.mxu0 0
        %2629 = vmatprep.subr.bf16.mxu0 0
        %2630 = vmatpush1.bf16.msra.mxu0 0
        %2631 = vmatprep.subr.bf16.mxu0 0
        %2632 = vmatpush1.bf16.msra.mxu0 0
        %2633 = vmatprep.subr.bf16.mxu0 0
        %2634 = vmatpush1.bf16.msra.mxu0 0
        %2635 = vmatprep.subr.bf16.mxu0 0
        %2636 = vmatpush1.bf16.msra.mxu0 0
        %2637 = vmatprep.subr.bf16.mxu0 0
        %2638 = vmatpush1.bf16.msra.mxu0 %v2621
        %2639 = vmatprep.subr.bf16.mxu0 0
        %2640 = vmatpush2.bf16.msra.mxu0 0
        %2641 = vmatprep.subr.bf16.mxu0 0
        %2642 = vmatpush2.bf16.msra.mxu0 0
        %2643 = vmatprep.subr.bf16.mxu0 0
        %2644 = vmatpush2.bf16.msra.mxu0 0
        %2645 = vmatprep.subr.bf16.mxu0 0
        %2646 = vmatpush2.bf16.msra.mxu0 0
        %2647 = vmatprep.subr.bf16.mxu0 0
        %2648 = vmatpush2.bf16.msra.mxu0 0
        %2649 = vmatprep.subr.bf16.mxu0 0
        %2650 = vmatpush2.bf16.msra.mxu0 0
        %2651 = vmatprep.subr.bf16.mxu0 0
        %2652 = vmatpush2.bf16.msra.mxu0 0
        %2653 = vmatprep.subr.bf16.mxu0 0
        %2654 = vmatpush2.bf16.msra.mxu0 0
        %2655 = vmatprep.mubr.bf16.mxu0 0
        %2656 = vmatmul.mubr.bf16.gmra.mxu0 %v2597
        %v2657 = vpop.f32.mrf.mxu0
        %v2658 = vadd.f32 %v2494, %v2657
        %v2659 = vpop.f32.mrf.mxu0
        %v2660 = vpop.f32.mrf.mxu0
        %v2661 = vadd.f32 %v2497, %v2660
        %v2662 = vpop.f32.mrf.mxu0
        %2663 = vmatprep.mubr.bf16.mxu0 0
        %2664 = vmatmul.mubr.bf16.gmra.mxu0 %v2600
        %v2665 = vpop.f32.mrf.mxu0
        %v2666 = vadd.f32 %v2502, %v2665
        %v2667 = vpop.f32.mrf.mxu0
        %v2668 = vpop.f32.mrf.mxu0
        %v2669 = vadd.f32 %v2505, %v2668
        %v2670 = vpop.f32.mrf.mxu0
        %2671 = vmatprep.mubr.bf16.mxu0 0
        %2672 = vmatmul.mubr.bf16.gmra.mxu0 %v2603
        %v2673 = vpop.f32.mrf.mxu0
        %v2674 = vadd.f32 %v2510, %v2673
        %v2675 = vpop.f32.mrf.mxu0
        %v2676 = vpop.f32.mrf.mxu0
        %v2677 = vadd.f32 %v2513, %v2676
        %v2678 = vpop.f32.mrf.mxu0
        %2679 = vmatprep.mubr.bf16.mxu0 0
        %2680 = vmatmul.mubr.bf16.gmra.mxu0 %v2606
        %v2681 = vpop.f32.mrf.mxu0
        %v2682 = vadd.f32 %v2518, %v2681
        %v2683 = vpop.f32.mrf.mxu0
        %v2684 = vpop.f32.mrf.mxu0
        %v2685 = vadd.f32 %v2521, %v2684
        %v2686 = vpop.f32.mrf.mxu0
        %2687 = vmatprep.mubr.bf16.mxu0 0
        %2688 = vmatmul.mubr.bf16.gmra.mxu0 %v2609
        %v2689 = vpop.f32.mrf.mxu0
        %v2690 = vadd.f32 %v2526, %v2689
        %v2691 = vpop.f32.mrf.mxu0
        %v2692 = vpop.f32.mrf.mxu0
        %v2693 = vadd.f32 %v2529, %v2692
        %v2694 = vpop.f32.mrf.mxu0
        %2695 = vmatprep.mubr.bf16.mxu0 0
        %2696 = vmatmul.mubr.bf16.gmra.mxu0 %v2612
        %v2697 = vpop.f32.mrf.mxu0
        %v2698 = vadd.f32 %v2534, %v2697
        %v2699 = vpop.f32.mrf.mxu0
        %v2700 = vpop.f32.mrf.mxu0
        %v2701 = vadd.f32 %v2537, %v2700
        %v2702 = vpop.f32.mrf.mxu0
        %2703 = vmatprep.mubr.bf16.mxu0 0
        %2704 = vmatmul.mubr.bf16.gmra.mxu0 %v2615
        %v2705 = vpop.f32.mrf.mxu0
        %v2706 = vadd.f32 %v2542, %v2705
        %v2707 = vpop.f32.mrf.mxu0
        %v2708 = vpop.f32.mrf.mxu0
        %v2709 = vadd.f32 %v2545, %v2708
        %v2710 = vpop.f32.mrf.mxu0
        %2711 = vmatprep.mubr.bf16.mxu0 0
        %2712 = vmatmul.mubr.bf16.gmra.mxu0 %v2618
        %v2713 = vpop.f32.mrf.mxu0
        %v2714 = vadd.f32 %v2550, %v2713
        %v2715 = vpop.f32.mrf.mxu0
        %v2716 = vpop.f32.mrf.mxu0
        %v2717 = vadd.f32 %v2553, %v2716
        %v2718 = vpop.f32.mrf.mxu0
        %2719 = vdwg.mxu0
        %v2720 = vld [vmem:[%s485] sm:$0xf]
        %v2721 = vld [vmem:[%s485 + $0x4] sm:$0xf]
        %v2722 = vld [vmem:[%s485 + $0x8] sm:$0xf]
        %v2723 = vld [vmem:[%s485 + $0xc] sm:$0xf]
        %v2724 = vld [vmem:[%s485 + $0x10] sm:$0xf]
        %v2725 = vld [vmem:[%s485 + $0x14] sm:$0xf]
        %v2726 = vld [vmem:[%s485 + $0x18] sm:$0xf]
        %v2727 = vld [vmem:[%s485 + $0x1c] sm:$0xf]
        %v2728 = vld [vmem:[%s485 + $0x20] sm:$0xf]
        %v2729 = vld [vmem:[%s485 + $0x24] sm:$0xf]
        %v2730 = vld [vmem:[%s485 + $0x28] sm:$0xf]
        %v2731 = vld [vmem:[%s485 + $0x2c] sm:$0xf]
        %v2732 = vld [vmem:[%s485 + $0x30] sm:$0xf]
        %v2733 = vld [vmem:[%s485 + $0x34] sm:$0xf]
        %v2734 = vld [vmem:[%s485 + $0x38] sm:$0xf]
        %v2735 = vld [vmem:[%s485 + $0x3c] sm:$0xf]
        %s2736 = scalar_lea.vmem %s5, 24
        %v2737 = vld [vmem:[%s2736] sm:$0xf]
        %v2754 = vunpack.c.l.b16 %v2720
        %v2755 = vunpack.c.l.b16 %v2721
        %v2756 = vunpack.c.l.b16 %v2722
        %v2757 = vunpack.c.l.b16 %v2723
        %v2758 = vunpack.c.l.b16 %v2724
        %v2759 = vunpack.c.l.b16 %v2725
        %v2760 = vunpack.c.l.b16 %v2726
        %v2761 = vunpack.c.l.b16 %v2727
        %v2762 = vunpack.c.l.b16 %v2728
        %v2763 = vunpack.c.l.b16 %v2729
        %v2764 = vunpack.c.l.b16 %v2730
        %v2765 = vunpack.c.l.b16 %v2731
        %v2766 = vunpack.c.l.b16 %v2732
        %v2767 = vunpack.c.l.b16 %v2733
        %v2768 = vunpack.c.l.b16 %v2734
        %v2769 = vunpack.c.l.b16 %v2735
        %v2770 = vpack.c.b16 %v2755, %v2754
        %v2771 = vpack.c.b16 %v2757, %v2756
        %v2772 = vpack.c.b16 %v2759, %v2758
        %v2773 = vpack.c.b16 %v2761, %v2760
        %v2774 = vpack.c.b16 %v2763, %v2762
        %v2775 = vpack.c.b16 %v2765, %v2764
        %v2776 = vpack.c.b16 %v2767, %v2766
        %v2777 = vpack.c.b16 %v2769, %v2768
        %v2779 = vsel %vm633, %v2770, 0
        %v2782 = vsel %vm633, %v2771, 0
        %v2785 = vsel %vm633, %v2772, 0
        %v2788 = vsel %vm633, %v2773, 0
        %v2791 = vsel %vm633, %v2774, 0
        %v2794 = vsel %vm633, %v2775, 0
        %v2797 = vsel %vm633, %v2776, 0
        %v2800 = vsel %vm633, %v2777, 0
        %v2803 = vsel %vm664, %v2737, 0
        %2805 = vmatprep.subr.bf16.mxu0 0
        %2806 = vmatpush1.bf16.msra.mxu0 0
        %2807 = vmatprep.subr.bf16.mxu0 0
        %2808 = vmatpush1.bf16.msra.mxu0 0
        %2809 = vmatprep.subr.bf16.mxu0 0
        %2810 = vmatpush1.bf16.msra.mxu0 0
        %2811 = vmatprep.subr.bf16.mxu0 0
        %2812 = vmatpush1.bf16.msra.mxu0 0
        %2813 = vmatprep.subr.bf16.mxu0 0
        %2814 = vmatpush1.bf16.msra.mxu0 0
        %2815 = vmatprep.subr.bf16.mxu0 0
        %2816 = vmatpush1.bf16.msra.mxu0 0
        %2817 = vmatprep.subr.bf16.mxu0 0
        %2818 = vmatpush1.bf16.msra.mxu0 0
        %2819 = vmatprep.subr.bf16.mxu0 0
        %2820 = vmatpush1.bf16.msra.mxu0 %v2803
        %2821 = vmatprep.subr.bf16.mxu0 0
        %2822 = vmatpush2.bf16.msra.mxu0 0
        %2823 = vmatprep.subr.bf16.mxu0 0
        %2824 = vmatpush2.bf16.msra.mxu0 0
        %2825 = vmatprep.subr.bf16.mxu0 0
        %2826 = vmatpush2.bf16.msra.mxu0 0
        %2827 = vmatprep.subr.bf16.mxu0 0
        %2828 = vmatpush2.bf16.msra.mxu0 0
        %2829 = vmatprep.subr.bf16.mxu0 0
        %2830 = vmatpush2.bf16.msra.mxu0 0
        %2831 = vmatprep.subr.bf16.mxu0 0
        %2832 = vmatpush2.bf16.msra.mxu0 0
        %2833 = vmatprep.subr.bf16.mxu0 0
        %2834 = vmatpush2.bf16.msra.mxu0 0
        %2835 = vmatprep.subr.bf16.mxu0 0
        %2836 = vmatpush2.bf16.msra.mxu0 0
        %2837 = vmatprep.mubr.bf16.mxu0 0
        %2838 = vmatmul.mubr.bf16.gmra.mxu0 %v2779
        %v2839 = vpop.f32.mrf.mxu0
        %v2840 = vadd.f32 0.0, %v2839
        %v2841 = vpop.f32.mrf.mxu0
        %v2842 = vpop.f32.mrf.mxu0
        %v2843 = vadd.f32 0.0, %v2842
        %v2844 = vpop.f32.mrf.mxu0
        %2845 = vmatprep.mubr.bf16.mxu0 0
        %2846 = vmatmul.mubr.bf16.gmra.mxu0 %v2782
        %v2847 = vpop.f32.mrf.mxu0
        %v2848 = vadd.f32 0.0, %v2847
        %v2849 = vpop.f32.mrf.mxu0
        %v2850 = vpop.f32.mrf.mxu0
        %v2851 = vadd.f32 0.0, %v2850
        %v2852 = vpop.f32.mrf.mxu0
        %2853 = vmatprep.mubr.bf16.mxu0 0
        %2854 = vmatmul.mubr.bf16.gmra.mxu0 %v2785
        %v2855 = vpop.f32.mrf.mxu0
        %v2856 = vadd.f32 0.0, %v2855
        %v2857 = vpop.f32.mrf.mxu0
        %v2858 = vpop.f32.mrf.mxu0
        %v2859 = vadd.f32 0.0, %v2858
        %v2860 = vpop.f32.mrf.mxu0
        %2861 = vmatprep.mubr.bf16.mxu0 0
        %2862 = vmatmul.mubr.bf16.gmra.mxu0 %v2788
        %v2863 = vpop.f32.mrf.mxu0
        %v2864 = vadd.f32 0.0, %v2863
        %v2865 = vpop.f32.mrf.mxu0
        %v2866 = vpop.f32.mrf.mxu0
        %v2867 = vadd.f32 0.0, %v2866
        %v2868 = vpop.f32.mrf.mxu0
        %2869 = vmatprep.mubr.bf16.mxu0 0
        %2870 = vmatmul.mubr.bf16.gmra.mxu0 %v2791
        %v2871 = vpop.f32.mrf.mxu0
        %v2872 = vadd.f32 0.0, %v2871
        %v2873 = vpop.f32.mrf.mxu0
        %v2874 = vpop.f32.mrf.mxu0
        %v2875 = vadd.f32 0.0, %v2874
        %v2876 = vpop.f32.mrf.mxu0
        %2877 = vmatprep.mubr.bf16.mxu0 0
        %2878 = vmatmul.mubr.bf16.gmra.mxu0 %v2794
        %v2879 = vpop.f32.mrf.mxu0
        %v2880 = vadd.f32 0.0, %v2879
        %v2881 = vpop.f32.mrf.mxu0
        %v2882 = vpop.f32.mrf.mxu0
        %v2883 = vadd.f32 0.0, %v2882
        %v2884 = vpop.f32.mrf.mxu0
        %2885 = vmatprep.mubr.bf16.mxu0 0
        %2886 = vmatmul.mubr.bf16.gmra.mxu0 %v2797
        %v2887 = vpop.f32.mrf.mxu0
        %v2888 = vadd.f32 0.0, %v2887
        %v2889 = vpop.f32.mrf.mxu0
        %v2890 = vpop.f32.mrf.mxu0
        %v2891 = vadd.f32 0.0, %v2890
        %v2892 = vpop.f32.mrf.mxu0
        %2893 = vmatprep.mubr.bf16.mxu0 0
        %2894 = vmatmul.mubr.bf16.gmra.mxu0 %v2800
        %v2895 = vpop.f32.mrf.mxu0
        %v2896 = vadd.f32 0.0, %v2895
        %v2897 = vpop.f32.mrf.mxu0
        %v2898 = vpop.f32.mrf.mxu0
        %v2899 = vadd.f32 0.0, %v2898
        %v2900 = vpop.f32.mrf.mxu0
        %2901 = vdwg.mxu0
        %v2902 = vadd.f32 %v2658, %v2840
        %v2903 = vadd.f32 %v2661, %v2843
        %v2904 = vadd.f32 %v2666, %v2848
        %v2905 = vadd.f32 %v2669, %v2851
        %v2906 = vadd.f32 %v2674, %v2856
        %v2907 = vadd.f32 %v2677, %v2859
        %v2908 = vadd.f32 %v2682, %v2864
        %v2909 = vadd.f32 %v2685, %v2867
        %v2910 = vadd.f32 %v2690, %v2872
        %v2911 = vadd.f32 %v2693, %v2875
        %v2912 = vadd.f32 %v2698, %v2880
        %v2913 = vadd.f32 %v2701, %v2883
        %v2914 = vadd.f32 %v2706, %v2888
        %v2915 = vadd.f32 %v2709, %v2891
        %v2916 = vadd.f32 %v2714, %v2896
        %v2917 = vadd.f32 %v2717, %v2899
        %v2918 = vrot.slane %v2902, 7
        %v2919 = vrot.slane %v2903, 7
        %v2920 = vrot.slane %v2904, 7
        %v2921 = vrot.slane %v2905, 7
        %v2922 = vrot.slane %v2906, 7
        %v2923 = vrot.slane %v2907, 7
        %v2924 = vrot.slane %v2908, 7
        %v2925 = vrot.slane %v2909, 7
        %v2926 = vrot.slane %v2910, 7
        %v2927 = vrot.slane %v2911, 7
        %v2928 = vrot.slane %v2912, 7
        %v2929 = vrot.slane %v2913, 7
        %v2930 = vrot.slane %v2914, 7
        %v2931 = vrot.slane %v2915, 7
        %v2932 = vrot.slane %v2916, 7
        %v2933 = vrot.slane %v2917, 7
        %v2934 = vsel %vm1235, %v2932, %v2933
        %v2935 = vsel %vm1235, %v2931, %v2932
        %v2936 = vsel %vm1235, %v2930, %v2931
        %v2937 = vsel %vm1235, %v2929, %v2930
        %v2938 = vsel %vm1235, %v2928, %v2929
        %v2939 = vsel %vm1235, %v2927, %v2928
        %v2940 = vsel %vm1235, %v2926, %v2927
        %v2941 = vsel %vm1235, %v2925, %v2926
        %v2942 = vsel %vm1235, %v2924, %v2925
        %v2943 = vsel %vm1235, %v2923, %v2924
        %v2944 = vsel %vm1235, %v2922, %v2923
        %v2945 = vsel %vm1235, %v2921, %v2922
        %v2946 = vsel %vm1235, %v2920, %v2921
        %v2947 = vsel %vm1235, %v2919, %v2920
        %v2948 = vsel %vm1235, %v2918, %v2919
        %v2949 = vsel %vm1235, %v2933, %v2918
        %v2950 = vsel %vm1256, 0.0, %v2949
        %v2951 = vsel %vm1257, 0.0, %v2948
        %v2952 = vsel %vm1256, 0.0, %v2947
        %v2953 = vsel %vm1257, 0.0, %v2946
        %v2954 = vsel %vm1256, 0.0, %v2945
        %v2955 = vsel %vm1257, 0.0, %v2944
        %v2956 = vsel %vm1256, 0.0, %v2943
        %v2957 = vsel %vm1257, 0.0, %v2942
        %v2958 = vsel %vm1256, 0.0, %v2941
        %v2959 = vsel %vm1257, 0.0, %v2940
        %v2960 = vsel %vm1256, 0.0, %v2939
        %v2961 = vsel %vm1257, 0.0, %v2938
        %v2962 = vsel %vm1256, 0.0, %v2937
        %v2963 = vsel %vm1257, 0.0, %v2936
        %v2964 = vsel %vm1256, 0.0, %v2935
        %v2965 = vsel %vm1257, 0.0, %v2934
        %v2966 = vadd.f32 %v2950, 0.0
        %v2967 = vadd.f32 %v2951, 0.0
        %v2968 = vadd.f32 %v2952, 0.0
        %v2969 = vadd.f32 %v2953, 0.0
        %v2970 = vadd.f32 %v2954, 0.0
        %v2971 = vadd.f32 %v2955, 0.0
        %v2972 = vadd.f32 %v2956, 0.0
        %v2973 = vadd.f32 %v2957, 0.0
        %v2974 = vadd.f32 %v2958, 0.0
        %v2975 = vadd.f32 %v2959, 0.0
        %v2976 = vadd.f32 %v2960, 0.0
        %v2977 = vadd.f32 %v2961, 0.0
        %v2978 = vadd.f32 %v2962, 0.0
        %v2979 = vadd.f32 %v2963, 0.0
        %v2980 = vadd.f32 %v2964, 0.0
        %v2981 = vadd.f32 %v2965, 0.0
        %s2982 = scalar_lea.vmem %s5, 4
        %v2983 = vld [vmem:[%s2982] sm:$0xf]
        %s2984 = scalar_lea.vmem %s5, 16
        %v2985 = vld [vmem:[%s2984] sm:$0xf]
        %v2987 = vsel %vm664, %v2985, 0
        %2989 = vmatprep.subr.bf16.mxu0 0
        %2990 = vmatpush1.bf16.msra.mxu0 0
        %2991 = vmatprep.subr.bf16.mxu0 0
        %2992 = vmatpush1.bf16.msra.mxu0 0
        %2993 = vmatprep.subr.bf16.mxu0 0
        %2994 = vmatpush1.bf16.msra.mxu0 0
        %2995 = vmatprep.subr.bf16.mxu0 0
        %2996 = vmatpush1.bf16.msra.mxu0 0
        %2997 = vmatprep.subr.bf16.mxu0 0
        %2998 = vmatpush1.bf16.msra.mxu0 0
        %2999 = vmatprep.subr.bf16.mxu0 0
        %3000 = vmatpush1.bf16.msra.mxu0 0
        %3001 = vmatprep.subr.bf16.mxu0 0
        %3002 = vmatpush1.bf16.msra.mxu0 0
        %3003 = vmatprep.subr.bf16.mxu0 0
        %3004 = vmatpush1.bf16.msra.mxu0 %v2987
        %3005 = vmatprep.subr.bf16.mxu0 0
        %3006 = vmatpush2.bf16.msra.mxu0 0
        %3007 = vmatprep.subr.bf16.mxu0 0
        %3008 = vmatpush2.bf16.msra.mxu0 0
        %3009 = vmatprep.subr.bf16.mxu0 0
        %3010 = vmatpush2.bf16.msra.mxu0 0
        %3011 = vmatprep.subr.bf16.mxu0 0
        %3012 = vmatpush2.bf16.msra.mxu0 0
        %3013 = vmatprep.subr.bf16.mxu0 0
        %3014 = vmatpush2.bf16.msra.mxu0 0
        %3015 = vmatprep.subr.bf16.mxu0 0
        %3016 = vmatpush2.bf16.msra.mxu0 0
        %3017 = vmatprep.subr.bf16.mxu0 0
        %3018 = vmatpush2.bf16.msra.mxu0 0
        %3019 = vmatprep.subr.bf16.mxu0 0
        %3020 = vmatpush2.bf16.msra.mxu0 0
        %3021 = vmatprep.mubr.bf16.mxu0 0
        %3022 = vmatmul.mubr.bf16.gmra.mxu0 %v2433
        %v3023 = vpop.f32.mrf.mxu0
        %v3024 = vadd.f32 0.0, %v3023
        %v3025 = vpop.f32.mrf.mxu0
        %v3026 = vpop.f32.mrf.mxu0
        %v3027 = vadd.f32 0.0, %v3026
        %v3028 = vpop.f32.mrf.mxu0
        %3029 = vmatprep.mubr.bf16.mxu0 0
        %3030 = vmatmul.mubr.bf16.gmra.mxu0 %v2436
        %v3031 = vpop.f32.mrf.mxu0
        %v3032 = vadd.f32 0.0, %v3031
        %v3033 = vpop.f32.mrf.mxu0
        %v3034 = vpop.f32.mrf.mxu0
        %v3035 = vadd.f32 0.0, %v3034
        %v3036 = vpop.f32.mrf.mxu0
        %3037 = vmatprep.mubr.bf16.mxu0 0
        %3038 = vmatmul.mubr.bf16.gmra.mxu0 %v2439
        %v3039 = vpop.f32.mrf.mxu0
        %v3040 = vadd.f32 0.0, %v3039
        %v3041 = vpop.f32.mrf.mxu0
        %v3042 = vpop.f32.mrf.mxu0
        %v3043 = vadd.f32 0.0, %v3042
        %v3044 = vpop.f32.mrf.mxu0
        %3045 = vmatprep.mubr.bf16.mxu0 0
        %3046 = vmatmul.mubr.bf16.gmra.mxu0 %v2442
        %v3047 = vpop.f32.mrf.mxu0
        %v3048 = vadd.f32 0.0, %v3047
        %v3049 = vpop.f32.mrf.mxu0
        %v3050 = vpop.f32.mrf.mxu0
        %v3051 = vadd.f32 0.0, %v3050
        %v3052 = vpop.f32.mrf.mxu0
        %3053 = vmatprep.mubr.bf16.mxu0 0
        %3054 = vmatmul.mubr.bf16.gmra.mxu0 %v2445
        %v3055 = vpop.f32.mrf.mxu0
        %v3056 = vadd.f32 0.0, %v3055
        %v3057 = vpop.f32.mrf.mxu0
        %v3058 = vpop.f32.mrf.mxu0
        %v3059 = vadd.f32 0.0, %v3058
        %v3060 = vpop.f32.mrf.mxu0
        %3061 = vmatprep.mubr.bf16.mxu0 0
        %3062 = vmatmul.mubr.bf16.gmra.mxu0 %v2448
        %v3063 = vpop.f32.mrf.mxu0
        %v3064 = vadd.f32 0.0, %v3063
        %v3065 = vpop.f32.mrf.mxu0
        %v3066 = vpop.f32.mrf.mxu0
        %v3067 = vadd.f32 0.0, %v3066
        %v3068 = vpop.f32.mrf.mxu0
        %3069 = vmatprep.mubr.bf16.mxu0 0
        %3070 = vmatmul.mubr.bf16.gmra.mxu0 %v2451
        %v3071 = vpop.f32.mrf.mxu0
        %v3072 = vadd.f32 0.0, %v3071
        %v3073 = vpop.f32.mrf.mxu0
        %v3074 = vpop.f32.mrf.mxu0
        %v3075 = vadd.f32 0.0, %v3074
        %v3076 = vpop.f32.mrf.mxu0
        %3077 = vmatprep.mubr.bf16.mxu0 0
        %3078 = vmatmul.mubr.bf16.gmra.mxu0 %v2454
        %v3079 = vpop.f32.mrf.mxu0
        %v3080 = vadd.f32 0.0, %v3079
        %v3081 = vpop.f32.mrf.mxu0
        %v3082 = vpop.f32.mrf.mxu0
        %v3083 = vadd.f32 0.0, %v3082
        %v3084 = vpop.f32.mrf.mxu0
        %3085 = vdwg.mxu0
        %v3087 = vsel %vm664, %v2983, 0
        %3089 = vmatprep.subr.bf16.mxu0 0
        %3090 = vmatpush1.bf16.msra.mxu0 0
        %3091 = vmatprep.subr.bf16.mxu0 0
        %3092 = vmatpush1.bf16.msra.mxu0 0
        %3093 = vmatprep.subr.bf16.mxu0 0
        %3094 = vmatpush1.bf16.msra.mxu0 0
        %3095 = vmatprep.subr.bf16.mxu0 0
        %3096 = vmatpush1.bf16.msra.mxu0 0
        %3097 = vmatprep.subr.bf16.mxu0 0
        %3098 = vmatpush1.bf16.msra.mxu0 0
        %3099 = vmatprep.subr.bf16.mxu0 0
        %3100 = vmatpush1.bf16.msra.mxu0 0
        %3101 = vmatprep.subr.bf16.mxu0 0
        %3102 = vmatpush1.bf16.msra.mxu0 0
        %3103 = vmatprep.subr.bf16.mxu0 0
        %3104 = vmatpush1.bf16.msra.mxu0 %v3087
        %3105 = vmatprep.subr.bf16.mxu0 0
        %3106 = vmatpush2.bf16.msra.mxu0 0
        %3107 = vmatprep.subr.bf16.mxu0 0
        %3108 = vmatpush2.bf16.msra.mxu0 0
        %3109 = vmatprep.subr.bf16.mxu0 0
        %3110 = vmatpush2.bf16.msra.mxu0 0
        %3111 = vmatprep.subr.bf16.mxu0 0
        %3112 = vmatpush2.bf16.msra.mxu0 0
        %3113 = vmatprep.subr.bf16.mxu0 0
        %3114 = vmatpush2.bf16.msra.mxu0 0
        %3115 = vmatprep.subr.bf16.mxu0 0
        %3116 = vmatpush2.bf16.msra.mxu0 0
        %3117 = vmatprep.subr.bf16.mxu0 0
        %3118 = vmatpush2.bf16.msra.mxu0 0
        %3119 = vmatprep.subr.bf16.mxu0 0
        %3120 = vmatpush2.bf16.msra.mxu0 0
        %3121 = vmatprep.mubr.bf16.mxu0 0
        %3122 = vmatmul.mubr.bf16.gmra.mxu0 %v2597
        %v3123 = vpop.f32.mrf.mxu0
        %v3124 = vadd.f32 %v3024, %v3123
        %v3125 = vpop.f32.mrf.mxu0
        %v3126 = vpop.f32.mrf.mxu0
        %v3127 = vadd.f32 %v3027, %v3126
        %v3128 = vpop.f32.mrf.mxu0
        %3129 = vmatprep.mubr.bf16.mxu0 0
        %3130 = vmatmul.mubr.bf16.gmra.mxu0 %v2600
        %v3131 = vpop.f32.mrf.mxu0
        %v3132 = vadd.f32 %v3032, %v3131
        %v3133 = vpop.f32.mrf.mxu0
        %v3134 = vpop.f32.mrf.mxu0
        %v3135 = vadd.f32 %v3035, %v3134
        %v3136 = vpop.f32.mrf.mxu0
        %3137 = vmatprep.mubr.bf16.mxu0 0
        %3138 = vmatmul.mubr.bf16.gmra.mxu0 %v2603
        %v3139 = vpop.f32.mrf.mxu0
        %v3140 = vadd.f32 %v3040, %v3139
        %v3141 = vpop.f32.mrf.mxu0
        %v3142 = vpop.f32.mrf.mxu0
        %v3143 = vadd.f32 %v3043, %v3142
        %v3144 = vpop.f32.mrf.mxu0
        %3145 = vmatprep.mubr.bf16.mxu0 0
        %3146 = vmatmul.mubr.bf16.gmra.mxu0 %v2606
        %v3147 = vpop.f32.mrf.mxu0
        %v3148 = vadd.f32 %v3048, %v3147
        %v3149 = vpop.f32.mrf.mxu0
        %v3150 = vpop.f32.mrf.mxu0
        %v3151 = vadd.f32 %v3051, %v3150
        %v3152 = vpop.f32.mrf.mxu0
        %3153 = vmatprep.mubr.bf16.mxu0 0
        %3154 = vmatmul.mubr.bf16.gmra.mxu0 %v2609
        %v3155 = vpop.f32.mrf.mxu0
        %v3156 = vadd.f32 %v3056, %v3155
        %v3157 = vpop.f32.mrf.mxu0
        %v3158 = vpop.f32.mrf.mxu0
        %v3159 = vadd.f32 %v3059, %v3158
        %v3160 = vpop.f32.mrf.mxu0
        %3161 = vmatprep.mubr.bf16.mxu0 0
        %3162 = vmatmul.mubr.bf16.gmra.mxu0 %v2612
        %v3163 = vpop.f32.mrf.mxu0
        %v3164 = vadd.f32 %v3064, %v3163
        %v3165 = vpop.f32.mrf.mxu0
        %v3166 = vpop.f32.mrf.mxu0
        %v3167 = vadd.f32 %v3067, %v3166
        %v3168 = vpop.f32.mrf.mxu0
        %3169 = vmatprep.mubr.bf16.mxu0 0
        %3170 = vmatmul.mubr.bf16.gmra.mxu0 %v2615
        %v3171 = vpop.f32.mrf.mxu0
        %v3172 = vadd.f32 %v3072, %v3171
        %v3173 = vpop.f32.mrf.mxu0
        %v3174 = vpop.f32.mrf.mxu0
        %v3175 = vadd.f32 %v3075, %v3174
        %v3176 = vpop.f32.mrf.mxu0
        %3177 = vmatprep.mubr.bf16.mxu0 0
        %3178 = vmatmul.mubr.bf16.gmra.mxu0 %v2618
        %v3179 = vpop.f32.mrf.mxu0
        %v3180 = vadd.f32 %v3080, %v3179
        %v3181 = vpop.f32.mrf.mxu0
        %v3182 = vpop.f32.mrf.mxu0
        %v3183 = vadd.f32 %v3083, %v3182
        %v3184 = vpop.f32.mrf.mxu0
        %3185 = vdwg.mxu0
        %s3186 = scalar_lea.vmem %s5, 28
        %v3187 = vld [vmem:[%s3186] sm:$0xf]
        %v3189 = vsel %vm664, %v3187, 0
        %3191 = vmatprep.subr.bf16.mxu0 0
        %3192 = vmatpush1.bf16.msra.mxu0 0
        %3193 = vmatprep.subr.bf16.mxu0 0
        %3194 = vmatpush1.bf16.msra.mxu0 0
        %3195 = vmatprep.subr.bf16.mxu0 0
        %3196 = vmatpush1.bf16.msra.mxu0 0
        %3197 = vmatprep.subr.bf16.mxu0 0
        %3198 = vmatpush1.bf16.msra.mxu0 0
        %3199 = vmatprep.subr.bf16.mxu0 0
        %3200 = vmatpush1.bf16.msra.mxu0 0
        %3201 = vmatprep.subr.bf16.mxu0 0
        %3202 = vmatpush1.bf16.msra.mxu0 0
        %3203 = vmatprep.subr.bf16.mxu0 0
        %3204 = vmatpush1.bf16.msra.mxu0 0
        %3205 = vmatprep.subr.bf16.mxu0 0
        %3206 = vmatpush1.bf16.msra.mxu0 %v3189
        %3207 = vmatprep.subr.bf16.mxu0 0
        %3208 = vmatpush2.bf16.msra.mxu0 0
        %3209 = vmatprep.subr.bf16.mxu0 0
        %3210 = vmatpush2.bf16.msra.mxu0 0
        %3211 = vmatprep.subr.bf16.mxu0 0
        %3212 = vmatpush2.bf16.msra.mxu0 0
        %3213 = vmatprep.subr.bf16.mxu0 0
        %3214 = vmatpush2.bf16.msra.mxu0 0
        %3215 = vmatprep.subr.bf16.mxu0 0
        %3216 = vmatpush2.bf16.msra.mxu0 0
        %3217 = vmatprep.subr.bf16.mxu0 0
        %3218 = vmatpush2.bf16.msra.mxu0 0
        %3219 = vmatprep.subr.bf16.mxu0 0
        %3220 = vmatpush2.bf16.msra.mxu0 0
        %3221 = vmatprep.subr.bf16.mxu0 0
        %3222 = vmatpush2.bf16.msra.mxu0 0
        %3223 = vmatprep.mubr.bf16.mxu0 0
        %3224 = vmatmul.mubr.bf16.gmra.mxu0 %v2779
        %v3225 = vpop.f32.mrf.mxu0
        %v3226 = vadd.f32 0.0, %v3225
        %v3227 = vpop.f32.mrf.mxu0
        %v3228 = vpop.f32.mrf.mxu0
        %v3229 = vadd.f32 0.0, %v3228
        %v3230 = vpop.f32.mrf.mxu0
        %3231 = vmatprep.mubr.bf16.mxu0 0
        %3232 = vmatmul.mubr.bf16.gmra.mxu0 %v2782
        %v3233 = vpop.f32.mrf.mxu0
        %v3234 = vadd.f32 0.0, %v3233
        %v3235 = vpop.f32.mrf.mxu0
        %v3236 = vpop.f32.mrf.mxu0
        %v3237 = vadd.f32 0.0, %v3236
        %v3238 = vpop.f32.mrf.mxu0
        %3239 = vmatprep.mubr.bf16.mxu0 0
        %3240 = vmatmul.mubr.bf16.gmra.mxu0 %v2785
        %v3241 = vpop.f32.mrf.mxu0
        %v3242 = vadd.f32 0.0, %v3241
        %v3243 = vpop.f32.mrf.mxu0
        %v3244 = vpop.f32.mrf.mxu0
        %v3245 = vadd.f32 0.0, %v3244
        %v3246 = vpop.f32.mrf.mxu0
        %3247 = vmatprep.mubr.bf16.mxu0 0
        %3248 = vmatmul.mubr.bf16.gmra.mxu0 %v2788
        %v3249 = vpop.f32.mrf.mxu0
        %v3250 = vadd.f32 0.0, %v3249
        %v3251 = vpop.f32.mrf.mxu0
        %v3252 = vpop.f32.mrf.mxu0
        %v3253 = vadd.f32 0.0, %v3252
        %v3254 = vpop.f32.mrf.mxu0
        %3255 = vmatprep.mubr.bf16.mxu0 0
        %3256 = vmatmul.mubr.bf16.gmra.mxu0 %v2791
        %v3257 = vpop.f32.mrf.mxu0
        %v3258 = vadd.f32 0.0, %v3257
        %v3259 = vpop.f32.mrf.mxu0
        %v3260 = vpop.f32.mrf.mxu0
        %v3261 = vadd.f32 0.0, %v3260
        %v3262 = vpop.f32.mrf.mxu0
        %3263 = vmatprep.mubr.bf16.mxu0 0
        %3264 = vmatmul.mubr.bf16.gmra.mxu0 %v2794
        %v3265 = vpop.f32.mrf.mxu0
        %v3266 = vadd.f32 0.0, %v3265
        %v3267 = vpop.f32.mrf.mxu0
        %v3268 = vpop.f32.mrf.mxu0
        %v3269 = vadd.f32 0.0, %v3268
        %v3270 = vpop.f32.mrf.mxu0
        %3271 = vmatprep.mubr.bf16.mxu0 0
        %3272 = vmatmul.mubr.bf16.gmra.mxu0 %v2797
        %v3273 = vpop.f32.mrf.mxu0
        %v3274 = vadd.f32 0.0, %v3273
        %v3275 = vpop.f32.mrf.mxu0
        %v3276 = vpop.f32.mrf.mxu0
        %v3277 = vadd.f32 0.0, %v3276
        %v3278 = vpop.f32.mrf.mxu0
        %3279 = vmatprep.mubr.bf16.mxu0 0
        %3280 = vmatmul.mubr.bf16.gmra.mxu0 %v2800
        %v3281 = vpop.f32.mrf.mxu0
        %v3282 = vadd.f32 0.0, %v3281
        %v3283 = vpop.f32.mrf.mxu0
        %v3284 = vpop.f32.mrf.mxu0
        %v3285 = vadd.f32 0.0, %v3284
        %v3286 = vpop.f32.mrf.mxu0
        %3287 = vdwg.mxu0
        %v3288 = vadd.f32 %v3124, %v3226
        %v3289 = vadd.f32 %v3127, %v3229
        %v3290 = vadd.f32 %v3132, %v3234
        %v3291 = vadd.f32 %v3135, %v3237
        %v3292 = vadd.f32 %v3140, %v3242
        %v3293 = vadd.f32 %v3143, %v3245
        %v3294 = vadd.f32 %v3148, %v3250
        %v3295 = vadd.f32 %v3151, %v3253
        %v3296 = vadd.f32 %v3156, %v3258
        %v3297 = vadd.f32 %v3159, %v3261
        %v3298 = vadd.f32 %v3164, %v3266
        %v3299 = vadd.f32 %v3167, %v3269
        %v3300 = vadd.f32 %v3172, %v3274
        %v3301 = vadd.f32 %v3175, %v3277
        %v3302 = vadd.f32 %v3180, %v3282
        %v3303 = vadd.f32 %v3183, %v3285
        %v3304 = vadd.f32 %v2966, %v3288
        %v3305 = vadd.f32 %v2967, %v3289
        %v3306 = vadd.f32 %v2968, %v3290
        %v3307 = vadd.f32 %v2969, %v3291
        %v3308 = vadd.f32 %v2970, %v3292
        %v3309 = vadd.f32 %v2971, %v3293
        %v3310 = vadd.f32 %v2972, %v3294
        %v3311 = vadd.f32 %v2973, %v3295
        %v3312 = vadd.f32 %v2974, %v3296
        %v3313 = vadd.f32 %v2975, %v3297
        %v3314 = vadd.f32 %v2976, %v3298
        %v3315 = vadd.f32 %v2977, %v3299
        %v3316 = vadd.f32 %v2978, %v3300
        %v3317 = vadd.f32 %v2979, %v3301
        %v3318 = vadd.f32 %v2980, %v3302
        %v3319 = vadd.f32 %v2981, %v3303
        %s3320 = scalar_lea.vmem %s5, 8
        %v3321 = vld [vmem:[%s3320] sm:$0xf]
        %s3322 = scalar_lea.vmem %s5, 20
        %v3323 = vld [vmem:[%s3322] sm:$0xf]
        %v3325 = vsel %vm664, %v3323, 0
        %3327 = vmatprep.subr.bf16.mxu0 0
        %3328 = vmatpush1.bf16.msra.mxu0 0
        %3329 = vmatprep.subr.bf16.mxu0 0
        %3330 = vmatpush1.bf16.msra.mxu0 0
        %3331 = vmatprep.subr.bf16.mxu0 0
        %3332 = vmatpush1.bf16.msra.mxu0 0
        %3333 = vmatprep.subr.bf16.mxu0 0
        %3334 = vmatpush1.bf16.msra.mxu0 0
        %3335 = vmatprep.subr.bf16.mxu0 0
        %3336 = vmatpush1.bf16.msra.mxu0 0
        %3337 = vmatprep.subr.bf16.mxu0 0
        %3338 = vmatpush1.bf16.msra.mxu0 0
        %3339 = vmatprep.subr.bf16.mxu0 0
        %3340 = vmatpush1.bf16.msra.mxu0 0
        %3341 = vmatprep.subr.bf16.mxu0 0
        %3342 = vmatpush1.bf16.msra.mxu0 %v3325
        %3343 = vmatprep.subr.bf16.mxu0 0
        %3344 = vmatpush2.bf16.msra.mxu0 0
        %3345 = vmatprep.subr.bf16.mxu0 0
        %3346 = vmatpush2.bf16.msra.mxu0 0
        %3347 = vmatprep.subr.bf16.mxu0 0
        %3348 = vmatpush2.bf16.msra.mxu0 0
        %3349 = vmatprep.subr.bf16.mxu0 0
        %3350 = vmatpush2.bf16.msra.mxu0 0
        %3351 = vmatprep.subr.bf16.mxu0 0
        %3352 = vmatpush2.bf16.msra.mxu0 0
        %3353 = vmatprep.subr.bf16.mxu0 0
        %3354 = vmatpush2.bf16.msra.mxu0 0
        %3355 = vmatprep.subr.bf16.mxu0 0
        %3356 = vmatpush2.bf16.msra.mxu0 0
        %3357 = vmatprep.subr.bf16.mxu0 0
        %3358 = vmatpush2.bf16.msra.mxu0 0
        %3359 = vmatprep.mubr.bf16.mxu0 0
        %3360 = vmatmul.mubr.bf16.gmra.mxu0 %v2433
        %v3361 = vpop.f32.mrf.mxu0
        %v3362 = vadd.f32 0.0, %v3361
        %v3363 = vpop.f32.mrf.mxu0
        %v3364 = vpop.f32.mrf.mxu0
        %v3365 = vadd.f32 0.0, %v3364
        %v3366 = vpop.f32.mrf.mxu0
        %3367 = vmatprep.mubr.bf16.mxu0 0
        %3368 = vmatmul.mubr.bf16.gmra.mxu0 %v2436
        %v3369 = vpop.f32.mrf.mxu0
        %v3370 = vadd.f32 0.0, %v3369
        %v3371 = vpop.f32.mrf.mxu0
        %v3372 = vpop.f32.mrf.mxu0
        %v3373 = vadd.f32 0.0, %v3372
        %v3374 = vpop.f32.mrf.mxu0
        %3375 = vmatprep.mubr.bf16.mxu0 0
        %3376 = vmatmul.mubr.bf16.gmra.mxu0 %v2439
        %v3377 = vpop.f32.mrf.mxu0
        %v3378 = vadd.f32 0.0, %v3377
        %v3379 = vpop.f32.mrf.mxu0
        %v3380 = vpop.f32.mrf.mxu0
        %v3381 = vadd.f32 0.0, %v3380
        %v3382 = vpop.f32.mrf.mxu0
        %3383 = vmatprep.mubr.bf16.mxu0 0
        %3384 = vmatmul.mubr.bf16.gmra.mxu0 %v2442
        %v3385 = vpop.f32.mrf.mxu0
        %v3386 = vadd.f32 0.0, %v3385
        %v3387 = vpop.f32.mrf.mxu0
        %v3388 = vpop.f32.mrf.mxu0
        %v3389 = vadd.f32 0.0, %v3388
        %v3390 = vpop.f32.mrf.mxu0
        %3391 = vmatprep.mubr.bf16.mxu0 0
        %3392 = vmatmul.mubr.bf16.gmra.mxu0 %v2445
        %v3393 = vpop.f32.mrf.mxu0
        %v3394 = vadd.f32 0.0, %v3393
        %v3395 = vpop.f32.mrf.mxu0
        %v3396 = vpop.f32.mrf.mxu0
        %v3397 = vadd.f32 0.0, %v3396
        %v3398 = vpop.f32.mrf.mxu0
        %3399 = vmatprep.mubr.bf16.mxu0 0
        %3400 = vmatmul.mubr.bf16.gmra.mxu0 %v2448
        %v3401 = vpop.f32.mrf.mxu0
        %v3402 = vadd.f32 0.0, %v3401
        %v3403 = vpop.f32.mrf.mxu0
        %v3404 = vpop.f32.mrf.mxu0
        %v3405 = vadd.f32 0.0, %v3404
        %v3406 = vpop.f32.mrf.mxu0
        %3407 = vmatprep.mubr.bf16.mxu0 0
        %3408 = vmatmul.mubr.bf16.gmra.mxu0 %v2451
        %v3409 = vpop.f32.mrf.mxu0
        %v3410 = vadd.f32 0.0, %v3409
        %v3411 = vpop.f32.mrf.mxu0
        %v3412 = vpop.f32.mrf.mxu0
        %v3413 = vadd.f32 0.0, %v3412
        %v3414 = vpop.f32.mrf.mxu0
        %3415 = vmatprep.mubr.bf16.mxu0 0
        %3416 = vmatmul.mubr.bf16.gmra.mxu0 %v2454
        %v3417 = vpop.f32.mrf.mxu0
        %v3418 = vadd.f32 0.0, %v3417
        %v3419 = vpop.f32.mrf.mxu0
        %v3420 = vpop.f32.mrf.mxu0
        %v3421 = vadd.f32 0.0, %v3420
        %v3422 = vpop.f32.mrf.mxu0
        %3423 = vdwg.mxu0
        %v3425 = vsel %vm664, %v3321, 0
        %3427 = vmatprep.subr.bf16.mxu0 0
        %3428 = vmatpush1.bf16.msra.mxu0 0
        %3429 = vmatprep.subr.bf16.mxu0 0
        %3430 = vmatpush1.bf16.msra.mxu0 0
        %3431 = vmatprep.subr.bf16.mxu0 0
        %3432 = vmatpush1.bf16.msra.mxu0 0
        %3433 = vmatprep.subr.bf16.mxu0 0
        %3434 = vmatpush1.bf16.msra.mxu0 0
        %3435 = vmatprep.subr.bf16.mxu0 0
        %3436 = vmatpush1.bf16.msra.mxu0 0
        %3437 = vmatprep.subr.bf16.mxu0 0
        %3438 = vmatpush1.bf16.msra.mxu0 0
        %3439 = vmatprep.subr.bf16.mxu0 0
        %3440 = vmatpush1.bf16.msra.mxu0 0
        %3441 = vmatprep.subr.bf16.mxu0 0
        %3442 = vmatpush1.bf16.msra.mxu0 %v3425
        %3443 = vmatprep.subr.bf16.mxu0 0
        %3444 = vmatpush2.bf16.msra.mxu0 0
        %3445 = vmatprep.subr.bf16.mxu0 0
        %3446 = vmatpush2.bf16.msra.mxu0 0
        %3447 = vmatprep.subr.bf16.mxu0 0
        %3448 = vmatpush2.bf16.msra.mxu0 0
        %3449 = vmatprep.subr.bf16.mxu0 0
        %3450 = vmatpush2.bf16.msra.mxu0 0
        %3451 = vmatprep.subr.bf16.mxu0 0
        %3452 = vmatpush2.bf16.msra.mxu0 0
        %3453 = vmatprep.subr.bf16.mxu0 0
        %3454 = vmatpush2.bf16.msra.mxu0 0
        %3455 = vmatprep.subr.bf16.mxu0 0
        %3456 = vmatpush2.bf16.msra.mxu0 0
        %3457 = vmatprep.subr.bf16.mxu0 0
        %3458 = vmatpush2.bf16.msra.mxu0 0
        %3459 = vmatprep.mubr.bf16.mxu0 0
        %3460 = vmatmul.mubr.bf16.gmra.mxu0 %v2597
        %v3461 = vpop.f32.mrf.mxu0
        %v3462 = vadd.f32 %v3362, %v3461
        %v3463 = vpop.f32.mrf.mxu0
        %v3464 = vpop.f32.mrf.mxu0
        %v3465 = vadd.f32 %v3365, %v3464
        %v3466 = vpop.f32.mrf.mxu0
        %3467 = vmatprep.mubr.bf16.mxu0 0
        %3468 = vmatmul.mubr.bf16.gmra.mxu0 %v2600
        %v3469 = vpop.f32.mrf.mxu0
        %v3470 = vadd.f32 %v3370, %v3469
        %v3471 = vpop.f32.mrf.mxu0
        %v3472 = vpop.f32.mrf.mxu0
        %v3473 = vadd.f32 %v3373, %v3472
        %v3474 = vpop.f32.mrf.mxu0
        %3475 = vmatprep.mubr.bf16.mxu0 0
        %3476 = vmatmul.mubr.bf16.gmra.mxu0 %v2603
        %v3477 = vpop.f32.mrf.mxu0
        %v3478 = vadd.f32 %v3378, %v3477
        %v3479 = vpop.f32.mrf.mxu0
        %v3480 = vpop.f32.mrf.mxu0
        %v3481 = vadd.f32 %v3381, %v3480
        %v3482 = vpop.f32.mrf.mxu0
        %3483 = vmatprep.mubr.bf16.mxu0 0
        %3484 = vmatmul.mubr.bf16.gmra.mxu0 %v2606
        %v3485 = vpop.f32.mrf.mxu0
        %v3486 = vadd.f32 %v3386, %v3485
        %v3487 = vpop.f32.mrf.mxu0
        %v3488 = vpop.f32.mrf.mxu0
        %v3489 = vadd.f32 %v3389, %v3488
        %v3490 = vpop.f32.mrf.mxu0
        %3491 = vmatprep.mubr.bf16.mxu0 0
        %3492 = vmatmul.mubr.bf16.gmra.mxu0 %v2609
        %v3493 = vpop.f32.mrf.mxu0
        %v3494 = vadd.f32 %v3394, %v3493
        %v3495 = vpop.f32.mrf.mxu0
        %v3496 = vpop.f32.mrf.mxu0
        %v3497 = vadd.f32 %v3397, %v3496
        %v3498 = vpop.f32.mrf.mxu0
        %3499 = vmatprep.mubr.bf16.mxu0 0
        %3500 = vmatmul.mubr.bf16.gmra.mxu0 %v2612
        %v3501 = vpop.f32.mrf.mxu0
        %v3502 = vadd.f32 %v3402, %v3501
        %v3503 = vpop.f32.mrf.mxu0
        %v3504 = vpop.f32.mrf.mxu0
        %v3505 = vadd.f32 %v3405, %v3504
        %v3506 = vpop.f32.mrf.mxu0
        %3507 = vmatprep.mubr.bf16.mxu0 0
        %3508 = vmatmul.mubr.bf16.gmra.mxu0 %v2615
        %v3509 = vpop.f32.mrf.mxu0
        %v3510 = vadd.f32 %v3410, %v3509
        %v3511 = vpop.f32.mrf.mxu0
        %v3512 = vpop.f32.mrf.mxu0
        %v3513 = vadd.f32 %v3413, %v3512
        %v3514 = vpop.f32.mrf.mxu0
        %3515 = vmatprep.mubr.bf16.mxu0 0
        %3516 = vmatmul.mubr.bf16.gmra.mxu0 %v2618
        %v3517 = vpop.f32.mrf.mxu0
        %v3518 = vadd.f32 %v3418, %v3517
        %v3519 = vpop.f32.mrf.mxu0
        %v3520 = vpop.f32.mrf.mxu0
        %v3521 = vadd.f32 %v3421, %v3520
        %v3522 = vpop.f32.mrf.mxu0
        %3523 = vdwg.mxu0
        %s3524 = scalar_lea.vmem %s5, 32
        %v3525 = vld [vmem:[%s3524] sm:$0xf]
        %v3527 = vsel %vm664, %v3525, 0
        %3529 = vmatprep.subr.bf16.mxu0 0
        %3530 = vmatpush1.bf16.msra.mxu0 0
        %3531 = vmatprep.subr.bf16.mxu0 0
        %3532 = vmatpush1.bf16.msra.mxu0 0
        %3533 = vmatprep.subr.bf16.mxu0 0
        %3534 = vmatpush1.bf16.msra.mxu0 0
        %3535 = vmatprep.subr.bf16.mxu0 0
        %3536 = vmatpush1.bf16.msra.mxu0 0
        %3537 = vmatprep.subr.bf16.mxu0 0
        %3538 = vmatpush1.bf16.msra.mxu0 0
        %3539 = vmatprep.subr.bf16.mxu0 0
        %3540 = vmatpush1.bf16.msra.mxu0 0
        %3541 = vmatprep.subr.bf16.mxu0 0
        %3542 = vmatpush1.bf16.msra.mxu0 0
        %3543 = vmatprep.subr.bf16.mxu0 0
        %3544 = vmatpush1.bf16.msra.mxu0 %v3527
        %3545 = vmatprep.subr.bf16.mxu0 0
        %3546 = vmatpush2.bf16.msra.mxu0 0
        %3547 = vmatprep.subr.bf16.mxu0 0
        %3548 = vmatpush2.bf16.msra.mxu0 0
        %3549 = vmatprep.subr.bf16.mxu0 0
        %3550 = vmatpush2.bf16.msra.mxu0 0
        %3551 = vmatprep.subr.bf16.mxu0 0
        %3552 = vmatpush2.bf16.msra.mxu0 0
        %3553 = vmatprep.subr.bf16.mxu0 0
        %3554 = vmatpush2.bf16.msra.mxu0 0
        %3555 = vmatprep.subr.bf16.mxu0 0
        %3556 = vmatpush2.bf16.msra.mxu0 0
        %3557 = vmatprep.subr.bf16.mxu0 0
        %3558 = vmatpush2.bf16.msra.mxu0 0
        %3559 = vmatprep.subr.bf16.mxu0 0
        %3560 = vmatpush2.bf16.msra.mxu0 0
        %3561 = vmatprep.mubr.bf16.mxu0 0
        %3562 = vmatmul.mubr.bf16.gmra.mxu0 %v2779
        %v3563 = vpop.f32.mrf.mxu0
        %v3564 = vadd.f32 0.0, %v3563
        %v3565 = vpop.f32.mrf.mxu0
        %v3566 = vpop.f32.mrf.mxu0
        %v3567 = vadd.f32 0.0, %v3566
        %v3568 = vpop.f32.mrf.mxu0
        %3569 = vmatprep.mubr.bf16.mxu0 0
        %3570 = vmatmul.mubr.bf16.gmra.mxu0 %v2782
        %v3571 = vpop.f32.mrf.mxu0
        %v3572 = vadd.f32 0.0, %v3571
        %v3573 = vpop.f32.mrf.mxu0
        %v3574 = vpop.f32.mrf.mxu0
        %v3575 = vadd.f32 0.0, %v3574
        %v3576 = vpop.f32.mrf.mxu0
        %3577 = vmatprep.mubr.bf16.mxu0 0
        %3578 = vmatmul.mubr.bf16.gmra.mxu0 %v2785
        %v3579 = vpop.f32.mrf.mxu0
        %v3580 = vadd.f32 0.0, %v3579
        %v3581 = vpop.f32.mrf.mxu0
        %v3582 = vpop.f32.mrf.mxu0
        %v3583 = vadd.f32 0.0, %v3582
        %v3584 = vpop.f32.mrf.mxu0
        %3585 = vmatprep.mubr.bf16.mxu0 0
        %3586 = vmatmul.mubr.bf16.gmra.mxu0 %v2788
        %v3587 = vpop.f32.mrf.mxu0
        %v3588 = vadd.f32 0.0, %v3587
        %v3589 = vpop.f32.mrf.mxu0
        %v3590 = vpop.f32.mrf.mxu0
        %v3591 = vadd.f32 0.0, %v3590
        %v3592 = vpop.f32.mrf.mxu0
        %3593 = vmatprep.mubr.bf16.mxu0 0
        %3594 = vmatmul.mubr.bf16.gmra.mxu0 %v2791
        %v3595 = vpop.f32.mrf.mxu0
        %v3596 = vadd.f32 0.0, %v3595
        %v3597 = vpop.f32.mrf.mxu0
        %v3598 = vpop.f32.mrf.mxu0
        %v3599 = vadd.f32 0.0, %v3598
        %v3600 = vpop.f32.mrf.mxu0
        %3601 = vmatprep.mubr.bf16.mxu0 0
        %3602 = vmatmul.mubr.bf16.gmra.mxu0 %v2794
        %v3603 = vpop.f32.mrf.mxu0
        %v3604 = vadd.f32 0.0, %v3603
        %v3605 = vpop.f32.mrf.mxu0
        %v3606 = vpop.f32.mrf.mxu0
        %v3607 = vadd.f32 0.0, %v3606
        %v3608 = vpop.f32.mrf.mxu0
        %3609 = vmatprep.mubr.bf16.mxu0 0
        %3610 = vmatmul.mubr.bf16.gmra.mxu0 %v2797
        %v3611 = vpop.f32.mrf.mxu0
        %v3612 = vadd.f32 0.0, %v3611
        %v3613 = vpop.f32.mrf.mxu0
        %v3614 = vpop.f32.mrf.mxu0
        %v3615 = vadd.f32 0.0, %v3614
        %v3616 = vpop.f32.mrf.mxu0
        %3617 = vmatprep.mubr.bf16.mxu0 0
        %3618 = vmatmul.mubr.bf16.gmra.mxu0 %v2800
        %v3619 = vpop.f32.mrf.mxu0
        %v3620 = vadd.f32 0.0, %v3619
        %v3621 = vpop.f32.mrf.mxu0
        %v3622 = vpop.f32.mrf.mxu0
        %v3623 = vadd.f32 0.0, %v3622
        %v3624 = vpop.f32.mrf.mxu0
        %3625 = vdwg.mxu0
        %v3626 = vadd.f32 %v3462, %v3564
        %v3627 = vadd.f32 %v3465, %v3567
        %v3628 = vadd.f32 %v3470, %v3572
        %v3629 = vadd.f32 %v3473, %v3575
        %v3630 = vadd.f32 %v3478, %v3580
        %v3631 = vadd.f32 %v3481, %v3583
        %v3632 = vadd.f32 %v3486, %v3588
        %v3633 = vadd.f32 %v3489, %v3591
        %v3634 = vadd.f32 %v3494, %v3596
        %v3635 = vadd.f32 %v3497, %v3599
        %v3636 = vadd.f32 %v3502, %v3604
        %v3637 = vadd.f32 %v3505, %v3607
        %v3638 = vadd.f32 %v3510, %v3612
        %v3639 = vadd.f32 %v3513, %v3615
        %v3640 = vadd.f32 %v3518, %v3620
        %v3641 = vadd.f32 %v3521, %v3623
        %v3642 = vrot.slane %v3626, 1
        %v3643 = vrot.slane %v3627, 1
        %v3644 = vrot.slane %v3628, 1
        %v3645 = vrot.slane %v3629, 1
        %v3646 = vrot.slane %v3630, 1
        %v3647 = vrot.slane %v3631, 1
        %v3648 = vrot.slane %v3632, 1
        %v3649 = vrot.slane %v3633, 1
        %v3650 = vrot.slane %v3634, 1
        %v3651 = vrot.slane %v3635, 1
        %v3652 = vrot.slane %v3636, 1
        %v3653 = vrot.slane %v3637, 1
        %v3654 = vrot.slane %v3638, 1
        %v3655 = vrot.slane %v3639, 1
        %v3656 = vrot.slane %v3640, 1
        %v3657 = vrot.slane %v3641, 1
        %v3658 = vsel %vm2086, %v3656, %v3657
        %v3659 = vsel %vm2086, %v3655, %v3656
        %v3660 = vsel %vm2086, %v3654, %v3655
        %v3661 = vsel %vm2086, %v3653, %v3654
        %v3662 = vsel %vm2086, %v3652, %v3653
        %v3663 = vsel %vm2086, %v3651, %v3652
        %v3664 = vsel %vm2086, %v3650, %v3651
        %v3665 = vsel %vm2086, %v3649, %v3650
        %v3666 = vsel %vm2086, %v3648, %v3649
        %v3667 = vsel %vm2086, %v3647, %v3648
        %v3668 = vsel %vm2086, %v3646, %v3647
        %v3669 = vsel %vm2086, %v3645, %v3646
        %v3670 = vsel %vm2086, %v3644, %v3645
        %v3671 = vsel %vm2086, %v3643, %v3644
        %v3672 = vsel %vm2086, %v3642, %v3643
        %v3673 = vsel %vm2086, %v3657, %v3642
        %v3674 = vsel %vm2107, 0.0, %v3672
        %v3675 = vsel %vm2108, 0.0, %v3671
        %v3676 = vsel %vm2107, 0.0, %v3670
        %v3677 = vsel %vm2108, 0.0, %v3669
        %v3678 = vsel %vm2107, 0.0, %v3668
        %v3679 = vsel %vm2108, 0.0, %v3667
        %v3680 = vsel %vm2107, 0.0, %v3666
        %v3681 = vsel %vm2108, 0.0, %v3665
        %v3682 = vsel %vm2107, 0.0, %v3664
        %v3683 = vsel %vm2108, 0.0, %v3663
        %v3684 = vsel %vm2107, 0.0, %v3662
        %v3685 = vsel %vm2108, 0.0, %v3661
        %v3686 = vsel %vm2107, 0.0, %v3660
        %v3687 = vsel %vm2108, 0.0, %v3659
        %v3688 = vsel %vm2107, 0.0, %v3658
        %v3689 = vsel %vm2108, 0.0, %v3673
        %v3690 = vadd.f32 %v3304, %v3674
        %v3691 = vadd.f32 %v3305, %v3675
        %v3692 = vadd.f32 %v3306, %v3676
        %v3693 = vadd.f32 %v3307, %v3677
        %v3694 = vadd.f32 %v3308, %v3678
        %v3695 = vadd.f32 %v3309, %v3679
        %v3696 = vadd.f32 %v3310, %v3680
        %v3697 = vadd.f32 %v3311, %v3681
        %v3698 = vadd.f32 %v3312, %v3682
        %v3699 = vadd.f32 %v3313, %v3683
        %v3700 = vadd.f32 %v3314, %v3684
        %v3701 = vadd.f32 %v3315, %v3685
        %v3702 = vadd.f32 %v3316, %v3686
        %v3703 = vadd.f32 %v3317, %v3687
        %v3704 = vadd.f32 %v3318, %v3688
        %v3705 = vadd.f32 %v3319, %v3689
        // Predicated region
        $region53: #{tpu_custom_call.1} parent=43 // pred_check
          %p3706 = pneg %p520
        $region54: #{tpu_custom_call.1} parent=43 // pred_check_branch
          %3708 = sbr.rel (%p3706) target = $region56
        $region55: #{tpu_custom_call.1} parent=43 // pred_region
          %vm3709 = vcmask 57344
          %3710 = vst.msk [vmem:[%s407] sm:$0x1] %vm3709, 0.0
        $region56: #{tpu_custom_call.1} parent=43 // pred_fallthru
          _
        %v3711 = vld [vmem:[%s407] sm:$0x1]
        %v3712 = vsel %vm633, %v3690, 0.0
        %v3713 = vsel %vm633, %v3691, 0.0
        %v3714 = vadd.f32 %v3712, %v3713
        %v3715 = vsel %vm633, %v3692, 0.0
        %v3716 = vadd.f32 %v3714, %v3715
        %v3717 = vsel %vm633, %v3693, 0.0
        %v3718 = vadd.f32 %v3716, %v3717
        %v3719 = vsel %vm633, %v3694, 0.0
        %v3720 = vadd.f32 %v3718, %v3719
        %v3721 = vsel %vm633, %v3695, 0.0
        %v3722 = vadd.f32 %v3720, %v3721
        %v3723 = vsel %vm633, %v3696, 0.0
        %v3724 = vadd.f32 %v3722, %v3723
        %v3725 = vsel %vm633, %v3697, 0.0
        %v3726 = vadd.f32 %v3724, %v3725
        %v3727 = vsel %vm633, %v3698, 0.0
        %v3728 = vadd.f32 %v3726, %v3727
        %v3729 = vsel %vm633, %v3699, 0.0
        %v3730 = vadd.f32 %v3728, %v3729
        %v3731 = vsel %vm633, %v3700, 0.0
        %v3732 = vadd.f32 %v3730, %v3731
        %v3733 = vsel %vm633, %v3701, 0.0
        %v3734 = vadd.f32 %v3732, %v3733
        %v3735 = vsel %vm633, %v3702, 0.0
        %v3736 = vadd.f32 %v3734, %v3735
        %v3737 = vsel %vm633, %v3703, 0.0
        %v3738 = vadd.f32 %v3736, %v3737
        %v3739 = vsel %vm633, %v3704, 0.0
        %v3740 = vadd.f32 %v3738, %v3739
        %v3741 = vsel %vm633, %v3705, 0.0
        %v3742 = vadd.f32 %v3740, %v3741
        %v3743 = vrot.slane %v3742, 4
        %v3744 = vadd.f32 %v3742, %v3743
        %v3745 = vrot.slane %v3744, 2
        %v3746 = vadd.f32 %v3744, %v3745
        %v3747 = vrot.slane %v3746, 1
        %v3748 = vadd.f32 %v3746, %v3747
        %v3749 = vadd.f32 %v3711, %v3748
        %vm3750 = vcmask 57344
        %3751 = vst.msk [vmem:[%s407] sm:$0x1] %vm3750, %v3749
        %v3752 = vpack.c.bf16 %v3691, %v3690
        %v3753 = vpack.c.bf16 %v3693, %v3692
        %v3754 = vpack.c.bf16 %v3695, %v3694
        %v3755 = vpack.c.bf16 %v3697, %v3696
        %v3756 = vpack.c.bf16 %v3699, %v3698
        %v3757 = vpack.c.bf16 %v3701, %v3700
        %v3758 = vpack.c.bf16 %v3703, %v3702
        %v3759 = vpack.c.bf16 %v3705, %v3704
        %v3768 = vunpack.c.l.b16 %v3752
        %v3769 = vunpack.c.h.b16 %v3752
        %v3770 = vunpack.c.l.b16 %v3753
        %v3771 = vunpack.c.h.b16 %v3753
        %v3772 = vunpack.c.l.b16 %v3754
        %v3773 = vunpack.c.h.b16 %v3754
        %v3774 = vunpack.c.l.b16 %v3755
        %v3775 = vunpack.c.h.b16 %v3755
        %v3776 = vunpack.c.l.b16 %v3756
        %v3777 = vunpack.c.h.b16 %v3756
        %v3778 = vunpack.c.l.b16 %v3757
        %v3779 = vunpack.c.h.b16 %v3757
        %v3780 = vunpack.c.l.b16 %v3758
        %v3781 = vunpack.c.h.b16 %v3758
        %v3782 = vunpack.c.l.b16 %v3759
        %v3783 = vunpack.c.h.b16 %v3759
        %v3784 = vpack.c.b16 %v3768, %v3768
        %v3785 = vpack.c.b16 %v3769, %v3769
        %v3786 = vpack.c.b16 %v3770, %v3770
        %v3787 = vpack.c.b16 %v3771, %v3771
        %v3788 = vpack.c.b16 %v3772, %v3772
        %v3789 = vpack.c.b16 %v3773, %v3773
        %v3790 = vpack.c.b16 %v3774, %v3774
        %v3791 = vpack.c.b16 %v3775, %v3775
        %v3792 = vpack.c.b16 %v3776, %v3776
        %v3793 = vpack.c.b16 %v3777, %v3777
        %v3794 = vpack.c.b16 %v3778, %v3778
        %v3795 = vpack.c.b16 %v3779, %v3779
        %v3796 = vpack.c.b16 %v3780, %v3780
        %v3797 = vpack.c.b16 %v3781, %v3781
        %v3798 = vpack.c.b16 %v3782, %v3782
        %v3799 = vpack.c.b16 %v3783, %v3783
        %3816 = vst.msk [vmem:[%s466] sm:$0xf] %vm486, %v3784
        %3817 = vst.msk [vmem:[%s466 + $0x4] sm:$0xf] %vm486, %v3785
        %3818 = vst.msk [vmem:[%s466 + $0x8] sm:$0xf] %vm486, %v3786
        %3819 = vst.msk [vmem:[%s466 + $0xc] sm:$0xf] %vm486, %v3787
        %3820 = vst.msk [vmem:[%s466 + $0x10] sm:$0xf] %vm486, %v3788
        %3821 = vst.msk [vmem:[%s466 + $0x14] sm:$0xf] %vm486, %v3789
        %3822 = vst.msk [vmem:[%s466 + $0x18] sm:$0xf] %vm486, %v3790
        %3823 = vst.msk [vmem:[%s466 + $0x1c] sm:$0xf] %vm486, %v3791
        %3824 = vst.msk [vmem:[%s466 + $0x20] sm:$0xf] %vm486, %v3792
        %3825 = vst.msk [vmem:[%s466 + $0x24] sm:$0xf] %vm486, %v3793
        %3826 = vst.msk [vmem:[%s466 + $0x28] sm:$0xf] %vm486, %v3794
        %3827 = vst.msk [vmem:[%s466 + $0x2c] sm:$0xf] %vm486, %v3795
        %3828 = vst.msk [vmem:[%s466 + $0x30] sm:$0xf] %vm486, %v3796
        %3829 = vst.msk [vmem:[%s466 + $0x34] sm:$0xf] %vm486, %v3797
        %3830 = vst.msk [vmem:[%s466 + $0x38] sm:$0xf] %vm486, %v3798
        %3831 = vst.msk [vmem:[%s466 + $0x3c] sm:$0xf] %vm486, %v3799
        %s3832 = smul.u32 8, %s28
        %p3833 = scmp.lt.s32.totalorder %s27, 1
        %s3834 = scalar_select %p3833, %s27, 1
        %p3835 = scmp.lt.s32.totalorder %s3832, 15
        %s3836 = scalar_select %p3835, %s3832, 15
        %s3837 = smul.addr %s3836, 2
        %s3838 = smul.addr %s3834, 32
        %s3839 = sadd.s32 %s3837, %s3838
        %s3840 = smul.addr %s3839, 4
        %s3841 = scalar_lea.vmem %s6, %s3840
        %s3842 = sand.u32 %s234, 1
        %s3843 = scalar_lea.sflag [#allocation5], %s3842
        %s3844 = sand.u32 %s234, 1
        %s3845 = scalar_lea.vmem [#allocation4], %s3844
        // Predicated region
        $region57: #{tpu_custom_call.1} parent=43 // pred_check
          %p3846 = pneg %p218
        $region58: #{tpu_custom_call.1} parent=43 // pred_check_branch
          %3848 = sbr.rel (%p3846) target = $region60
        $region59: #{tpu_custom_call.1} parent=43 // pred_region
          %s3849 = smul.u32 8, %s28
        $region60: #{tpu_custom_call.1} parent=43 // pred_fallthru
          _
        // Predicated region
        $region61: #{tpu_custom_call.1} parent=43 // pred_check
          %p3850 = pneg %p244
        $region62: #{tpu_custom_call.1} parent=43 // pred_check_branch
          %3852 = sbr.rel (%p3850) target = $region64
        $region63: #{tpu_custom_call.1} parent=43 // pred_region
          %s3854 = ssub.s32 16, 16
          %3855 = vsyncadd %s3843, %s3854
          %s3856 = smul.addr %s27, 16
          %s3857 = scalar_lea.hbm %s7, %s3856
          %s3859 = sshll.u32 %s3845, 4
          %s3860 = int_to_ptr.vmem [resolvable:$true] %s3859
          %3862 = dma.vmem_to_hbm [thread:$0]  %s3860, 16, %s3857, %s3843
        $region64: #{tpu_custom_call.1} parent=43 // pred_fallthru
          _
      $region44: #{tpu_custom_call.1} parent=5 // pred_fallthru
        _
      %p3863 = scmp.le.s32.totalorder 2, %s18
      // Predicated region
      $region65: #{tpu_custom_call.1} parent=5 // pred_check
        %p3864 = pneg %p3863
      $region66: #{tpu_custom_call.1} parent=5 // pred_check_branch
        %3866 = sbr.rel (%p3864) target = $region68
      $region67: #{tpu_custom_call.1} parent=5 // pred_region
        %s3867 = ssub.s32 %s18, 2
        // Predicated region
        $region69: #{tpu_custom_call.1} parent=67 // pred_check
          %p3868 = pneg %p224
        $region70: #{tpu_custom_call.1} parent=67 // pred_check_branch
          %3870 = sbr.rel (%p3868) target = $region72
        $region71: #{tpu_custom_call.1} parent=67 // pred_region
          %s3871 = smul.u32 8, %s30
          %p3872 = scmp.lt.s32.totalorder %s29, 1
          %s3873 = scalar_select %p3872, %s29, 1
          %p3874 = scmp.lt.s32.totalorder %s3871, 15
          %s3875 = scalar_select %p3874, %s3871, 15
          %s3876 = smul.addr %s3875, 2
          %s3877 = smul.addr %s3873, 32
          %s3878 = sadd.s32 %s3876, %s3877
          %s3879 = smul.addr %s3878, 4
          %s3880 = scalar_lea.vmem %s6, %s3879
        $region72: #{tpu_custom_call.1} parent=67 // pred_fallthru
          _
        // Predicated region
        $region73: #{tpu_custom_call.1} parent=67 // pred_check
          %p3881 = pneg %p250
        $region74: #{tpu_custom_call.1} parent=67 // pred_check_branch
          %3883 = sbr.rel (%p3881) target = $region76
        $region75: #{tpu_custom_call.1} parent=67 // pred_region
          %s3884 = sand.u32 %s235, 1
          %s3885 = scalar_lea.sflag [#allocation5], %s3884
          %s3886 = sand.u32 %s235, 1
          %s3887 = scalar_lea.vmem [#allocation4], %s3886
          %3888 = dma.done %s3885, 16
        $region76: #{tpu_custom_call.1} parent=67 // pred_fallthru
          _
      $region68: #{tpu_custom_call.1} parent=5 // pred_fallthru
        _
    $region6: #{tpu_custom_call.1} parent=1 // loop_footer
      %s22 = sadd.s32 1, %s18
    $region7: #{tpu_custom_call.1} parent=1 // loop_footer_branch
      %17 = sbr.rel target = $region3
    $region8: #{tpu_custom_call.1} parent=1 // loop_exit
      _
    %3889 = vsyncpa [#allocation5], 1
    %s3890 = scalar_lea.sflag [#allocation5], 1
    %3891 = vsyncpa %s3890, 1

</llo_original>
